<compile_context>
chip_gen: v7x
topology: tpu7x:2x2x1
jax: 0.10.0
libtpu: 0.0.40
codegen_flags: <defaults>
</compile_context>

<pallas_src>
import jax
import jax.numpy as jnp
from jax.experimental import pallas as pl
from jax.experimental.pallas import tpu as pltpu


def encoder_kernel(x_ref, w1_ref, b1_ref, w2_ref, b2_ref,
                   w3g_ref, w23l_ref, b3_ref, w4_ref, b4_ref, o_ref):
    _, TG, C = o_ref.shape          # output block: (1, TG, C)
    M = x_ref.shape[-1]             # points in this block (TG * N)
    N = M // TG
    C2 = w2_ref.shape[1]            # 256 (first_conv output channels)
    C3 = w23l_ref.shape[1]          # 512

    # Lane-dense points load: (8, M) rows (xyz + zero padding), then a tiny
    # XLU transpose back to point-major (M, 8).
    xt = x_ref[0].T                                                 # (M, 8) f32

    # first_conv: Conv1d(3,128,1) + BN(128) [folded] + ReLU.
    # K=3 -> three VPU broadcast FMAs instead of a zero-padded MXU pass.
    w1 = w1_ref[...]                                                # (3, 128)
    h1 = jnp.maximum(
        xt[:, 0:1] * w1[0:1, :] + xt[:, 1:2] * w1[1:2, :]
        + xt[:, 2:3] * w1[2:3, :] + b1_ref[...], 0.0)               # (M, 128) f32
    h1b = h1.astype(jnp.bfloat16)

    # Conv1d(128,256,1): only needed to form the per-group max feature.
    f = (jnp.dot(h1b, w2_ref[...], preferred_element_type=jnp.float32)
         + b2_ref[...])                                             # (M, 256) f32
    fg = jnp.max(f.reshape(TG, N, C2), axis=1)                      # (TG, 256)

    # second_conv: Conv1d(512,512,1)+BN [folded]+ReLU, with w3 split so the
    # global-feature half runs once per group and the local half is fused
    # through w2 (hl = h1 @ (w2 @ w3l); b2's contribution folded in wrapper).
    g = jnp.dot(fg.astype(jnp.bfloat16), w3g_ref[...],
                preferred_element_type=jnp.float32)                 # (TG, 512)
    hl = jnp.dot(h1b, w23l_ref[...],
                 preferred_element_type=jnp.float32)                # (M, 512)
    h3 = jnp.maximum(
        hl.reshape(TG, N, C3) + g[:, None, :] + b3_ref[...], 0.0)   # (TG, N, 512)

    # Conv1d(512, encoder_channel, 1) + final per-group max -> lane-dense slab.
    f4 = (jnp.dot(h3.reshape(M, C3).astype(jnp.bfloat16), w4_ref[...],
                  preferred_element_type=jnp.float32)
          + b4_ref[...])                                            # (M, C)
    o_ref[...] = jnp.max(f4.reshape(TG, N, C), axis=1)[None]        # (1, TG, C)


def _tpu_generation():
    try:
        kind = jax.devices()[0].device_kind.lower()
    except Exception:
        return "unknown"
    if "v5" in kind:
        return "v5e"
    if "v6" in kind:
        return "v6e"
    if "v7" in kind or "7x" in kind:
        return "v7x"
    return "unknown"


# max_rows  : target M = TG*N rows per grid step (amortizes ~0.35us/step).
# vmem_limit: scoped-VMEM budget handed to Mosaic at that tile size.
# multi_step: keep >= 2 grid steps (only useful on v7x: 2 TensorCores/chip).
_GEN_CFG = {
    "v5e":     dict(max_rows=1024, vmem_limit=32 * 1024 * 1024, multi_step=False),
    "v6e":     dict(max_rows=4096, vmem_limit=64 * 1024 * 1024, multi_step=False),
    "v7x":     dict(max_rows=2048, vmem_limit=40 * 1024 * 1024, multi_step=True),
    "unknown": dict(max_rows=1024, vmem_limit=32 * 1024 * 1024, multi_step=False),
}


def _choose_group_tile(BG, N, max_rows, multi_step):
    """Largest divisor TG of BG with TG*N <= max_rows.

    TG=1 is always allowed (correctness when N alone exceeds max_rows); the
    grid>=2 constraint is enforced only when multi_step (v7x megacore); a TG
    multiple of 8 is preferred as a tie-break (unmasked sublane writeback)."""
    cands = []
    for tg in range(1, BG + 1):
        if BG % tg:
            continue
        if tg > 1 and tg * N > max_rows:
            continue
        if multi_step and BG >= 2 and BG // tg < 2:
            continue
        cands.append(tg)
    if not cands:
        cands = [1]
    return max(cands, key=lambda tg: (tg * N, tg % 8 == 0))


def _build_encoder_call(n_blocks, TG, M, C, vmem_limit, weight_pipeline_mode):
    wkw = {} if weight_pipeline_mode is None else dict(
        pipeline_mode=weight_pipeline_mode)

    def wspec(shape):
        # Constant blocks (index_map always (0,0)); optionally single-buffered.
        return pl.BlockSpec(shape, lambda i: (0, 0), **wkw)

    return pl.pallas_call(
        encoder_kernel,
        out_shape=jax.ShapeDtypeStruct((n_blocks, TG, C), jnp.float32),
        grid_spec=pltpu.PrefetchScalarGridSpec(
            num_scalar_prefetch=0,
            grid=(n_blocks,),
            in_specs=[
                pl.BlockSpec((1, 8, M), lambda i: (i, 0, 0)),  # points, lane-dense
                wspec((3, 128)),     # w1 (BN1 folded)
                wspec((1, 128)),     # b1 (BN1 folded)
                wspec((128, 256)),   # w2 (bf16)
                wspec((1, 256)),     # b2
                wspec((256, 512)),   # w3 global half (bf16)
                wspec((128, 512)),   # w2 @ w3 local half (bf16)
                wspec((1, 512)),     # b3 + b2 @ w3l (BN2 folded)
                wspec((512, C)),     # w4 (bf16)
                wspec((1, C)),       # b4
            ],
            out_specs=pl.BlockSpec((1, TG, C), lambda i: (i, 0, 0)),
        ),
        compiler_params=pltpu.CompilerParams(
            dimension_semantics=("parallel",),
            vmem_limit_bytes=vmem_limit),
    )


def encoder_forward(point_groups, params, encoder_channel):
    B, G, N, _ = point_groups.shape
    BG = B * G
    C = encoder_channel

    w1, b1, w2, b2, w3, b3, w4, b4 = params
    # Split w3 along the [global(256), local(256)] concat axis; fuse w2/b2 into
    # the local half (exact algebra: f @ w3l = h1 @ (w2 @ w3l) + b2 @ w3l).
    w3g = w3[:256]
    w3l = w3[256:]
    w23l = w2 @ w3l                       # (128, 512) f32
    b3f = b3 + b2 @ w3l                   # (1, 512)   f32
    # Pre-cast MXU-side weights to bf16 once (w1/biases stay f32 for the VPU).
    w2b = w2.astype(jnp.bfloat16)
    w3gb = w3g.astype(jnp.bfloat16)
    w23lb = w23l.astype(jnp.bfloat16)
    w4b = w4.astype(jnp.bfloat16)

    cfg = _GEN_CFG[_tpu_generation()]
    TG = _choose_group_tile(BG, N, cfg["max_rows"], cfg["multi_step"])
    n_blocks = BG // TG
    M = TG * N

    # Lane-dense points layout: (n_blocks, 8, M) with xyz on rows 0..2 (rows
    # 3..7 zero) -> contiguous HBM rows + tiny VMEM input buffer.
    x = point_groups.reshape(n_blocks, M, 3).astype(jnp.float32)
    x = jnp.transpose(x, (0, 2, 1))                      # (n_blocks, 3, M)
    x8 = jnp.pad(x, ((0, 0), (0, 5), (0, 0)))            # (n_blocks, 8, M)

    args = (x8, w1, b1, w2b, b2, w3gb, w23lb, b3f, w4b, b4)

    # Constant weight blocks never change across grid steps -> ask for single
    # buffering; fall back to default double-buffering if the installed
    # JAX/Mosaic rejects the pipeline_mode hint.
    single = pl.Buffered(1) if hasattr(pl, "Buffered") else None
    try:
        out = _build_encoder_call(n_blocks, TG, M, C,
                                  cfg["vmem_limit"], single)(*args)
        out = jax.block_until_ready(out)
    except Exception:
        out = _build_encoder_call(n_blocks, TG, M, C,
                                  cfg["vmem_limit"], None)(*args)

    return out.reshape(B, G, C)


def init_params(key, encoder_channel):
    """Deterministic synthetic parameters with eval-mode BatchNorm folded in."""
    C = encoder_channel
    eps = 1e-5
    ks = jax.random.split(key, 20)
    norm = lambda k, s, sc: sc * jax.random.normal(k, s, jnp.float32)

    # ---- first_conv ----
    w1 = norm(ks[0], (3, 128), 0.5)          # Conv1d(3,128,1) weight^T
    b1 = norm(ks[1], (1, 128), 0.1)
    g1 = 1.0 + norm(ks[2], (1, 128), 0.1)    # BN1 gamma
    be1 = norm(ks[3], (1, 128), 0.1)         # BN1 beta
    m1 = norm(ks[4], (1, 128), 0.1)          # BN1 running_mean
    v1 = jnp.abs(norm(ks[5], (1, 128), 1.0)) + 0.5  # BN1 running_var
    s1 = g1 / jnp.sqrt(v1 + eps)
    w1_eff = w1 * s1
    b1_eff = (b1 - m1) * s1 + be1

    w2 = norm(ks[6], (128, 256), 0.1)        # Conv1d(128,256,1) weight^T
    b2 = norm(ks[7], (1, 256), 0.1)

    # ---- second_conv ----
    w3 = norm(ks[8], (512, 512), 0.05)       # Conv1d(512,512,1) weight^T
    b3 = norm(ks[9], (1, 512), 0.1)
    g2 = 1.0 + norm(ks[10], (1, 512), 0.1)   # BN2 gamma
    be2 = norm(ks[11], (1, 512), 0.1)        # BN2 beta
    m2 = norm(ks[12], (1, 512), 0.1)         # BN2 running_mean
    v2 = jnp.abs(norm(ks[13], (1, 512), 1.0)) + 0.5  # BN2 running_var
    s2 = g2 / jnp.sqrt(v2 + eps)
    w3_eff = w3 * s2
    b3_eff = (b3 - m2) * s2 + be2

    w4 = norm(ks[14], (512, C), 0.05)        # Conv1d(512,C,1) weight^T
    b4 = norm(ks[15], (1, C), 0.1)

    return (w1_eff, b1_eff, w2, b2, w3_eff, b3_eff, w4, b4)


def encoder_reference(point_groups, params, encoder_channel):
    """Pure-JAX f32 reference of the same math (for sanity checking)."""
    B, G, N, _ = point_groups.shape
    w1, b1, w2, b2, w3, b3, w4, b4 = params
    x = point_groups.reshape(B * G, N, 3).astype(jnp.float32)
    h1 = jnp.maximum(x @ w1 + b1, 0.0)
    f = h1 @ w2 + b2
    fg = jnp.max(f, axis=1, keepdims=True)
    fcat = jnp.concatenate([jnp.broadcast_to(fg, f.shape), f], axis=-1)
    h3 = jnp.maximum(fcat @ w3 + b3, 0.0)
    f4 = h3 @ w4 + b4
    return jnp.max(f4, axis=1).reshape(B, G, encoder_channel)


if __name__ == "__main__":
    B, G, N = 2, 4, 16
    ENCODER_CHANNEL = 256

    key = jax.random.PRNGKey(0)
    k_pts, k_par = jax.random.split(key)
    point_groups = jax.random.normal(k_pts, (B, G, N, 3), jnp.float32)
    params = init_params(k_par, ENCODER_CHANNEL)

    out = encoder_forward(point_groups, params, ENCODER_CHANNEL)
    out = jax.block_until_ready(out)

    ref = encoder_reference(point_groups, params, ENCODER_CHANNEL)
    assert out.shape == (B, G, ENCODER_CHANNEL)
    # bf16 MXU operands (f32 accumulate) -> loosened tolerance vs f32 reference.
    assert jnp.allclose(out, ref, atol=1e-1, rtol=5e-2), "mismatch vs reference"

    print("KERNEL_OK")
</pallas_src>

<mosaic_0001>
module attributes {stable_mosaic.version = 11 : i64} {
  func.func @encoder_kernel(%arg0: i32, %arg1: memref<1x8x128xf32, #tpu.memory_space<vmem>>, %arg2: memref<3x128xf32, #tpu.memory_space<vmem>>, %arg3: memref<1x128xf32, #tpu.memory_space<vmem>>, %arg4: memref<128x256xbf16, #tpu.memory_space<vmem>>, %arg5: memref<1x256xf32, #tpu.memory_space<vmem>>, %arg6: memref<256x512xbf16, #tpu.memory_space<vmem>>, %arg7: memref<128x512xbf16, #tpu.memory_space<vmem>>, %arg8: memref<1x512xf32, #tpu.memory_space<vmem>>, %arg9: memref<512x256xbf16, #tpu.memory_space<vmem>>, %arg10: memref<1x256xf32, #tpu.memory_space<vmem>>, %arg11: memref<1x8x256xf32, #tpu.memory_space<vmem>>) attributes {dimension_semantics = [#tpu.dimension_semantics<parallel>], iteration_bounds = array<i64: 1>, scalar_prefetch = 0 : i64, scratch_operands = 0 : i64, tpu.core_type = #tpu.core_type<tc>, window_params = [{transform_indices = @transform_0, window_bounds = array<i64: 1, 8, 128>}, {pipeline_mode = #tpu.pipeline_mode<synchronous>, transform_indices = @transform_1, window_bounds = array<i64: 3, 128>}, {pipeline_mode = #tpu.pipeline_mode<synchronous>, transform_indices = @transform_2, window_bounds = array<i64: 1, 128>}, {pipeline_mode = #tpu.pipeline_mode<synchronous>, transform_indices = @transform_3, window_bounds = array<i64: 128, 256>}, {pipeline_mode = #tpu.pipeline_mode<synchronous>, transform_indices = @transform_4, window_bounds = array<i64: 1, 256>}, {pipeline_mode = #tpu.pipeline_mode<synchronous>, transform_indices = @transform_5, window_bounds = array<i64: 256, 512>}, {pipeline_mode = #tpu.pipeline_mode<synchronous>, transform_indices = @transform_6, window_bounds = array<i64: 128, 512>}, {pipeline_mode = #tpu.pipeline_mode<synchronous>, transform_indices = @transform_7, window_bounds = array<i64: 1, 512>}, {pipeline_mode = #tpu.pipeline_mode<synchronous>, transform_indices = @transform_8, window_bounds = array<i64: 512, 256>}, {pipeline_mode = #tpu.pipeline_mode<synchronous>, transform_indices = @transform_9, window_bounds = array<i64: 1, 256>}, {transform_indices = @transform_10, window_bounds = array<i64: 1, 8, 256>}]} {
    %c0 = arith.constant 0 : index
    %c0_0 = arith.constant 0 : index
    %c0_1 = arith.constant 0 : index
    %0 = vector.load %arg1[%c0, %c0_0, %c0_1] : memref<1x8x128xf32, #tpu.memory_space<vmem>>, vector<1x8x128xf32>
    %1 = vector.shape_cast %0 : vector<1x8x128xf32> to vector<8x128xf32>
    %2 = tpu.transpose %1, [1, 0] : vector<8x128xf32> -> vector<128x8xf32>
    %c0_2 = arith.constant 0 : index
    %c0_3 = arith.constant 0 : index
    %3 = vector.load %arg2[%c0_2, %c0_3] : memref<3x128xf32, #tpu.memory_space<vmem>>, vector<3x128xf32>
    %4 = vector.extract_strided_slice %2 {offsets = [0, 0], sizes = [128, 1], strides = [1, 1]} : vector<128x8xf32> to vector<128x1xf32>
    %5 = vector.extract_strided_slice %3 {offsets = [0, 0], sizes = [1, 128], strides = [1, 1]} : vector<3x128xf32> to vector<1x128xf32>
    %6 = vector.broadcast %4 : vector<128x1xf32> to vector<128x128xf32>
    %7 = vector.broadcast %5 : vector<1x128xf32> to vector<128x128xf32>
    %8 = arith.mulf %6, %7 : vector<128x128xf32>
    %9 = vector.extract_strided_slice %2 {offsets = [0, 1], sizes = [128, 1], strides = [1, 1]} : vector<128x8xf32> to vector<128x1xf32>
    %10 = vector.extract_strided_slice %3 {offsets = [1, 0], sizes = [1, 128], strides = [1, 1]} : vector<3x128xf32> to vector<1x128xf32>
    %11 = vector.broadcast %9 : vector<128x1xf32> to vector<128x128xf32>
    %12 = vector.broadcast %10 : vector<1x128xf32> to vector<128x128xf32>
    %13 = arith.mulf %11, %12 : vector<128x128xf32>
    %14 = arith.addf %8, %13 : vector<128x128xf32>
    %15 = vector.extract_strided_slice %2 {offsets = [0, 2], sizes = [128, 1], strides = [1, 1]} : vector<128x8xf32> to vector<128x1xf32>
    %16 = vector.extract_strided_slice %3 {offsets = [2, 0], sizes = [1, 128], strides = [1, 1]} : vector<3x128xf32> to vector<1x128xf32>
    %17 = vector.broadcast %15 : vector<128x1xf32> to vector<128x128xf32>
    %18 = vector.broadcast %16 : vector<1x128xf32> to vector<128x128xf32>
    %19 = arith.mulf %17, %18 : vector<128x128xf32>
    %20 = arith.addf %14, %19 : vector<128x128xf32>
    %c0_4 = arith.constant 0 : index
    %c0_5 = arith.constant 0 : index
    %21 = vector.load %arg3[%c0_4, %c0_5] : memref<1x128xf32, #tpu.memory_space<vmem>>, vector<1x128xf32>
    %22 = vector.broadcast %21 : vector<1x128xf32> to vector<128x128xf32>
    %23 = arith.addf %20, %22 : vector<128x128xf32>
    %cst = arith.constant 0.000000e+00 : f32
    %24 = vector.broadcast %cst : f32 to vector<128x128xf32>
    %25 = arith.maximumf %23, %24 : vector<128x128xf32>
    %26 = arith.truncf %25 : vector<128x128xf32> to vector<128x128xbf16>
    %c0_6 = arith.constant 0 : index
    %c0_7 = arith.constant 0 : index
    %27 = vector.load %arg4[%c0_6, %c0_7] : memref<128x256xbf16, #tpu.memory_space<vmem>>, vector<128x256xbf16>
    %cst_8 = arith.constant dense<0.000000e+00> : vector<128x256xf32>
    %28 = tpu.matmul %26, %27, %cst_8 {dimension_numbers = #tpu.dot_dimension_numbers<[1], [0], [0], [1], [0, 0, 1, 1], [], []>} : vector<128x128xbf16>, vector<128x256xbf16>, vector<128x256xf32> -> vector<128x256xf32>
    %c0_9 = arith.constant 0 : index
    %c0_10 = arith.constant 0 : index
    %29 = vector.load %arg5[%c0_9, %c0_10] : memref<1x256xf32, #tpu.memory_space<vmem>>, vector<1x256xf32>
    %30 = vector.broadcast %29 : vector<1x256xf32> to vector<128x256xf32>
    %31 = arith.addf %28, %30 : vector<128x256xf32>
    %32 = vector.shape_cast %31 : vector<128x256xf32> to vector<8x16x256xf32>
    %cst_11 = arith.constant dense<0xFF800000> : vector<8x256xf32>
    %33 = vector.multi_reduction <maximumf>, %32, %cst_11 [1] : vector<8x16x256xf32> to vector<8x256xf32>
    %34 = arith.truncf %33 : vector<8x256xf32> to vector<8x256xbf16>
    %c0_12 = arith.constant 0 : index
    %c0_13 = arith.constant 0 : index
    %35 = vector.load %arg6[%c0_12, %c0_13] : memref<256x512xbf16, #tpu.memory_space<vmem>>, vector<256x512xbf16>
    %cst_14 = arith.constant dense<0.000000e+00> : vector<8x512xf32>
    %36 = tpu.matmul %34, %35, %cst_14 {dimension_numbers = #tpu.dot_dimension_numbers<[1], [0], [0], [1], [0, 0, 1, 1], [], []>} : vector<8x256xbf16>, vector<256x512xbf16>, vector<8x512xf32> -> vector<8x512xf32>
    %c0_15 = arith.constant 0 : index
    %c0_16 = arith.constant 0 : index
    %37 = vector.load %arg7[%c0_15, %c0_16] : memref<128x512xbf16, #tpu.memory_space<vmem>>, vector<128x512xbf16>
    %cst_17 = arith.constant dense<0.000000e+00> : vector<128x512xf32>
    %38 = tpu.matmul %26, %37, %cst_17 {dimension_numbers = #tpu.dot_dimension_numbers<[1], [0], [0], [1], [0, 0, 1, 1], [], []>} : vector<128x128xbf16>, vector<128x512xbf16>, vector<128x512xf32> -> vector<128x512xf32>
    %39 = vector.shape_cast %38 : vector<128x512xf32> to vector<8x16x512xf32>
    %40 = vector.shape_cast %36 : vector<8x512xf32> to vector<8x1x512xf32>
    %41 = vector.broadcast %40 : vector<8x1x512xf32> to vector<8x16x512xf32>
    %42 = arith.addf %39, %41 : vector<8x16x512xf32>
    %c0_18 = arith.constant 0 : index
    %c0_19 = arith.constant 0 : index
    %43 = vector.load %arg8[%c0_18, %c0_19] : memref<1x512xf32, #tpu.memory_space<vmem>>, vector<1x512xf32>
    %44 = vector.shape_cast %43 : vector<1x512xf32> to vector<1x1x512xf32>
    %45 = vector.broadcast %44 : vector<1x1x512xf32> to vector<8x16x512xf32>
    %46 = arith.addf %42, %45 : vector<8x16x512xf32>
    %cst_20 = arith.constant 0.000000e+00 : f32
    %47 = vector.broadcast %cst_20 : f32 to vector<8x16x512xf32>
    %48 = arith.maximumf %46, %47 : vector<8x16x512xf32>
    %49 = vector.shape_cast %48 : vector<8x16x512xf32> to vector<128x512xf32>
    %50 = arith.truncf %49 : vector<128x512xf32> to vector<128x512xbf16>
    %c0_21 = arith.constant 0 : index
    %c0_22 = arith.constant 0 : index
    %51 = vector.load %arg9[%c0_21, %c0_22] : memref<512x256xbf16, #tpu.memory_space<vmem>>, vector<512x256xbf16>
    %cst_23 = arith.constant dense<0.000000e+00> : vector<128x256xf32>
    %52 = tpu.matmul %50, %51, %cst_23 {dimension_numbers = #tpu.dot_dimension_numbers<[1], [0], [0], [1], [0, 0, 1, 1], [], []>} : vector<128x512xbf16>, vector<512x256xbf16>, vector<128x256xf32> -> vector<128x256xf32>
    %c0_24 = arith.constant 0 : index
    %c0_25 = arith.constant 0 : index
    %53 = vector.load %arg10[%c0_24, %c0_25] : memref<1x256xf32, #tpu.memory_space<vmem>>, vector<1x256xf32>
    %54 = vector.broadcast %53 : vector<1x256xf32> to vector<128x256xf32>
    %55 = arith.addf %52, %54 : vector<128x256xf32>
    %56 = vector.shape_cast %55 : vector<128x256xf32> to vector<8x16x256xf32>
    %cst_26 = arith.constant dense<0xFF800000> : vector<8x256xf32>
    %57 = vector.multi_reduction <maximumf>, %56, %cst_26 [1] : vector<8x16x256xf32> to vector<8x256xf32>
    %58 = vector.shape_cast %57 : vector<8x256xf32> to vector<1x8x256xf32>
    %c0_27 = arith.constant 0 : index
    %c0_28 = arith.constant 0 : index
    %c0_29 = arith.constant 0 : index
    %59 = vector.load %arg11[%c0_27, %c0_28, %c0_29] : memref<1x8x256xf32, #tpu.memory_space<vmem>>, vector<1x8x256xf32>
    tpu.vector_store %arg11[%c0_27, %c0_28, %c0_29], %58 {strides = array<i32>} : memref<1x8x256xf32, #tpu.memory_space<vmem>>, vector<1x8x256xf32>,
    return
  }
  func.func @transform_0(%arg0: i32) -> (i32, i32, i32) {
    %c0_i32 = arith.constant 0 : i32
    %c0_i32_0 = arith.constant 0 : i32
    %c0_i32_1 = arith.constant 0 : i32
    return %arg0, %c0_i32, %c0_i32_0 : i32, i32, i32
  }
  func.func @transform_1(%arg0: i32) -> (i32, i32) {
    %c0_i32 = arith.constant 0 : i32
    %c0_i32_0 = arith.constant 0 : i32
    %c0_i32_1 = arith.constant 0 : i32
    return %c0_i32, %c0_i32_0 : i32, i32
  }
  func.func @transform_2(%arg0: i32) -> (i32, i32) {
    %c0_i32 = arith.constant 0 : i32
    %c0_i32_0 = arith.constant 0 : i32
    %c0_i32_1 = arith.constant 0 : i32
    return %c0_i32, %c0_i32_0 : i32, i32
  }
  func.func @transform_3(%arg0: i32) -> (i32, i32) {
    %c0_i32 = arith.constant 0 : i32
    %c0_i32_0 = arith.constant 0 : i32
    %c0_i32_1 = arith.constant 0 : i32
    return %c0_i32, %c0_i32_0 : i32, i32
  }
  func.func @transform_4(%arg0: i32) -> (i32, i32) {
    %c0_i32 = arith.constant 0 : i32
    %c0_i32_0 = arith.constant 0 : i32
    %c0_i32_1 = arith.constant 0 : i32
    return %c0_i32, %c0_i32_0 : i32, i32
  }
  func.func @transform_5(%arg0: i32) -> (i32, i32) {
    %c0_i32 = arith.constant 0 : i32
    %c0_i32_0 = arith.constant 0 : i32
    %c0_i32_1 = arith.constant 0 : i32
    return %c0_i32, %c0_i32_0 : i32, i32
  }
  func.func @transform_6(%arg0: i32) -> (i32, i32) {
    %c0_i32 = arith.constant 0 : i32
    %c0_i32_0 = arith.constant 0 : i32
    %c0_i32_1 = arith.constant 0 : i32
    return %c0_i32, %c0_i32_0 : i32, i32
  }
  func.func @transform_7(%arg0: i32) -> (i32, i32) {
    %c0_i32 = arith.constant 0 : i32
    %c0_i32_0 = arith.constant 0 : i32
    %c0_i32_1 = arith.constant 0 : i32
    return %c0_i32, %c0_i32_0 : i32, i32
  }
  func.func @transform_8(%arg0: i32) -> (i32, i32) {
    %c0_i32 = arith.constant 0 : i32
    %c0_i32_0 = arith.constant 0 : i32
    %c0_i32_1 = arith.constant 0 : i32
    return %c0_i32, %c0_i32_0 : i32, i32
  }
  func.func @transform_9(%arg0: i32) -> (i32, i32) {
    %c0_i32 = arith.constant 0 : i32
    %c0_i32_0 = arith.constant 0 : i32
    %c0_i32_1 = arith.constant 0 : i32
    return %c0_i32, %c0_i32_0 : i32, i32
  }
  func.func @transform_10(%arg0: i32) -> (i32, i32, i32) {
    %c0_i32 = arith.constant 0 : i32
    %c0_i32_0 = arith.constant 0 : i32
    %c0_i32_1 = arith.constant 0 : i32
    return %arg0, %c0_i32, %c0_i32_0 : i32, i32, i32
  }
}

module attributes {stable_mosaic.version = 11 : i64} {
  func.func @encoder_kernel(%arg0: i32, %arg1: memref<1x8x128xf32, #tpu.memory_space<vmem>>, %arg2: memref<3x128xf32, #tpu.memory_space<vmem>>, %arg3: memref<1x128xf32, #tpu.memory_space<vmem>>, %arg4: memref<128x256xbf16, #tpu.memory_space<vmem>>, %arg5: memref<1x256xf32, #tpu.memory_space<vmem>>, %arg6: memref<256x512xbf16, #tpu.memory_space<vmem>>, %arg7: memref<128x512xbf16, #tpu.memory_space<vmem>>, %arg8: memref<1x512xf32, #tpu.memory_space<vmem>>, %arg9: memref<512x256xbf16, #tpu.memory_space<vmem>>, %arg10: memref<1x256xf32, #tpu.memory_space<vmem>>, %arg11: memref<1x8x256xf32, #tpu.memory_space<vmem>>) attributes {dimension_semantics = [#tpu.dimension_semantics<parallel>], iteration_bounds = array<i64: 1>, scalar_prefetch = 0 : i64, scratch_operands = 0 : i64, tpu.core_type = #tpu.core_type<tc>, window_params = [{transform_indices = @transform_0, window_bounds = array<i64: 1, 8, 128>}, {pipeline_mode = #tpu.pipeline_mode<synchronous>, transform_indices = @transform_1, window_bounds = array<i64: 3, 128>}, {pipeline_mode = #tpu.pipeline_mode<synchronous>, transform_indices = @transform_2, window_bounds = array<i64: 1, 128>}, {pipeline_mode = #tpu.pipeline_mode<synchronous>, transform_indices = @transform_3, window_bounds = array<i64: 128, 256>}, {pipeline_mode = #tpu.pipeline_mode<synchronous>, transform_indices = @transform_4, window_bounds = array<i64: 1, 256>}, {pipeline_mode = #tpu.pipeline_mode<synchronous>, transform_indices = @transform_5, window_bounds = array<i64: 256, 512>}, {pipeline_mode = #tpu.pipeline_mode<synchronous>, transform_indices = @transform_6, window_bounds = array<i64: 128, 512>}, {pipeline_mode = #tpu.pipeline_mode<synchronous>, transform_indices = @transform_7, window_bounds = array<i64: 1, 512>}, {pipeline_mode = #tpu.pipeline_mode<synchronous>, transform_indices = @transform_8, window_bounds = array<i64: 512, 256>}, {pipeline_mode = #tpu.pipeline_mode<synchronous>, transform_indices = @transform_9, window_bounds = array<i64: 1, 256>}, {transform_indices = @transform_10, window_bounds = array<i64: 1, 8, 256>}]} {
    %c0 = arith.constant 0 : index
    %c0_0 = arith.constant 0 : index
    %c0_1 = arith.constant 0 : index
    %0 = vector.load %arg1[%c0, %c0_0, %c0_1] : memref<1x8x128xf32, #tpu.memory_space<vmem>>, vector<1x8x128xf32>
    %1 = vector.shape_cast %0 : vector<1x8x128xf32> to vector<8x128xf32>
    %2 = tpu.transpose %1, [1, 0] : vector<8x128xf32> -> vector<128x8xf32>
    %c0_2 = arith.constant 0 : index
    %c0_3 = arith.constant 0 : index
    %3 = vector.load %arg2[%c0_2, %c0_3] : memref<3x128xf32, #tpu.memory_space<vmem>>, vector<3x128xf32>
    %4 = vector.extract_strided_slice %2 {offsets = [0, 0], sizes = [128, 1], strides = [1, 1]} : vector<128x8xf32> to vector<128x1xf32>
    %5 = vector.extract_strided_slice %3 {offsets = [0, 0], sizes = [1, 128], strides = [1, 1]} : vector<3x128xf32> to vector<1x128xf32>
    %6 = vector.broadcast %4 : vector<128x1xf32> to vector<128x128xf32>
    %7 = vector.broadcast %5 : vector<1x128xf32> to vector<128x128xf32>
    %8 = arith.mulf %6, %7 : vector<128x128xf32>
    %9 = vector.extract_strided_slice %2 {offsets = [0, 1], sizes = [128, 1], strides = [1, 1]} : vector<128x8xf32> to vector<128x1xf32>
    %10 = vector.extract_strided_slice %3 {offsets = [1, 0], sizes = [1, 128], strides = [1, 1]} : vector<3x128xf32> to vector<1x128xf32>
    %11 = vector.broadcast %9 : vector<128x1xf32> to vector<128x128xf32>
    %12 = vector.broadcast %10 : vector<1x128xf32> to vector<128x128xf32>
    %13 = arith.mulf %11, %12 : vector<128x128xf32>
    %14 = arith.addf %8, %13 : vector<128x128xf32>
    %15 = vector.extract_strided_slice %2 {offsets = [0, 2], sizes = [128, 1], strides = [1, 1]} : vector<128x8xf32> to vector<128x1xf32>
    %16 = vector.extract_strided_slice %3 {offsets = [2, 0], sizes = [1, 128], strides = [1, 1]} : vector<3x128xf32> to vector<1x128xf32>
    %17 = vector.broadcast %15 : vector<128x1xf32> to vector<128x128xf32>
    %18 = vector.broadcast %16 : vector<1x128xf32> to vector<128x128xf32>
    %19 = arith.mulf %17, %18 : vector<128x128xf32>
    %20 = arith.addf %14, %19 : vector<128x128xf32>
    %c0_4 = arith.constant 0 : index
    %c0_5 = arith.constant 0 : index
    %21 = vector.load %arg3[%c0_4, %c0_5] : memref<1x128xf32, #tpu.memory_space<vmem>>, vector<1x128xf32>
    %22 = vector.broadcast %21 : vector<1x128xf32> to vector<128x128xf32>
    %23 = arith.addf %20, %22 : vector<128x128xf32>
    %cst = arith.constant 0.000000e+00 : f32
    %24 = vector.broadcast %cst : f32 to vector<128x128xf32>
    %25 = arith.maximumf %23, %24 : vector<128x128xf32>
    %26 = arith.truncf %25 : vector<128x128xf32> to vector<128x128xbf16>
    %c0_6 = arith.constant 0 : index
    %c0_7 = arith.constant 0 : index
    %27 = vector.load %arg4[%c0_6, %c0_7] : memref<128x256xbf16, #tpu.memory_space<vmem>>, vector<128x256xbf16>
    %cst_8 = arith.constant dense<0.000000e+00> : vector<128x256xf32>
    %28 = tpu.matmul %26, %27, %cst_8 {dimension_numbers = #tpu.dot_dimension_numbers<[1], [0], [0], [1], [0, 0, 1, 1], [], []>} : vector<128x128xbf16>, vector<128x256xbf16>, vector<128x256xf32> -> vector<128x256xf32>
    %c0_9 = arith.constant 0 : index
    %c0_10 = arith.constant 0 : index
    %29 = vector.load %arg5[%c0_9, %c0_10] : memref<1x256xf32, #tpu.memory_space<vmem>>, vector<1x256xf32>
    %30 = vector.broadcast %29 : vector<1x256xf32> to vector<128x256xf32>
    %31 = arith.addf %28, %30 : vector<128x256xf32>
    %32 = vector.shape_cast %31 : vector<128x256xf32> to vector<8x16x256xf32>
    %cst_11 = arith.constant dense<0xFF800000> : vector<8x256xf32>
    %33 = vector.multi_reduction <maximumf>, %32, %cst_11 [1] : vector<8x16x256xf32> to vector<8x256xf32>
    %34 = arith.truncf %33 : vector<8x256xf32> to vector<8x256xbf16>
    %c0_12 = arith.constant 0 : index
    %c0_13 = arith.constant 0 : index
    %35 = vector.load %arg6[%c0_12, %c0_13] : memref<256x512xbf16, #tpu.memory_space<vmem>>, vector<256x512xbf16>
    %cst_14 = arith.constant dense<0.000000e+00> : vector<8x512xf32>
    %36 = tpu.matmul %34, %35, %cst_14 {dimension_numbers = #tpu.dot_dimension_numbers<[1], [0], [0], [1], [0, 0, 1, 1], [], []>} : vector<8x256xbf16>, vector<256x512xbf16>, vector<8x512xf32> -> vector<8x512xf32>
    %c0_15 = arith.constant 0 : index
    %c0_16 = arith.constant 0 : index
    %37 = vector.load %arg7[%c0_15, %c0_16] : memref<128x512xbf16, #tpu.memory_space<vmem>>, vector<128x512xbf16>
    %cst_17 = arith.constant dense<0.000000e+00> : vector<128x512xf32>
    %38 = tpu.matmul %26, %37, %cst_17 {dimension_numbers = #tpu.dot_dimension_numbers<[1], [0], [0], [1], [0, 0, 1, 1], [], []>} : vector<128x128xbf16>, vector<128x512xbf16>, vector<128x512xf32> -> vector<128x512xf32>
    %39 = vector.shape_cast %38 : vector<128x512xf32> to vector<8x16x512xf32>
    %40 = vector.shape_cast %36 : vector<8x512xf32> to vector<8x1x512xf32>
    %41 = vector.broadcast %40 : vector<8x1x512xf32> to vector<8x16x512xf32>
    %42 = arith.addf %39, %41 : vector<8x16x512xf32>
    %c0_18 = arith.constant 0 : index
    %c0_19 = arith.constant 0 : index
    %43 = vector.load %arg8[%c0_18, %c0_19] : memref<1x512xf32, #tpu.memory_space<vmem>>, vector<1x512xf32>
    %44 = vector.shape_cast %43 : vector<1x512xf32> to vector<1x1x512xf32>
    %45 = vector.broadcast %44 : vector<1x1x512xf32> to vector<8x16x512xf32>
    %46 = arith.addf %42, %45 : vector<8x16x512xf32>
    %cst_20 = arith.constant 0.000000e+00 : f32
    %47 = vector.broadcast %cst_20 : f32 to vector<8x16x512xf32>
    %48 = arith.maximumf %46, %47 : vector<8x16x512xf32>
    %49 = vector.shape_cast %48 : vector<8x16x512xf32> to vector<128x512xf32>
    %50 = arith.truncf %49 : vector<128x512xf32> to vector<128x512xbf16>
    %c0_21 = arith.constant 0 : index
    %c0_22 = arith.constant 0 : index
    %51 = vector.load %arg9[%c0_21, %c0_22] : memref<512x256xbf16, #tpu.memory_space<vmem>>, vector<512x256xbf16>
    %cst_23 = arith.constant dense<0.000000e+00> : vector<128x256xf32>
    %52 = tpu.matmul %50, %51, %cst_23 {dimension_numbers = #tpu.dot_dimension_numbers<[1], [0], [0], [1], [0, 0, 1, 1], [], []>} : vector<128x512xbf16>, vector<512x256xbf16>, vector<128x256xf32> -> vector<128x256xf32>
    %c0_24 = arith.constant 0 : index
    %c0_25 = arith.constant 0 : index
    %53 = vector.load %arg10[%c0_24, %c0_25] : memref<1x256xf32, #tpu.memory_space<vmem>>, vector<1x256xf32>
    %54 = vector.broadcast %53 : vector<1x256xf32> to vector<128x256xf32>
    %55 = arith.addf %52, %54 : vector<128x256xf32>
    %56 = vector.shape_cast %55 : vector<128x256xf32> to vector<8x16x256xf32>
    %cst_26 = arith.constant dense<0xFF800000> : vector<8x256xf32>
    %57 = vector.multi_reduction <maximumf>, %56, %cst_26 [1] : vector<8x16x256xf32> to vector<8x256xf32>
    %58 = vector.shape_cast %57 : vector<8x256xf32> to vector<1x8x256xf32>
    %c0_27 = arith.constant 0 : index
    %c0_28 = arith.constant 0 : index
    %c0_29 = arith.constant 0 : index
    %59 = vector.load %arg11[%c0_27, %c0_28, %c0_29] : memref<1x8x256xf32, #tpu.memory_space<vmem>>, vector<1x8x256xf32>
    tpu.vector_store %arg11[%c0_27, %c0_28, %c0_29], %58 {strides = array<i32>} : memref<1x8x256xf32, #tpu.memory_space<vmem>>, vector<1x8x256xf32>,
    return
  }
  func.func @transform_0(%arg0: i32) -> (i32, i32, i32) {
    %c0_i32 = arith.constant 0 : i32
    %c0_i32_0 = arith.constant 0 : i32
    %c0_i32_1 = arith.constant 0 : i32
    return %arg0, %c0_i32, %c0_i32_0 : i32, i32, i32
  }
  func.func @transform_1(%arg0: i32) -> (i32, i32) {
    %c0_i32 = arith.constant 0 : i32
    %c0_i32_0 = arith.constant 0 : i32
    %c0_i32_1 = arith.constant 0 : i32
    return %c0_i32, %c0_i32_0 : i32, i32
  }
  func.func @transform_2(%arg0: i32) -> (i32, i32) {
    %c0_i32 = arith.constant 0 : i32
    %c0_i32_0 = arith.constant 0 : i32
    %c0_i32_1 = arith.constant 0 : i32
    return %c0_i32, %c0_i32_0 : i32, i32
  }
  func.func @transform_3(%arg0: i32) -> (i32, i32) {
    %c0_i32 = arith.constant 0 : i32
    %c0_i32_0 = arith.constant 0 : i32
    %c0_i32_1 = arith.constant 0 : i32
    return %c0_i32, %c0_i32_0 : i32, i32
  }
  func.func @transform_4(%arg0: i32) -> (i32, i32) {
    %c0_i32 = arith.constant 0 : i32
    %c0_i32_0 = arith.constant 0 : i32
    %c0_i32_1 = arith.constant 0 : i32
    return %c0_i32, %c0_i32_0 : i32, i32
  }
  func.func @transform_5(%arg0: i32) -> (i32, i32) {
    %c0_i32 = arith.constant 0 : i32
    %c0_i32_0 = arith.constant 0 : i32
    %c0_i32_1 = arith.constant 0 : i32
    return %c0_i32, %c0_i32_0 : i32, i32
  }
  func.func @transform_6(%arg0: i32) -> (i32, i32) {
    %c0_i32 = arith.constant 0 : i32
    %c0_i32_0 = arith.constant 0 : i32
    %c0_i32_1 = arith.constant 0 : i32
    return %c0_i32, %c0_i32_0 : i32, i32
  }
  func.func @transform_7(%arg0: i32) -> (i32, i32) {
    %c0_i32 = arith.constant 0 : i32
    %c0_i32_0 = arith.constant 0 : i32
    %c0_i32_1 = arith.constant 0 : i32
    return %c0_i32, %c0_i32_0 : i32, i32
  }
  func.func @transform_8(%arg0: i32) -> (i32, i32) {
    %c0_i32 = arith.constant 0 : i32
    %c0_i32_0 = arith.constant 0 : i32
    %c0_i32_1 = arith.constant 0 : i32
    return %c0_i32, %c0_i32_0 : i32, i32
  }
  func.func @transform_9(%arg0: i32) -> (i32, i32) {
    %c0_i32 = arith.constant 0 : i32
    %c0_i32_0 = arith.constant 0 : i32
    %c0_i32_1 = arith.constant 0 : i32
    return %c0_i32, %c0_i32_0 : i32, i32
  }
  func.func @transform_10(%arg0: i32) -> (i32, i32, i32) {
    %c0_i32 = arith.constant 0 : i32
    %c0_i32_0 = arith.constant 0 : i32
    %c0_i32_1 = arith.constant 0 : i32
    return %arg0, %c0_i32, %c0_i32_0 : i32, i32, i32
  }
}

</mosaic_0001>

<llo_original>
// kernel: tpu_custom_call.1
$region0: #{tpu_custom_call.1}
  #allocation0 [shape = 'u32[]', space=smem, size = 0x4, offset = 0x4, fixed_abs, tag = 'smem constant byte address 0x4 - core index']
  #allocation1 [shape = 'u32[144,128]{1,0:T(1,128)}', space=vmem, size = 0x12000, scoped, tag = 'internal scratch']
  %s0 = inlined_call_operand.hbm [shape: f32[1,8,128], index: 0, kind: input, shape index: {}]
  %s1 = inlined_call_operand.hbm [shape: f32[3,128], index: 1, kind: input, shape index: {}]
  %s2 = inlined_call_operand.vmem [shape: f32[1,128], index: 2, kind: input, shape index: {}]
  %s3 = inlined_call_operand.hbm [shape: bf16[128,256], index: 3, kind: input, shape index: {}]
  %s4 = inlined_call_operand.vmem [shape: f32[1,256], index: 4, kind: input, shape index: {}]
  %s5 = inlined_call_operand.hbm [shape: bf16[256,512], index: 5, kind: input, shape index: {}]
  %s6 = inlined_call_operand.hbm [shape: bf16[128,512], index: 6, kind: input, shape index: {}]
  %s7 = inlined_call_operand.vmem [shape: f32[1,512], index: 7, kind: input, shape index: {}]
  %s8 = inlined_call_operand.hbm [shape: bf16[512,256], index: 8, kind: input, shape index: {}]
  %s9 = inlined_call_operand.vmem [shape: f32[1,256], index: 9, kind: input, shape index: {}]
  %s10 = inlined_call_operand.hbm [shape: f32[1,8,256], index: 10, kind: output, shape index: {}]
  %s11 = sld [smem:[#allocation0]]
  $region74: #{tpu_custom_call.1} parent=0
    _
  %s13 = ssub.s32 1, %s11
  %s14 = scalar_select 0, %s13, %s11
  $region1: #{tpu_custom_call.1} parent=0
    #allocation2 [shape = 'u8[4096]{0}', space=vmem, size = 0x1000, scoped, tag = 'input window, operand 0, single buffered']
    #allocation3 [shape = 's32[1]{0}', space=sflag, size = 0x4, scoped, tag = 'scoped memory for tpu_custom_call.1']
    #allocation4 [shape = 's32[1]{0}', space=sflag, size = 0x4, scoped, tag = 'scoped memory for tpu_custom_call.1']
    #allocation5 [shape = 'u8[2048]{0}', space=vmem, size = 0x800, scoped, tag = 'input window, operand 1, single buffered']
    #allocation6 [shape = 's32[1]{0}', space=sflag, size = 0x4, scoped, tag = 'scoped memory for tpu_custom_call.1']
    #allocation7 [shape = 'u8[65536]{0}', space=vmem, size = 0x10000, scoped, tag = 'input window, operand 3, single buffered']
    #allocation8 [shape = 'u8[262144]{0}', space=vmem, size = 0x40000, scoped, tag = 'input window, operand 5, single buffered']
    #allocation9 [shape = 's32[1]{0}', space=sflag, size = 0x4, scoped, tag = 'scoped memory for tpu_custom_call.1']
    #allocation10 [shape = 'u8[131072]{0}', space=vmem, size = 0x20000, scoped, tag = 'input window, operand 6, single buffered']
    #allocation11 [shape = 'u8[262144]{0}', space=vmem, size = 0x40000, scoped, tag = 'input window, operand 8, single buffered']
    #allocation12 [shape = 's32[1]{0}', space=sflag, size = 0x4, scoped, tag = 'scoped memory for tpu_custom_call.1']
    #allocation13 [shape = 'u8[8192]{0}', space=vmem, size = 0x2000, scoped, tag = 'output window, operand 0, single buffered']
    %15 = vsyncpa [#allocation3], 0
    %16 = vsyncpa [#allocation6], 0
    %17 = vsyncpa [#allocation9], 0
    %18 = vsyncpa [#allocation12], 0
    %19 = vsyncpa [#allocation4], 0
    // Predicated region
    $region2: #{tpu_custom_call.1} parent=1 // pred_check
      _
    $region3: #{tpu_custom_call.1} parent=1 // pred_check_branch
      %21 = sbr.rel (0) target = $region5
    $region4: #{tpu_custom_call.1} parent=1 // pred_region
      %s23 = ssub.s32 128, 128
      %24 = vsyncadd [#allocation3], %s23
      %s26 = sshll.u32 [#allocation2], 4
      %s27 = int_to_ptr.vmem [resolvable:$true] %s26
      %29 = dma.hbm_to_vmem [thread:$0]  %s0, 128, %s27, [#allocation3]
    $region5: #{tpu_custom_call.1} parent=1 // pred_fallthru
      _
    // Predicated region
    $region6: #{tpu_custom_call.1} parent=1 // pred_check
      _
    $region7: #{tpu_custom_call.1} parent=1 // pred_check_branch
      %31 = sbr.rel (0) target = $region9
    $region8: #{tpu_custom_call.1} parent=1 // pred_region
      %s33 = ssub.s32 64, 64
      %34 = vsyncadd [#allocation6], %s33
      %s36 = sshll.u32 [#allocation5], 4
      %s37 = int_to_ptr.vmem [resolvable:$true] %s36
      %39 = dma.hbm_to_vmem [thread:$0]  %s1, 64, %s37, [#allocation6]
    $region9: #{tpu_custom_call.1} parent=1 // pred_fallthru
      _
    // Predicated region
    $region10: #{tpu_custom_call.1} parent=1 // pred_check
      _
    $region11: #{tpu_custom_call.1} parent=1 // pred_check_branch
      %41 = sbr.rel (0) target = $region13
    $region12: #{tpu_custom_call.1} parent=1 // pred_region
      _
    $region13: #{tpu_custom_call.1} parent=1 // pred_fallthru
      _
    // Predicated region
    $region14: #{tpu_custom_call.1} parent=1 // pred_check
      _
    $region15: #{tpu_custom_call.1} parent=1 // pred_check_branch
      %43 = sbr.rel (0) target = $region17
    $region16: #{tpu_custom_call.1} parent=1 // pred_region
      %s45 = ssub.s32 2048, 2048
      %46 = vsyncadd [#allocation6], %s45
      %s47 = sshll.u32 [#allocation7], 4
      %s48 = int_to_ptr.vmem [resolvable:$true] %s47
      %53 = dma.hbm_to_vmem [thread:$0]  %s3, 2048, %s48, [#allocation6], 128, 128, 8
    $region17: #{tpu_custom_call.1} parent=1 // pred_fallthru
      _
    // Predicated region
    $region18: #{tpu_custom_call.1} parent=1 // pred_check
      _
    $region19: #{tpu_custom_call.1} parent=1 // pred_check_branch
      %55 = sbr.rel (0) target = $region21
    $region20: #{tpu_custom_call.1} parent=1 // pred_region
      _
    $region21: #{tpu_custom_call.1} parent=1 // pred_fallthru
      _
    // Predicated region
    $region22: #{tpu_custom_call.1} parent=1 // pred_check
      _
    $region23: #{tpu_custom_call.1} parent=1 // pred_check_branch
      %57 = sbr.rel (0) target = $region25
    $region24: #{tpu_custom_call.1} parent=1 // pred_region
      %s59 = ssub.s32 8192, 8192
      %60 = vsyncadd [#allocation9], %s59
      %s61 = sshll.u32 [#allocation8], 4
      %s62 = int_to_ptr.vmem [resolvable:$true] %s61
      %67 = dma.hbm_to_vmem [thread:$0]  %s5, 8192, %s62, [#allocation9], 256, 256, 16
    $region25: #{tpu_custom_call.1} parent=1 // pred_fallthru
      _
    // Predicated region
    $region26: #{tpu_custom_call.1} parent=1 // pred_check
      _
    $region27: #{tpu_custom_call.1} parent=1 // pred_check_branch
      %69 = sbr.rel (0) target = $region29
    $region28: #{tpu_custom_call.1} parent=1 // pred_region
      %s71 = ssub.s32 4096, 4096
      %72 = vsyncadd [#allocation9], %s71
      %s73 = sshll.u32 [#allocation10], 4
      %s74 = int_to_ptr.vmem [resolvable:$true] %s73
      %79 = dma.hbm_to_vmem [thread:$0]  %s6, 4096, %s74, [#allocation9], 256, 256, 16
    $region29: #{tpu_custom_call.1} parent=1 // pred_fallthru
      _
    // Predicated region
    $region30: #{tpu_custom_call.1} parent=1 // pred_check
      _
    $region31: #{tpu_custom_call.1} parent=1 // pred_check_branch
      %81 = sbr.rel (0) target = $region33
    $region32: #{tpu_custom_call.1} parent=1 // pred_region
      _
    $region33: #{tpu_custom_call.1} parent=1 // pred_fallthru
      _
    // Predicated region
    $region34: #{tpu_custom_call.1} parent=1 // pred_check
      _
    $region35: #{tpu_custom_call.1} parent=1 // pred_check_branch
      %83 = sbr.rel (0) target = $region37
    $region36: #{tpu_custom_call.1} parent=1 // pred_region
      %s85 = ssub.s32 8192, 8192
      %86 = vsyncadd [#allocation12], %s85
      %s87 = sshll.u32 [#allocation11], 4
      %s88 = int_to_ptr.vmem [resolvable:$true] %s87
      %93 = dma.hbm_to_vmem [thread:$0]  %s8, 8192, %s88, [#allocation12], 128, 128, 8
    $region37: #{tpu_custom_call.1} parent=1 // pred_fallthru
      _
    // Predicated region
    $region38: #{tpu_custom_call.1} parent=1 // pred_check
      _
    $region39: #{tpu_custom_call.1} parent=1 // pred_check_branch
      %95 = sbr.rel (0) target = $region41
    $region40: #{tpu_custom_call.1} parent=1 // pred_region
      _
    $region41: #{tpu_custom_call.1} parent=1 // pred_fallthru
      _
    // Predicated region
    $region42: #{tpu_custom_call.1} parent=1 // pred_check
      _
    $region43: #{tpu_custom_call.1} parent=1 // pred_check_branch
      %97 = sbr.rel (0) target = $region45
    $region44: #{tpu_custom_call.1} parent=1 // pred_region
      %98 = dma.done [#allocation3], 128
    $region45: #{tpu_custom_call.1} parent=1 // pred_fallthru
      _
    // Predicated region
    $region46: #{tpu_custom_call.1} parent=1 // pred_check
      _
    $region47: #{tpu_custom_call.1} parent=1 // pred_check_branch
      %100 = sbr.rel (0) target = $region49
    $region48: #{tpu_custom_call.1} parent=1 // pred_region
      %101 = dma.done [#allocation6], 64
    $region49: #{tpu_custom_call.1} parent=1 // pred_fallthru
      _
    // Predicated region
    $region50: #{tpu_custom_call.1} parent=1 // pred_check
      _
    $region51: #{tpu_custom_call.1} parent=1 // pred_check_branch
      %103 = sbr.rel (0) target = $region53
    $region52: #{tpu_custom_call.1} parent=1 // pred_region
      %104 = dma.done [#allocation6], 2048
    $region53: #{tpu_custom_call.1} parent=1 // pred_fallthru
      _
    // Predicated region
    $region54: #{tpu_custom_call.1} parent=1 // pred_check
      _
    $region55: #{tpu_custom_call.1} parent=1 // pred_check_branch
      %106 = sbr.rel (0) target = $region57
    $region56: #{tpu_custom_call.1} parent=1 // pred_region
      %107 = dma.done [#allocation9], 8192
    $region57: #{tpu_custom_call.1} parent=1 // pred_fallthru
      _
    // Predicated region
    $region58: #{tpu_custom_call.1} parent=1 // pred_check
      _
    $region59: #{tpu_custom_call.1} parent=1 // pred_check_branch
      %109 = sbr.rel (0) target = $region61
    $region60: #{tpu_custom_call.1} parent=1 // pred_region
      %110 = dma.done [#allocation9], 4096
    $region61: #{tpu_custom_call.1} parent=1 // pred_fallthru
      _
    // Predicated region
    $region62: #{tpu_custom_call.1} parent=1 // pred_check
      _
    $region63: #{tpu_custom_call.1} parent=1 // pred_check_branch
      %112 = sbr.rel (0) target = $region65
    $region64: #{tpu_custom_call.1} parent=1 // pred_region
      %113 = dma.done [#allocation12], 8192
    $region65: #{tpu_custom_call.1} parent=1 // pred_fallthru
      _
    %v115 = vld [vmem:[#allocation2] sm:$0xff]
    %116 = vxpose.xlu0.b32.start [1/16] %v115, 128
    %117 = vxpose.xlu0.b32.cont [2/16] 0.0, 128
    %118 = vxpose.xlu0.b32.cont [3/16] 0.0, 128
    %119 = vxpose.xlu0.b32.cont [4/16] 0.0, 128
    %120 = vxpose.xlu0.b32.cont [5/16] 0.0, 128
    %121 = vxpose.xlu0.b32.cont [6/16] 0.0, 128
    %122 = vxpose.xlu0.b32.cont [7/16] 0.0, 128
    %123 = vxpose.xlu0.b32.cont [8/16] 0.0, 128
    %124 = vxpose.xlu0.b32.cont [9/16] 0.0, 128
    %125 = vxpose.xlu0.b32.cont [10/16] 0.0, 128
    %126 = vxpose.xlu0.b32.cont [11/16] 0.0, 128
    %127 = vxpose.xlu0.b32.cont [12/16] 0.0, 128
    %128 = vxpose.xlu0.b32.cont [13/16] 0.0, 128
    %129 = vxpose.xlu0.b32.cont [14/16] 0.0, 128
    %130 = vxpose.xlu0.b32.cont [15/16] 0.0, 128
    %131 = vxpose.xlu0.b32.end [16/16] 0.0, 128
    %v132 = vpop.trf.xlu0
    %v133 = vpop.trf.xlu0
    %v134 = vpop.trf.xlu0
    %v135 = vpop.trf.xlu0
    %v136 = vpop.trf.xlu0
    %v137 = vpop.trf.xlu0
    %v138 = vpop.trf.xlu0
    %v139 = vpop.trf.xlu0
    %v140 = vpop.trf.xlu0
    %v141 = vpop.trf.xlu0
    %v142 = vpop.trf.xlu0
    %v143 = vpop.trf.xlu0
    %v144 = vpop.trf.xlu0
    %v145 = vpop.trf.xlu0
    %v146 = vpop.trf.xlu0
    %v147 = vpop.trf.xlu0
    %v148 = vld [vmem:[#allocation5] sm:$0x7]
    %150 = vset.pattern.permute.xlu0 0
    %151 = vperm.xlu0 %150, %v132
    %v152 = vpop.permute.xlu0 %151
    %155 = vset.pattern.permute.xlu0 0
    %156 = vperm.xlu0 %155, %v133
    %v157 = vpop.permute.xlu0 %156
    %160 = vset.pattern.permute.xlu0 0
    %161 = vperm.xlu0 %160, %v134
    %v162 = vpop.permute.xlu0 %161
    %165 = vset.pattern.permute.xlu0 0
    %166 = vperm.xlu0 %165, %v135
    %v167 = vpop.permute.xlu0 %166
    %170 = vset.pattern.permute.xlu0 0
    %171 = vperm.xlu0 %170, %v136
    %v172 = vpop.permute.xlu0 %171
    %175 = vset.pattern.permute.xlu0 0
    %176 = vperm.xlu0 %175, %v137
    %v177 = vpop.permute.xlu0 %176
    %180 = vset.pattern.permute.xlu0 0
    %181 = vperm.xlu0 %180, %v138
    %v182 = vpop.permute.xlu0 %181
    %185 = vset.pattern.permute.xlu0 0
    %186 = vperm.xlu0 %185, %v139
    %v187 = vpop.permute.xlu0 %186
    %190 = vset.pattern.permute.xlu0 0
    %191 = vperm.xlu0 %190, %v140
    %v192 = vpop.permute.xlu0 %191
    %195 = vset.pattern.permute.xlu0 0
    %196 = vperm.xlu0 %195, %v141
    %v197 = vpop.permute.xlu0 %196
    %200 = vset.pattern.permute.xlu0 0
    %201 = vperm.xlu0 %200, %v142
    %v202 = vpop.permute.xlu0 %201
    %205 = vset.pattern.permute.xlu0 0
    %206 = vperm.xlu0 %205, %v143
    %v207 = vpop.permute.xlu0 %206
    %210 = vset.pattern.permute.xlu0 0
    %211 = vperm.xlu0 %210, %v144
    %v212 = vpop.permute.xlu0 %211
    %215 = vset.pattern.permute.xlu0 0
    %216 = vperm.xlu0 %215, %v145
    %v217 = vpop.permute.xlu0 %216
    %220 = vset.pattern.permute.xlu0 0
    %221 = vperm.xlu0 %220, %v146
    %v222 = vpop.permute.xlu0 %221
    %225 = vset.pattern.permute.xlu0 0
    %226 = vperm.xlu0 %225, %v147
    %v227 = vpop.permute.xlu0 %226
    %v229 = vlaneseq
    %v230 = vshrl.u32 %v229, 7
    %v231 = vsub.s32 0, %v230
    %v232 = vrot.slane %v148, %v231
    %v233 = vmul.f32 %v152, %v232
    %v234 = vmul.f32 %v157, %v232
    %v235 = vmul.f32 %v162, %v232
    %v236 = vmul.f32 %v167, %v232
    %v237 = vmul.f32 %v172, %v232
    %v238 = vmul.f32 %v177, %v232
    %v239 = vmul.f32 %v182, %v232
    %v240 = vmul.f32 %v187, %v232
    %v241 = vmul.f32 %v192, %v232
    %v242 = vmul.f32 %v197, %v232
    %v243 = vmul.f32 %v202, %v232
    %v244 = vmul.f32 %v207, %v232
    %v245 = vmul.f32 %v212, %v232
    %v246 = vmul.f32 %v217, %v232
    %v247 = vmul.f32 %v222, %v232
    %v248 = vmul.f32 %v227, %v232
    %249 = vset.pattern.permute.xlu0 1
    %250 = vperm.xlu0 %249, %v132
    %v251 = vpop.permute.xlu0 %250
    %253 = vset.pattern.permute.xlu0 1
    %254 = vperm.xlu0 %253, %v133
    %v255 = vpop.permute.xlu0 %254
    %257 = vset.pattern.permute.xlu0 1
    %258 = vperm.xlu0 %257, %v134
    %v259 = vpop.permute.xlu0 %258
    %261 = vset.pattern.permute.xlu0 1
    %262 = vperm.xlu0 %261, %v135
    %v263 = vpop.permute.xlu0 %262
    %265 = vset.pattern.permute.xlu0 1
    %266 = vperm.xlu0 %265, %v136
    %v267 = vpop.permute.xlu0 %266
    %269 = vset.pattern.permute.xlu0 1
    %270 = vperm.xlu0 %269, %v137
    %v271 = vpop.permute.xlu0 %270
    %273 = vset.pattern.permute.xlu0 1
    %274 = vperm.xlu0 %273, %v138
    %v275 = vpop.permute.xlu0 %274
    %277 = vset.pattern.permute.xlu0 1
    %278 = vperm.xlu0 %277, %v139
    %v279 = vpop.permute.xlu0 %278
    %281 = vset.pattern.permute.xlu0 1
    %282 = vperm.xlu0 %281, %v140
    %v283 = vpop.permute.xlu0 %282
    %285 = vset.pattern.permute.xlu0 1
    %286 = vperm.xlu0 %285, %v141
    %v287 = vpop.permute.xlu0 %286
    %289 = vset.pattern.permute.xlu0 1
    %290 = vperm.xlu0 %289, %v142
    %v291 = vpop.permute.xlu0 %290
    %293 = vset.pattern.permute.xlu0 1
    %294 = vperm.xlu0 %293, %v143
    %v295 = vpop.permute.xlu0 %294
    %297 = vset.pattern.permute.xlu0 1
    %298 = vperm.xlu0 %297, %v144
    %v299 = vpop.permute.xlu0 %298
    %301 = vset.pattern.permute.xlu0 1
    %302 = vperm.xlu0 %301, %v145
    %v303 = vpop.permute.xlu0 %302
    %305 = vset.pattern.permute.xlu0 1
    %306 = vperm.xlu0 %305, %v146
    %v307 = vpop.permute.xlu0 %306
    %309 = vset.pattern.permute.xlu0 1
    %310 = vperm.xlu0 %309, %v147
    %v311 = vpop.permute.xlu0 %310
    %v313 = vlaneseq
    %v314 = vshrl.u32 %v313, 7
    %v315 = vsub.s32 1, %v314
    %v316 = vrot.slane %v148, %v315
    %v317 = vmul.f32 %v251, %v316
    %v318 = vmul.f32 %v255, %v316
    %v319 = vmul.f32 %v259, %v316
    %v320 = vmul.f32 %v263, %v316
    %v321 = vmul.f32 %v267, %v316
    %v322 = vmul.f32 %v271, %v316
    %v323 = vmul.f32 %v275, %v316
    %v324 = vmul.f32 %v279, %v316
    %v325 = vmul.f32 %v283, %v316
    %v326 = vmul.f32 %v287, %v316
    %v327 = vmul.f32 %v291, %v316
    %v328 = vmul.f32 %v295, %v316
    %v329 = vmul.f32 %v299, %v316
    %v330 = vmul.f32 %v303, %v316
    %v331 = vmul.f32 %v307, %v316
    %v332 = vmul.f32 %v311, %v316
    %v333 = vadd.f32 %v233, %v317
    %v334 = vadd.f32 %v234, %v318
    %v335 = vadd.f32 %v235, %v319
    %v336 = vadd.f32 %v236, %v320
    %v337 = vadd.f32 %v237, %v321
    %v338 = vadd.f32 %v238, %v322
    %v339 = vadd.f32 %v239, %v323
    %v340 = vadd.f32 %v240, %v324
    %v341 = vadd.f32 %v241, %v325
    %v342 = vadd.f32 %v242, %v326
    %v343 = vadd.f32 %v243, %v327
    %v344 = vadd.f32 %v244, %v328
    %v345 = vadd.f32 %v245, %v329
    %v346 = vadd.f32 %v246, %v330
    %v347 = vadd.f32 %v247, %v331
    %v348 = vadd.f32 %v248, %v332
    %349 = vset.pattern.permute.xlu0 2
    %350 = vperm.xlu0 %349, %v132
    %v351 = vpop.permute.xlu0 %350
    %353 = vset.pattern.permute.xlu0 2
    %354 = vperm.xlu0 %353, %v133
    %v355 = vpop.permute.xlu0 %354
    %357 = vset.pattern.permute.xlu0 2
    %358 = vperm.xlu0 %357, %v134
    %v359 = vpop.permute.xlu0 %358
    %361 = vset.pattern.permute.xlu0 2
    %362 = vperm.xlu0 %361, %v135
    %v363 = vpop.permute.xlu0 %362
    %365 = vset.pattern.permute.xlu0 2
    %366 = vperm.xlu0 %365, %v136
    %v367 = vpop.permute.xlu0 %366
    %369 = vset.pattern.permute.xlu0 2
    %370 = vperm.xlu0 %369, %v137
    %v371 = vpop.permute.xlu0 %370
    %373 = vset.pattern.permute.xlu0 2
    %374 = vperm.xlu0 %373, %v138
    %v375 = vpop.permute.xlu0 %374
    %377 = vset.pattern.permute.xlu0 2
    %378 = vperm.xlu0 %377, %v139
    %v379 = vpop.permute.xlu0 %378
    %381 = vset.pattern.permute.xlu0 2
    %382 = vperm.xlu0 %381, %v140
    %v383 = vpop.permute.xlu0 %382
    %385 = vset.pattern.permute.xlu0 2
    %386 = vperm.xlu0 %385, %v141
    %v387 = vpop.permute.xlu0 %386
    %389 = vset.pattern.permute.xlu0 2
    %390 = vperm.xlu0 %389, %v142
    %v391 = vpop.permute.xlu0 %390
    %393 = vset.pattern.permute.xlu0 2
    %394 = vperm.xlu0 %393, %v143
    %v395 = vpop.permute.xlu0 %394
    %397 = vset.pattern.permute.xlu0 2
    %398 = vperm.xlu0 %397, %v144
    %v399 = vpop.permute.xlu0 %398
    %401 = vset.pattern.permute.xlu0 2
    %402 = vperm.xlu0 %401, %v145
    %v403 = vpop.permute.xlu0 %402
    %405 = vset.pattern.permute.xlu0 2
    %406 = vperm.xlu0 %405, %v146
    %v407 = vpop.permute.xlu0 %406
    %409 = vset.pattern.permute.xlu0 2
    %410 = vperm.xlu0 %409, %v147
    %v411 = vpop.permute.xlu0 %410
    %v413 = vlaneseq
    %v414 = vshrl.u32 %v413, 7
    %v415 = vsub.s32 2, %v414
    %v416 = vrot.slane %v148, %v415
    %v417 = vmul.f32 %v351, %v416
    %v418 = vmul.f32 %v355, %v416
    %v419 = vmul.f32 %v359, %v416
    %v420 = vmul.f32 %v363, %v416
    %v421 = vmul.f32 %v367, %v416
    %v422 = vmul.f32 %v371, %v416
    %v423 = vmul.f32 %v375, %v416
    %v424 = vmul.f32 %v379, %v416
    %v425 = vmul.f32 %v383, %v416
    %v426 = vmul.f32 %v387, %v416
    %v427 = vmul.f32 %v391, %v416
    %v428 = vmul.f32 %v395, %v416
    %v429 = vmul.f32 %v399, %v416
    %v430 = vmul.f32 %v403, %v416
    %v431 = vmul.f32 %v407, %v416
    %v432 = vmul.f32 %v411, %v416
    %v433 = vadd.f32 %v333, %v417
    %v434 = vadd.f32 %v334, %v418
    %v435 = vadd.f32 %v335, %v419
    %v436 = vadd.f32 %v336, %v420
    %v437 = vadd.f32 %v337, %v421
    %v438 = vadd.f32 %v338, %v422
    %v439 = vadd.f32 %v339, %v423
    %v440 = vadd.f32 %v340, %v424
    %v441 = vadd.f32 %v341, %v425
    %v442 = vadd.f32 %v342, %v426
    %v443 = vadd.f32 %v343, %v427
    %v444 = vadd.f32 %v344, %v428
    %v445 = vadd.f32 %v345, %v429
    %v446 = vadd.f32 %v346, %v430
    %v447 = vadd.f32 %v347, %v431
    %v448 = vadd.f32 %v348, %v432
    %v449 = vld [vmem:[%s2] sm:$0x1]
    %v451 = vlaneseq
    %v452 = vshrl.u32 %v451, 7
    %v453 = vsub.s32 0, %v452
    %v454 = vrot.slane %v449, %v453
    %v456 = vadd.f32 %v433, %v454
    %v457 = vadd.f32 %v434, %v454
    %v458 = vadd.f32 %v435, %v454
    %v459 = vadd.f32 %v436, %v454
    %v460 = vadd.f32 %v437, %v454
    %v461 = vadd.f32 %v438, %v454
    %v462 = vadd.f32 %v439, %v454
    %v463 = vadd.f32 %v440, %v454
    %v464 = vadd.f32 %v441, %v454
    %v465 = vadd.f32 %v442, %v454
    %v466 = vadd.f32 %v443, %v454
    %v467 = vadd.f32 %v444, %v454
    %v468 = vadd.f32 %v445, %v454
    %v469 = vadd.f32 %v446, %v454
    %v470 = vadd.f32 %v447, %v454
    %v471 = vadd.f32 %v448, %v454
    %v472 = vmax.f32 %v456, 0.0
    %v473 = vmax.f32 %v457, 0.0
    %v474 = vmax.f32 %v458, 0.0
    %v475 = vmax.f32 %v459, 0.0
    %v476 = vmax.f32 %v460, 0.0
    %v477 = vmax.f32 %v461, 0.0
    %v478 = vmax.f32 %v462, 0.0
    %v479 = vmax.f32 %v463, 0.0
    %v480 = vmax.f32 %v464, 0.0
    %v481 = vmax.f32 %v465, 0.0
    %v482 = vmax.f32 %v466, 0.0
    %v483 = vmax.f32 %v467, 0.0
    %v484 = vmax.f32 %v468, 0.0
    %v485 = vmax.f32 %v469, 0.0
    %v486 = vmax.f32 %v470, 0.0
    %v487 = vmax.f32 %v471, 0.0
    %v488 = vpack.c.bf16 %v473, %v472
    %v489 = vpack.c.bf16 %v475, %v474
    %v490 = vpack.c.bf16 %v477, %v476
    %v491 = vpack.c.bf16 %v479, %v478
    %v492 = vpack.c.bf16 %v481, %v480
    %v493 = vpack.c.bf16 %v483, %v482
    %v494 = vpack.c.bf16 %v485, %v484
    %v495 = vpack.c.bf16 %v487, %v486
    %v496 = vld [vmem:[#allocation7] sm:$0xff]
    %v497 = vld [vmem:[#allocation7 + $0x8] sm:$0xff]
    %v498 = vld [vmem:[#allocation7 + $0x10] sm:$0xff]
    %v499 = vld [vmem:[#allocation7 + $0x18] sm:$0xff]
    %v500 = vld [vmem:[#allocation7 + $0x20] sm:$0xff]
    %v501 = vld [vmem:[#allocation7 + $0x28] sm:$0xff]
    %v502 = vld [vmem:[#allocation7 + $0x30] sm:$0xff]
    %v503 = vld [vmem:[#allocation7 + $0x38] sm:$0xff]
    %v504 = vld [vmem:[#allocation7 + $0x40] sm:$0xff]
    %v505 = vld [vmem:[#allocation7 + $0x48] sm:$0xff]
    %v506 = vld [vmem:[#allocation7 + $0x50] sm:$0xff]
    %v507 = vld [vmem:[#allocation7 + $0x58] sm:$0xff]
    %v508 = vld [vmem:[#allocation7 + $0x60] sm:$0xff]
    %v509 = vld [vmem:[#allocation7 + $0x68] sm:$0xff]
    %v510 = vld [vmem:[#allocation7 + $0x70] sm:$0xff]
    %v511 = vld [vmem:[#allocation7 + $0x78] sm:$0xff]
    %v512 = vld [vmem:[%s4] sm:$0x3]
    %v514 = vlaneseq
    %v515 = vshrl.u32 %v514, 7
    %v516 = vsub.s32 0, %v515
    %v517 = vrot.slane %v512, %v516
    %v518 = vlaneseq
    %v519 = vshrl.u32 %v518, 7
    %v520 = vsub.s32 1, %v519
    %v521 = vrot.slane %v512, %v520
    %v540 = vunpack.c.l.b16 %v496
    %v541 = vunpack.c.h.b16 %v496
    %v542 = vunpack.c.l.b16 %v497
    %v543 = vunpack.c.h.b16 %v497
    %v544 = vunpack.c.l.b16 %v498
    %v545 = vunpack.c.h.b16 %v498
    %v546 = vunpack.c.l.b16 %v499
    %v547 = vunpack.c.h.b16 %v499
    %v548 = vunpack.c.l.b16 %v500
    %v549 = vunpack.c.h.b16 %v500
    %v550 = vunpack.c.l.b16 %v501
    %v551 = vunpack.c.h.b16 %v501
    %v552 = vunpack.c.l.b16 %v502
    %v553 = vunpack.c.h.b16 %v502
    %v554 = vunpack.c.l.b16 %v503
    %v555 = vunpack.c.h.b16 %v503
    %v556 = vunpack.c.l.b16 %v504
    %v557 = vunpack.c.h.b16 %v504
    %v558 = vunpack.c.l.b16 %v505
    %v559 = vunpack.c.h.b16 %v505
    %v560 = vunpack.c.l.b16 %v506
    %v561 = vunpack.c.h.b16 %v506
    %v562 = vunpack.c.l.b16 %v507
    %v563 = vunpack.c.h.b16 %v507
    %v564 = vunpack.c.l.b16 %v508
    %v565 = vunpack.c.h.b16 %v508
    %v566 = vunpack.c.l.b16 %v509
    %v567 = vunpack.c.h.b16 %v509
    %v568 = vunpack.c.l.b16 %v510
    %v569 = vunpack.c.h.b16 %v510
    %v570 = vunpack.c.l.b16 %v511
    %v571 = vunpack.c.h.b16 %v511
    %v572 = vpack.c.b16 %v542, %v540
    %v573 = vpack.c.b16 %v543, %v541
    %v574 = vpack.c.b16 %v546, %v544
    %v575 = vpack.c.b16 %v547, %v545
    %v576 = vpack.c.b16 %v550, %v548
    %v577 = vpack.c.b16 %v551, %v549
    %v578 = vpack.c.b16 %v554, %v552
    %v579 = vpack.c.b16 %v555, %v553
    %v580 = vpack.c.b16 %v558, %v556
    %v581 = vpack.c.b16 %v559, %v557
    %v582 = vpack.c.b16 %v562, %v560
    %v583 = vpack.c.b16 %v563, %v561
    %v584 = vpack.c.b16 %v566, %v564
    %v585 = vpack.c.b16 %v567, %v565
    %v586 = vpack.c.b16 %v570, %v568
    %v587 = vpack.c.b16 %v571, %v569
    %604 = vmatprep.subr.bf16.mxu0 %v573
    %605 = vmatpush1.bf16.msra.mxu0 %v572
    %606 = vmatprep.subr.bf16.mxu0 %v575
    %607 = vmatpush1.bf16.msra.mxu0 %v574
    %608 = vmatprep.subr.bf16.mxu0 %v577
    %609 = vmatpush1.bf16.msra.mxu0 %v576
    %610 = vmatprep.subr.bf16.mxu0 %v579
    %611 = vmatpush1.bf16.msra.mxu0 %v578
    %612 = vmatprep.subr.bf16.mxu0 %v581
    %613 = vmatpush1.bf16.msra.mxu0 %v580
    %614 = vmatprep.subr.bf16.mxu0 %v583
    %615 = vmatpush1.bf16.msra.mxu0 %v582
    %616 = vmatprep.subr.bf16.mxu0 %v585
    %617 = vmatpush1.bf16.msra.mxu0 %v584
    %618 = vmatprep.subr.bf16.mxu0 %v587
    %619 = vmatpush1.bf16.msra.mxu0 %v586
    %620 = vmatprep.subr.bf16.mxu0 0
    %621 = vmatpush1.bf16.msra.mxu0 0
    %622 = vmatprep.subr.bf16.mxu0 0
    %623 = vmatpush1.bf16.msra.mxu0 0
    %624 = vmatprep.subr.bf16.mxu0 0
    %625 = vmatpush1.bf16.msra.mxu0 0
    %626 = vmatprep.subr.bf16.mxu0 0
    %627 = vmatpush1.bf16.msra.mxu0 0
    %628 = vmatprep.subr.bf16.mxu0 0
    %629 = vmatpush1.bf16.msra.mxu0 0
    %630 = vmatprep.subr.bf16.mxu0 0
    %631 = vmatpush1.bf16.msra.mxu0 0
    %632 = vmatprep.subr.bf16.mxu0 0
    %633 = vmatpush1.bf16.msra.mxu0 0
    %634 = vmatprep.subr.bf16.mxu0 0
    %635 = vmatpush1.bf16.msra.mxu0 0
    %636 = vmatprep.mubr.bf16.mxu0 0
    %637 = vmatmul.mubr.bf16.gmra.mrb[0].mxu0 %v488
    %v638 = vpop.f32.mrb[0].mxu0
    %v639 = vadd.f32 %v517, %v638
    %v640 = vpop.f32.mrb[0].mxu0
    %v641 = vadd.f32 %v521, %v640
    %v642 = vpop.f32.mrb[0].mxu0
    %v643 = vadd.f32 %v517, %v642
    %v644 = vpop.f32.mrb[0].mxu0
    %v645 = vadd.f32 %v521, %v644
    %646 = vmatprep.mubr.bf16.mxu0 0
    %647 = vmatmul.mubr.bf16.gmra.mrb[0].mxu0 %v489
    %v648 = vpop.f32.mrb[0].mxu0
    %v649 = vadd.f32 %v517, %v648
    %v650 = vpop.f32.mrb[0].mxu0
    %v651 = vadd.f32 %v521, %v650
    %v652 = vpop.f32.mrb[0].mxu0
    %v653 = vadd.f32 %v517, %v652
    %v654 = vpop.f32.mrb[0].mxu0
    %v655 = vadd.f32 %v521, %v654
    %656 = vmatprep.mubr.bf16.mxu0 0
    %657 = vmatmul.mubr.bf16.gmra.mrb[0].mxu0 %v490
    %v658 = vpop.f32.mrb[0].mxu0
    %v659 = vadd.f32 %v517, %v658
    %v660 = vpop.f32.mrb[0].mxu0
    %v661 = vadd.f32 %v521, %v660
    %v662 = vpop.f32.mrb[0].mxu0
    %v663 = vadd.f32 %v517, %v662
    %v664 = vpop.f32.mrb[0].mxu0
    %v665 = vadd.f32 %v521, %v664
    %666 = vmatprep.mubr.bf16.mxu0 0
    %667 = vmatmul.mubr.bf16.gmra.mrb[0].mxu0 %v491
    %v668 = vpop.f32.mrb[0].mxu0
    %v669 = vadd.f32 %v517, %v668
    %v670 = vpop.f32.mrb[0].mxu0
    %v671 = vadd.f32 %v521, %v670
    %v672 = vpop.f32.mrb[0].mxu0
    %v673 = vadd.f32 %v517, %v672
    %v674 = vpop.f32.mrb[0].mxu0
    %v675 = vadd.f32 %v521, %v674
    %676 = vmatprep.mubr.bf16.mxu0 0
    %677 = vmatmul.mubr.bf16.gmra.mrb[0].mxu0 %v492
    %v678 = vpop.f32.mrb[0].mxu0
    %v679 = vadd.f32 %v517, %v678
    %v680 = vpop.f32.mrb[0].mxu0
    %v681 = vadd.f32 %v521, %v680
    %v682 = vpop.f32.mrb[0].mxu0
    %v683 = vadd.f32 %v517, %v682
    %v684 = vpop.f32.mrb[0].mxu0
    %v685 = vadd.f32 %v521, %v684
    %686 = vmatprep.mubr.bf16.mxu0 0
    %687 = vmatmul.mubr.bf16.gmra.mrb[0].mxu0 %v493
    %v688 = vpop.f32.mrb[0].mxu0
    %v689 = vadd.f32 %v517, %v688
    %v690 = vpop.f32.mrb[0].mxu0
    %v691 = vadd.f32 %v521, %v690
    %v692 = vpop.f32.mrb[0].mxu0
    %v693 = vadd.f32 %v517, %v692
    %v694 = vpop.f32.mrb[0].mxu0
    %v695 = vadd.f32 %v521, %v694
    %696 = vmatprep.mubr.bf16.mxu0 0
    %697 = vmatmul.mubr.bf16.gmra.mrb[0].mxu0 %v494
    %v698 = vpop.f32.mrb[0].mxu0
    %v699 = vadd.f32 %v517, %v698
    %v700 = vpop.f32.mrb[0].mxu0
    %v701 = vadd.f32 %v521, %v700
    %v702 = vpop.f32.mrb[0].mxu0
    %v703 = vadd.f32 %v517, %v702
    %v704 = vpop.f32.mrb[0].mxu0
    %v705 = vadd.f32 %v521, %v704
    %706 = vmatprep.mubr.bf16.mxu0 0
    %707 = vmatmul.mubr.bf16.gmra.mrb[0].mxu0 %v495
    %v708 = vpop.f32.mrb[0].mxu0
    %v709 = vadd.f32 %v517, %v708
    %v710 = vpop.f32.mrb[0].mxu0
    %v711 = vadd.f32 %v521, %v710
    %v712 = vpop.f32.mrb[0].mxu0
    %v713 = vadd.f32 %v517, %v712
    %v714 = vpop.f32.mrb[0].mxu0
    %v715 = vadd.f32 %v521, %v714
    %716 = vdwg.mxu0
    %v717 = vmax.f32 %v639, %v643
    %v718 = vrot.slane %v717, 4
    %v719 = vmax.f32 %v717, %v718
    %v720 = vrot.slane %v719, 2
    %v721 = vmax.f32 %v719, %v720
    %v722 = vrot.slane %v721, 1
    %v723 = vmax.f32 %v721, %v722
    %v724 = vmax.f32 %v641, %v645
    %v725 = vrot.slane %v724, 4
    %v726 = vmax.f32 %v724, %v725
    %v727 = vrot.slane %v726, 2
    %v728 = vmax.f32 %v726, %v727
    %v729 = vrot.slane %v728, 1
    %v730 = vmax.f32 %v728, %v729
    %v731 = vmax.f32 %v649, %v653
    %v732 = vrot.slane %v731, 4
    %v733 = vmax.f32 %v731, %v732
    %v734 = vrot.slane %v733, 2
    %v735 = vmax.f32 %v733, %v734
    %v736 = vrot.slane %v735, 1
    %v737 = vmax.f32 %v735, %v736
    %v738 = vmax.f32 %v651, %v655
    %v739 = vrot.slane %v738, 4
    %v740 = vmax.f32 %v738, %v739
    %v741 = vrot.slane %v740, 2
    %v742 = vmax.f32 %v740, %v741
    %v743 = vrot.slane %v742, 1
    %v744 = vmax.f32 %v742, %v743
    %v745 = vmax.f32 %v659, %v663
    %v746 = vrot.slane %v745, 4
    %v747 = vmax.f32 %v745, %v746
    %v748 = vrot.slane %v747, 2
    %v749 = vmax.f32 %v747, %v748
    %v750 = vrot.slane %v749, 1
    %v751 = vmax.f32 %v749, %v750
    %v752 = vmax.f32 %v661, %v665
    %v753 = vrot.slane %v752, 4
    %v754 = vmax.f32 %v752, %v753
    %v755 = vrot.slane %v754, 2
    %v756 = vmax.f32 %v754, %v755
    %v757 = vrot.slane %v756, 1
    %v758 = vmax.f32 %v756, %v757
    %v759 = vmax.f32 %v669, %v673
    %v760 = vrot.slane %v759, 4
    %v761 = vmax.f32 %v759, %v760
    %v762 = vrot.slane %v761, 2
    %v763 = vmax.f32 %v761, %v762
    %v764 = vrot.slane %v763, 1
    %v765 = vmax.f32 %v763, %v764
    %v766 = vmax.f32 %v671, %v675
    %v767 = vrot.slane %v766, 4
    %v768 = vmax.f32 %v766, %v767
    %v769 = vrot.slane %v768, 2
    %v770 = vmax.f32 %v768, %v769
    %v771 = vrot.slane %v770, 1
    %v772 = vmax.f32 %v770, %v771
    %v773 = vmax.f32 %v679, %v683
    %v774 = vrot.slane %v773, 4
    %v775 = vmax.f32 %v773, %v774
    %v776 = vrot.slane %v775, 2
    %v777 = vmax.f32 %v775, %v776
    %v778 = vrot.slane %v777, 1
    %v779 = vmax.f32 %v777, %v778
    %v780 = vmax.f32 %v681, %v685
    %v781 = vrot.slane %v780, 4
    %v782 = vmax.f32 %v780, %v781
    %v783 = vrot.slane %v782, 2
    %v784 = vmax.f32 %v782, %v783
    %v785 = vrot.slane %v784, 1
    %v786 = vmax.f32 %v784, %v785
    %v787 = vmax.f32 %v689, %v693
    %v788 = vrot.slane %v787, 4
    %v789 = vmax.f32 %v787, %v788
    %v790 = vrot.slane %v789, 2
    %v791 = vmax.f32 %v789, %v790
    %v792 = vrot.slane %v791, 1
    %v793 = vmax.f32 %v791, %v792
    %v794 = vmax.f32 %v691, %v695
    %v795 = vrot.slane %v794, 4
    %v796 = vmax.f32 %v794, %v795
    %v797 = vrot.slane %v796, 2
    %v798 = vmax.f32 %v796, %v797
    %v799 = vrot.slane %v798, 1
    %v800 = vmax.f32 %v798, %v799
    %v801 = vmax.f32 %v699, %v703
    %v802 = vrot.slane %v801, 4
    %v803 = vmax.f32 %v801, %v802
    %v804 = vrot.slane %v803, 2
    %v805 = vmax.f32 %v803, %v804
    %v806 = vrot.slane %v805, 1
    %v807 = vmax.f32 %v805, %v806
    %v808 = vmax.f32 %v701, %v705
    %v809 = vrot.slane %v808, 4
    %v810 = vmax.f32 %v808, %v809
    %v811 = vrot.slane %v810, 2
    %v812 = vmax.f32 %v810, %v811
    %v813 = vrot.slane %v812, 1
    %v814 = vmax.f32 %v812, %v813
    %v815 = vmax.f32 %v709, %v713
    %v816 = vrot.slane %v815, 4
    %v817 = vmax.f32 %v815, %v816
    %v818 = vrot.slane %v817, 2
    %v819 = vmax.f32 %v817, %v818
    %v820 = vrot.slane %v819, 1
    %v821 = vmax.f32 %v819, %v820
    %v822 = vmax.f32 %v711, %v715
    %v823 = vrot.slane %v822, 4
    %v824 = vmax.f32 %v822, %v823
    %v825 = vrot.slane %v824, 2
    %v826 = vmax.f32 %v824, %v825
    %v827 = vrot.slane %v826, 1
    %v828 = vmax.f32 %v826, %v827
    %v829 = vpack.c.bf16 %v723, %v723
    %v830 = vpack.c.bf16 %v730, %v730
    %v831 = vpack.c.bf16 %v737, %v737
    %v832 = vpack.c.bf16 %v744, %v744
    %v833 = vpack.c.bf16 %v751, %v751
    %v834 = vpack.c.bf16 %v758, %v758
    %v835 = vpack.c.bf16 %v765, %v765
    %v836 = vpack.c.bf16 %v772, %v772
    %v837 = vpack.c.bf16 %v779, %v779
    %v838 = vpack.c.bf16 %v786, %v786
    %v839 = vpack.c.bf16 %v793, %v793
    %v840 = vpack.c.bf16 %v800, %v800
    %v841 = vpack.c.bf16 %v807, %v807
    %v842 = vpack.c.bf16 %v814, %v814
    %v843 = vpack.c.bf16 %v821, %v821
    %v844 = vpack.c.bf16 %v828, %v828
    %v845 = vld [vmem:[#allocation8] sm:$0xff]
    %v846 = vld [vmem:[#allocation8 + $0x8] sm:$0xff]
    %v847 = vld [vmem:[#allocation8 + $0x10] sm:$0xff]
    %v848 = vld [vmem:[#allocation8 + $0x18] sm:$0xff]
    %v849 = vld [vmem:[#allocation8 + $0x20] sm:$0xff]
    %v850 = vld [vmem:[#allocation8 + $0x28] sm:$0xff]
    %v851 = vld [vmem:[#allocation8 + $0x30] sm:$0xff]
    %v852 = vld [vmem:[#allocation8 + $0x38] sm:$0xff]
    %v853 = vld [vmem:[#allocation8 + $0x40] sm:$0xff]
    %v854 = vld [vmem:[#allocation8 + $0x48] sm:$0xff]
    %v855 = vld [vmem:[#allocation8 + $0x50] sm:$0xff]
    %v856 = vld [vmem:[#allocation8 + $0x58] sm:$0xff]
    %v857 = vld [vmem:[#allocation8 + $0x60] sm:$0xff]
    %v858 = vld [vmem:[#allocation8 + $0x68] sm:$0xff]
    %v859 = vld [vmem:[#allocation8 + $0x70] sm:$0xff]
    %v860 = vld [vmem:[#allocation8 + $0x78] sm:$0xff]
    %v861 = vld [vmem:[#allocation8 + $0x80] sm:$0xff]
    %v862 = vld [vmem:[#allocation8 + $0x88] sm:$0xff]
    %v863 = vld [vmem:[#allocation8 + $0x90] sm:$0xff]
    %v864 = vld [vmem:[#allocation8 + $0x98] sm:$0xff]
    %v865 = vld [vmem:[#allocation8 + $0xa0] sm:$0xff]
    %v866 = vld [vmem:[#allocation8 + $0xa8] sm:$0xff]
    %v867 = vld [vmem:[#allocation8 + $0xb0] sm:$0xff]
    %v868 = vld [vmem:[#allocation8 + $0xb8] sm:$0xff]
    %v869 = vld [vmem:[#allocation8 + $0xc0] sm:$0xff]
    %v870 = vld [vmem:[#allocation8 + $0xc8] sm:$0xff]
    %v871 = vld [vmem:[#allocation8 + $0xd0] sm:$0xff]
    %v872 = vld [vmem:[#allocation8 + $0xd8] sm:$0xff]
    %v873 = vld [vmem:[#allocation8 + $0xe0] sm:$0xff]
    %v874 = vld [vmem:[#allocation8 + $0xe8] sm:$0xff]
    %v875 = vld [vmem:[#allocation8 + $0xf0] sm:$0xff]
    %v876 = vld [vmem:[#allocation8 + $0xf8] sm:$0xff]
    %v877 = vld [vmem:[#allocation8 + $0x100] sm:$0xff]
    %v878 = vld [vmem:[#allocation8 + $0x108] sm:$0xff]
    %v879 = vld [vmem:[#allocation8 + $0x110] sm:$0xff]
    %v880 = vld [vmem:[#allocation8 + $0x118] sm:$0xff]
    %v881 = vld [vmem:[#allocation8 + $0x120] sm:$0xff]
    %v882 = vld [vmem:[#allocation8 + $0x128] sm:$0xff]
    %v883 = vld [vmem:[#allocation8 + $0x130] sm:$0xff]
    %v884 = vld [vmem:[#allocation8 + $0x138] sm:$0xff]
    %v885 = vld [vmem:[#allocation8 + $0x140] sm:$0xff]
    %v886 = vld [vmem:[#allocation8 + $0x148] sm:$0xff]
    %v887 = vld [vmem:[#allocation8 + $0x150] sm:$0xff]
    %v888 = vld [vmem:[#allocation8 + $0x158] sm:$0xff]
    %v889 = vld [vmem:[#allocation8 + $0x160] sm:$0xff]
    %v890 = vld [vmem:[#allocation8 + $0x168] sm:$0xff]
    %v891 = vld [vmem:[#allocation8 + $0x170] sm:$0xff]
    %v892 = vld [vmem:[#allocation8 + $0x178] sm:$0xff]
    %v893 = vld [vmem:[#allocation8 + $0x180] sm:$0xff]
    %v894 = vld [vmem:[#allocation8 + $0x188] sm:$0xff]
    %v895 = vld [vmem:[#allocation8 + $0x190] sm:$0xff]
    %v896 = vld [vmem:[#allocation8 + $0x198] sm:$0xff]
    %v897 = vld [vmem:[#allocation8 + $0x1a0] sm:$0xff]
    %v898 = vld [vmem:[#allocation8 + $0x1a8] sm:$0xff]
    %v899 = vld [vmem:[#allocation8 + $0x1b0] sm:$0xff]
    %v900 = vld [vmem:[#allocation8 + $0x1b8] sm:$0xff]
    %v901 = vld [vmem:[#allocation8 + $0x1c0] sm:$0xff]
    %v902 = vld [vmem:[#allocation8 + $0x1c8] sm:$0xff]
    %v903 = vld [vmem:[#allocation8 + $0x1d0] sm:$0xff]
    %v904 = vld [vmem:[#allocation8 + $0x1d8] sm:$0xff]
    %v905 = vld [vmem:[#allocation8 + $0x1e0] sm:$0xff]
    %v906 = vld [vmem:[#allocation8 + $0x1e8] sm:$0xff]
    %v907 = vld [vmem:[#allocation8 + $0x1f0] sm:$0xff]
    %v908 = vld [vmem:[#allocation8 + $0x1f8] sm:$0xff]
    %v925 = vunpack.c.l.b16 %v829
    %v926 = vunpack.c.l.b16 %v830
    %v927 = vunpack.c.l.b16 %v831
    %v928 = vunpack.c.l.b16 %v832
    %v929 = vunpack.c.l.b16 %v833
    %v930 = vunpack.c.l.b16 %v834
    %v931 = vunpack.c.l.b16 %v835
    %v932 = vunpack.c.l.b16 %v836
    %v933 = vunpack.c.l.b16 %v837
    %v934 = vunpack.c.l.b16 %v838
    %v935 = vunpack.c.l.b16 %v839
    %v936 = vunpack.c.l.b16 %v840
    %v937 = vunpack.c.l.b16 %v841
    %v938 = vunpack.c.l.b16 %v842
    %v939 = vunpack.c.l.b16 %v843
    %v940 = vunpack.c.l.b16 %v844
    %vm941 = vcmask 1041409
    %v942 = vsel %vm941, %v927, %v925
    %vm943 = vcmask 1042434
    %v944 = vsel %vm943, %v929, %v942
    %vm945 = vcmask 1043459
    %v946 = vsel %vm945, %v931, %v944
    %vm947 = vcmask 1044484
    %v948 = vsel %vm947, %v933, %v946
    %vm949 = vcmask 1045509
    %v950 = vsel %vm949, %v935, %v948
    %vm951 = vcmask 1046534
    %v952 = vsel %vm951, %v937, %v950
    %vm953 = vcmask 1047559
    %v954 = vsel %vm953, %v939, %v952
    %v955 = vsel %vm941, %v928, %v926
    %v956 = vsel %vm943, %v930, %v955
    %v957 = vsel %vm945, %v932, %v956
    %v958 = vsel %vm947, %v934, %v957
    %v959 = vsel %vm949, %v936, %v958
    %v960 = vsel %vm951, %v938, %v959
    %v961 = vsel %vm953, %v940, %v960
    %v962 = vpack.c.b16 %v954, %v954
    %v963 = vpack.c.b16 %v961, %v961
    %v1030 = vunpack.c.l.b16 %v845
    %v1031 = vunpack.c.h.b16 %v845
    %v1032 = vunpack.c.l.b16 %v846
    %v1033 = vunpack.c.h.b16 %v846
    %v1034 = vunpack.c.l.b16 %v847
    %v1035 = vunpack.c.h.b16 %v847
    %v1036 = vunpack.c.l.b16 %v848
    %v1037 = vunpack.c.h.b16 %v848
    %v1038 = vunpack.c.l.b16 %v849
    %v1039 = vunpack.c.h.b16 %v849
    %v1040 = vunpack.c.l.b16 %v850
    %v1041 = vunpack.c.h.b16 %v850
    %v1042 = vunpack.c.l.b16 %v851
    %v1043 = vunpack.c.h.b16 %v851
    %v1044 = vunpack.c.l.b16 %v852
    %v1045 = vunpack.c.h.b16 %v852
    %v1046 = vunpack.c.l.b16 %v853
    %v1047 = vunpack.c.h.b16 %v853
    %v1048 = vunpack.c.l.b16 %v854
    %v1049 = vunpack.c.h.b16 %v854
    %v1050 = vunpack.c.l.b16 %v855
    %v1051 = vunpack.c.h.b16 %v855
    %v1052 = vunpack.c.l.b16 %v856
    %v1053 = vunpack.c.h.b16 %v856
    %v1054 = vunpack.c.l.b16 %v857
    %v1055 = vunpack.c.h.b16 %v857
    %v1056 = vunpack.c.l.b16 %v858
    %v1057 = vunpack.c.h.b16 %v858
    %v1058 = vunpack.c.l.b16 %v859
    %v1059 = vunpack.c.h.b16 %v859
    %v1060 = vunpack.c.l.b16 %v860
    %v1061 = vunpack.c.h.b16 %v860
    %v1062 = vunpack.c.l.b16 %v861
    %v1063 = vunpack.c.h.b16 %v861
    %v1064 = vunpack.c.l.b16 %v862
    %v1065 = vunpack.c.h.b16 %v862
    %v1066 = vunpack.c.l.b16 %v863
    %v1067 = vunpack.c.h.b16 %v863
    %v1068 = vunpack.c.l.b16 %v864
    %v1069 = vunpack.c.h.b16 %v864
    %v1070 = vunpack.c.l.b16 %v865
    %v1071 = vunpack.c.h.b16 %v865
    %v1072 = vunpack.c.l.b16 %v866
    %v1073 = vunpack.c.h.b16 %v866
    %v1074 = vunpack.c.l.b16 %v867
    %v1075 = vunpack.c.h.b16 %v867
    %v1076 = vunpack.c.l.b16 %v868
    %v1077 = vunpack.c.h.b16 %v868
    %v1078 = vunpack.c.l.b16 %v869
    %v1079 = vunpack.c.h.b16 %v869
    %v1080 = vunpack.c.l.b16 %v870
    %v1081 = vunpack.c.h.b16 %v870
    %v1082 = vunpack.c.l.b16 %v871
    %v1083 = vunpack.c.h.b16 %v871
    %v1084 = vunpack.c.l.b16 %v872
    %v1085 = vunpack.c.h.b16 %v872
    %v1086 = vunpack.c.l.b16 %v873
    %v1087 = vunpack.c.h.b16 %v873
    %v1088 = vunpack.c.l.b16 %v874
    %v1089 = vunpack.c.h.b16 %v874
    %v1090 = vunpack.c.l.b16 %v875
    %v1091 = vunpack.c.h.b16 %v875
    %v1092 = vunpack.c.l.b16 %v876
    %v1093 = vunpack.c.h.b16 %v876
    %v1094 = vunpack.c.l.b16 %v877
    %v1095 = vunpack.c.h.b16 %v877
    %v1096 = vunpack.c.l.b16 %v878
    %v1097 = vunpack.c.h.b16 %v878
    %v1098 = vunpack.c.l.b16 %v879
    %v1099 = vunpack.c.h.b16 %v879
    %v1100 = vunpack.c.l.b16 %v880
    %v1101 = vunpack.c.h.b16 %v880
    %v1102 = vunpack.c.l.b16 %v881
    %v1103 = vunpack.c.h.b16 %v881
    %v1104 = vunpack.c.l.b16 %v882
    %v1105 = vunpack.c.h.b16 %v882
    %v1106 = vunpack.c.l.b16 %v883
    %v1107 = vunpack.c.h.b16 %v883
    %v1108 = vunpack.c.l.b16 %v884
    %v1109 = vunpack.c.h.b16 %v884
    %v1110 = vunpack.c.l.b16 %v885
    %v1111 = vunpack.c.h.b16 %v885
    %v1112 = vunpack.c.l.b16 %v886
    %v1113 = vunpack.c.h.b16 %v886
    %v1114 = vunpack.c.l.b16 %v887
    %v1115 = vunpack.c.h.b16 %v887
    %v1116 = vunpack.c.l.b16 %v888
    %v1117 = vunpack.c.h.b16 %v888
    %v1118 = vunpack.c.l.b16 %v889
    %v1119 = vunpack.c.h.b16 %v889
    %v1120 = vunpack.c.l.b16 %v890
    %v1121 = vunpack.c.h.b16 %v890
    %v1122 = vunpack.c.l.b16 %v891
    %v1123 = vunpack.c.h.b16 %v891
    %v1124 = vunpack.c.l.b16 %v892
    %v1125 = vunpack.c.h.b16 %v892
    %v1126 = vunpack.c.l.b16 %v893
    %v1127 = vunpack.c.h.b16 %v893
    %v1128 = vunpack.c.l.b16 %v894
    %v1129 = vunpack.c.h.b16 %v894
    %v1130 = vunpack.c.l.b16 %v895
    %v1131 = vunpack.c.h.b16 %v895
    %v1132 = vunpack.c.l.b16 %v896
    %v1133 = vunpack.c.h.b16 %v896
    %v1134 = vunpack.c.l.b16 %v897
    %v1135 = vunpack.c.h.b16 %v897
    %v1136 = vunpack.c.l.b16 %v898
    %v1137 = vunpack.c.h.b16 %v898
    %v1138 = vunpack.c.l.b16 %v899
    %v1139 = vunpack.c.h.b16 %v899
    %v1140 = vunpack.c.l.b16 %v900
    %v1141 = vunpack.c.h.b16 %v900
    %v1142 = vunpack.c.l.b16 %v901
    %v1143 = vunpack.c.h.b16 %v901
    %v1144 = vunpack.c.l.b16 %v902
    %v1145 = vunpack.c.h.b16 %v902
    %v1146 = vunpack.c.l.b16 %v903
    %v1147 = vunpack.c.h.b16 %v903
    %v1148 = vunpack.c.l.b16 %v904
    %v1149 = vunpack.c.h.b16 %v904
    %v1150 = vunpack.c.l.b16 %v905
    %v1151 = vunpack.c.h.b16 %v905
    %v1152 = vunpack.c.l.b16 %v906
    %v1153 = vunpack.c.h.b16 %v906
    %v1154 = vunpack.c.l.b16 %v907
    %v1155 = vunpack.c.h.b16 %v907
    %v1156 = vunpack.c.l.b16 %v908
    %v1157 = vunpack.c.h.b16 %v908
    %v1158 = vpack.c.b16 %v1034, %v1030
    %v1159 = vpack.c.b16 %v1035, %v1031
    %v1160 = vpack.c.b16 %v1036, %v1032
    %v1161 = vpack.c.b16 %v1037, %v1033
    %v1162 = vpack.c.b16 %v1042, %v1038
    %v1163 = vpack.c.b16 %v1043, %v1039
    %v1164 = vpack.c.b16 %v1044, %v1040
    %v1165 = vpack.c.b16 %v1045, %v1041
    %v1166 = vpack.c.b16 %v1050, %v1046
    %v1167 = vpack.c.b16 %v1051, %v1047
    %v1168 = vpack.c.b16 %v1052, %v1048
    %v1169 = vpack.c.b16 %v1053, %v1049
    %v1170 = vpack.c.b16 %v1058, %v1054
    %v1171 = vpack.c.b16 %v1059, %v1055
    %v1172 = vpack.c.b16 %v1060, %v1056
    %v1173 = vpack.c.b16 %v1061, %v1057
    %v1174 = vpack.c.b16 %v1066, %v1062
    %v1175 = vpack.c.b16 %v1067, %v1063
    %v1176 = vpack.c.b16 %v1068, %v1064
    %v1177 = vpack.c.b16 %v1069, %v1065
    %v1178 = vpack.c.b16 %v1074, %v1070
    %v1179 = vpack.c.b16 %v1075, %v1071
    %v1180 = vpack.c.b16 %v1076, %v1072
    %v1181 = vpack.c.b16 %v1077, %v1073
    %v1182 = vpack.c.b16 %v1082, %v1078
    %v1183 = vpack.c.b16 %v1083, %v1079
    %v1184 = vpack.c.b16 %v1084, %v1080
    %v1185 = vpack.c.b16 %v1085, %v1081
    %v1186 = vpack.c.b16 %v1090, %v1086
    %v1187 = vpack.c.b16 %v1091, %v1087
    %v1188 = vpack.c.b16 %v1092, %v1088
    %v1189 = vpack.c.b16 %v1093, %v1089
    %v1190 = vpack.c.b16 %v1098, %v1094
    %v1191 = vpack.c.b16 %v1099, %v1095
    %v1192 = vpack.c.b16 %v1100, %v1096
    %v1193 = vpack.c.b16 %v1101, %v1097
    %v1194 = vpack.c.b16 %v1106, %v1102
    %v1195 = vpack.c.b16 %v1107, %v1103
    %v1196 = vpack.c.b16 %v1108, %v1104
    %v1197 = vpack.c.b16 %v1109, %v1105
    %v1198 = vpack.c.b16 %v1114, %v1110
    %v1199 = vpack.c.b16 %v1115, %v1111
    %v1200 = vpack.c.b16 %v1116, %v1112
    %v1201 = vpack.c.b16 %v1117, %v1113
    %v1202 = vpack.c.b16 %v1122, %v1118
    %v1203 = vpack.c.b16 %v1123, %v1119
    %v1204 = vpack.c.b16 %v1124, %v1120
    %v1205 = vpack.c.b16 %v1125, %v1121
    %v1206 = vpack.c.b16 %v1130, %v1126
    %v1207 = vpack.c.b16 %v1131, %v1127
    %v1208 = vpack.c.b16 %v1132, %v1128
    %v1209 = vpack.c.b16 %v1133, %v1129
    %v1210 = vpack.c.b16 %v1138, %v1134
    %v1211 = vpack.c.b16 %v1139, %v1135
    %v1212 = vpack.c.b16 %v1140, %v1136
    %v1213 = vpack.c.b16 %v1141, %v1137
    %v1214 = vpack.c.b16 %v1146, %v1142
    %v1215 = vpack.c.b16 %v1147, %v1143
    %v1216 = vpack.c.b16 %v1148, %v1144
    %v1217 = vpack.c.b16 %v1149, %v1145
    %v1218 = vpack.c.b16 %v1154, %v1150
    %v1219 = vpack.c.b16 %v1155, %v1151
    %v1220 = vpack.c.b16 %v1156, %v1152
    %v1221 = vpack.c.b16 %v1157, %v1153
    %1286 = vmatprep.subr.bf16.mxu0 %v1159
    %1287 = vmatpush1.bf16.msra.mxu0 %v1158
    %1288 = vmatprep.subr.bf16.mxu0 %v1163
    %1289 = vmatpush1.bf16.msra.mxu0 %v1162
    %1290 = vmatprep.subr.bf16.mxu0 %v1167
    %1291 = vmatpush1.bf16.msra.mxu0 %v1166
    %1292 = vmatprep.subr.bf16.mxu0 %v1171
    %1293 = vmatpush1.bf16.msra.mxu0 %v1170
    %1294 = vmatprep.subr.bf16.mxu0 %v1175
    %1295 = vmatpush1.bf16.msra.mxu0 %v1174
    %1296 = vmatprep.subr.bf16.mxu0 %v1179
    %1297 = vmatpush1.bf16.msra.mxu0 %v1178
    %1298 = vmatprep.subr.bf16.mxu0 %v1183
    %1299 = vmatpush1.bf16.msra.mxu0 %v1182
    %1300 = vmatprep.subr.bf16.mxu0 %v1187
    %1301 = vmatpush1.bf16.msra.mxu0 %v1186
    %1302 = vmatprep.subr.bf16.mxu0 %v1191
    %1303 = vmatpush1.bf16.msra.mxu0 %v1190
    %1304 = vmatprep.subr.bf16.mxu0 %v1195
    %1305 = vmatpush1.bf16.msra.mxu0 %v1194
    %1306 = vmatprep.subr.bf16.mxu0 %v1199
    %1307 = vmatpush1.bf16.msra.mxu0 %v1198
    %1308 = vmatprep.subr.bf16.mxu0 %v1203
    %1309 = vmatpush1.bf16.msra.mxu0 %v1202
    %1310 = vmatprep.subr.bf16.mxu0 %v1207
    %1311 = vmatpush1.bf16.msra.mxu0 %v1206
    %1312 = vmatprep.subr.bf16.mxu0 %v1211
    %1313 = vmatpush1.bf16.msra.mxu0 %v1210
    %1314 = vmatprep.subr.bf16.mxu0 %v1215
    %1315 = vmatpush1.bf16.msra.mxu0 %v1214
    %1316 = vmatprep.subr.bf16.mxu0 %v1219
    %1317 = vmatpush1.bf16.msra.mxu0 %v1218
    %1318 = vmatprep.mubr.bf16.mxu0 %v963
    %1319 = vmatmul.mubr.bf16.gmra.mrb[0].mxu0 %v962
    %v1320 = vpop.f32.mrb[0].mxu0
    %v1321 = vadd.f32 0.0, %v1320
    %v1322 = vpop.f32.mrb[0].mxu0
    %v1323 = vadd.f32 0.0, %v1322
    %v1324 = vpop.f32.mrb[0].mxu0
    %v1325 = vpop.f32.mrb[0].mxu0
    %1326 = vdwg.mxu0
    %1327 = vmatprep.subr.bf16.mxu0 %v1161
    %1328 = vmatpush1.bf16.msra.mxu0 %v1160
    %1329 = vmatprep.subr.bf16.mxu0 %v1165
    %1330 = vmatpush1.bf16.msra.mxu0 %v1164
    %1331 = vmatprep.subr.bf16.mxu0 %v1169
    %1332 = vmatpush1.bf16.msra.mxu0 %v1168
    %1333 = vmatprep.subr.bf16.mxu0 %v1173
    %1334 = vmatpush1.bf16.msra.mxu0 %v1172
    %1335 = vmatprep.subr.bf16.mxu0 %v1177
    %1336 = vmatpush1.bf16.msra.mxu0 %v1176
    %1337 = vmatprep.subr.bf16.mxu0 %v1181
    %1338 = vmatpush1.bf16.msra.mxu0 %v1180
    %1339 = vmatprep.subr.bf16.mxu0 %v1185
    %1340 = vmatpush1.bf16.msra.mxu0 %v1184
    %1341 = vmatprep.subr.bf16.mxu0 %v1189
    %1342 = vmatpush1.bf16.msra.mxu0 %v1188
    %1343 = vmatprep.subr.bf16.mxu0 %v1193
    %1344 = vmatpush1.bf16.msra.mxu0 %v1192
    %1345 = vmatprep.subr.bf16.mxu0 %v1197
    %1346 = vmatpush1.bf16.msra.mxu0 %v1196
    %1347 = vmatprep.subr.bf16.mxu0 %v1201
    %1348 = vmatpush1.bf16.msra.mxu0 %v1200
    %1349 = vmatprep.subr.bf16.mxu0 %v1205
    %1350 = vmatpush1.bf16.msra.mxu0 %v1204
    %1351 = vmatprep.subr.bf16.mxu0 %v1209
    %1352 = vmatpush1.bf16.msra.mxu0 %v1208
    %1353 = vmatprep.subr.bf16.mxu0 %v1213
    %1354 = vmatpush1.bf16.msra.mxu0 %v1212
    %1355 = vmatprep.subr.bf16.mxu0 %v1217
    %1356 = vmatpush1.bf16.msra.mxu0 %v1216
    %1357 = vmatprep.subr.bf16.mxu0 %v1221
    %1358 = vmatpush1.bf16.msra.mxu0 %v1220
    %1359 = vmatprep.mubr.bf16.mxu0 %v963
    %1360 = vmatmul.mubr.bf16.gmra.mrb[0].mxu0 %v962
    %v1361 = vpop.f32.mrb[0].mxu0
    %v1362 = vadd.f32 0.0, %v1361
    %v1363 = vpop.f32.mrb[0].mxu0
    %v1364 = vadd.f32 0.0, %v1363
    %v1365 = vpop.f32.mrb[0].mxu0
    %v1366 = vpop.f32.mrb[0].mxu0
    %1367 = vdwg.mxu0
    %v1368 = vld [vmem:[#allocation10] sm:$0xff]
    %v1369 = vld [vmem:[#allocation10 + $0x8] sm:$0xff]
    %v1370 = vld [vmem:[#allocation10 + $0x10] sm:$0xff]
    %v1371 = vld [vmem:[#allocation10 + $0x18] sm:$0xff]
    %v1372 = vld [vmem:[#allocation10 + $0x20] sm:$0xff]
    %v1373 = vld [vmem:[#allocation10 + $0x28] sm:$0xff]
    %v1374 = vld [vmem:[#allocation10 + $0x30] sm:$0xff]
    %v1375 = vld [vmem:[#allocation10 + $0x38] sm:$0xff]
    %v1376 = vld [vmem:[#allocation10 + $0x40] sm:$0xff]
    %v1377 = vld [vmem:[#allocation10 + $0x48] sm:$0xff]
    %v1378 = vld [vmem:[#allocation10 + $0x50] sm:$0xff]
    %v1379 = vld [vmem:[#allocation10 + $0x58] sm:$0xff]
    %v1380 = vld [vmem:[#allocation10 + $0x60] sm:$0xff]
    %v1381 = vld [vmem:[#allocation10 + $0x68] sm:$0xff]
    %v1382 = vld [vmem:[#allocation10 + $0x70] sm:$0xff]
    %v1383 = vld [vmem:[#allocation10 + $0x78] sm:$0xff]
    %v1384 = vld [vmem:[#allocation10 + $0x80] sm:$0xff]
    %v1385 = vld [vmem:[#allocation10 + $0x88] sm:$0xff]
    %v1386 = vld [vmem:[#allocation10 + $0x90] sm:$0xff]
    %v1387 = vld [vmem:[#allocation10 + $0x98] sm:$0xff]
    %v1388 = vld [vmem:[#allocation10 + $0xa0] sm:$0xff]
    %v1389 = vld [vmem:[#allocation10 + $0xa8] sm:$0xff]
    %v1390 = vld [vmem:[#allocation10 + $0xb0] sm:$0xff]
    %v1391 = vld [vmem:[#allocation10 + $0xb8] sm:$0xff]
    %v1392 = vld [vmem:[#allocation10 + $0xc0] sm:$0xff]
    %v1393 = vld [vmem:[#allocation10 + $0xc8] sm:$0xff]
    %v1394 = vld [vmem:[#allocation10 + $0xd0] sm:$0xff]
    %v1395 = vld [vmem:[#allocation10 + $0xd8] sm:$0xff]
    %v1396 = vld [vmem:[#allocation10 + $0xe0] sm:$0xff]
    %v1397 = vld [vmem:[#allocation10 + $0xe8] sm:$0xff]
    %v1398 = vld [vmem:[#allocation10 + $0xf0] sm:$0xff]
    %v1399 = vld [vmem:[#allocation10 + $0xf8] sm:$0xff]
    %v1432 = vunpack.c.l.b16 %v1368
    %v1433 = vunpack.c.h.b16 %v1368
    %v1434 = vunpack.c.l.b16 %v1369
    %v1435 = vunpack.c.h.b16 %v1369
    %v1436 = vunpack.c.l.b16 %v1370
    %v1437 = vunpack.c.h.b16 %v1370
    %v1438 = vunpack.c.l.b16 %v1371
    %v1439 = vunpack.c.h.b16 %v1371
    %v1440 = vunpack.c.l.b16 %v1372
    %v1441 = vunpack.c.h.b16 %v1372
    %v1442 = vunpack.c.l.b16 %v1373
    %v1443 = vunpack.c.h.b16 %v1373
    %v1444 = vunpack.c.l.b16 %v1374
    %v1445 = vunpack.c.h.b16 %v1374
    %v1446 = vunpack.c.l.b16 %v1375
    %v1447 = vunpack.c.h.b16 %v1375
    %v1448 = vunpack.c.l.b16 %v1376
    %v1449 = vunpack.c.h.b16 %v1376
    %v1450 = vunpack.c.l.b16 %v1377
    %v1451 = vunpack.c.h.b16 %v1377
    %v1452 = vunpack.c.l.b16 %v1378
    %v1453 = vunpack.c.h.b16 %v1378
    %v1454 = vunpack.c.l.b16 %v1379
    %v1455 = vunpack.c.h.b16 %v1379
    %v1456 = vunpack.c.l.b16 %v1380
    %v1457 = vunpack.c.h.b16 %v1380
    %v1458 = vunpack.c.l.b16 %v1381
    %v1459 = vunpack.c.h.b16 %v1381
    %v1460 = vunpack.c.l.b16 %v1382
    %v1461 = vunpack.c.h.b16 %v1382
    %v1462 = vunpack.c.l.b16 %v1383
    %v1463 = vunpack.c.h.b16 %v1383
    %v1464 = vunpack.c.l.b16 %v1384
    %v1465 = vunpack.c.h.b16 %v1384
    %v1466 = vunpack.c.l.b16 %v1385
    %v1467 = vunpack.c.h.b16 %v1385
    %v1468 = vunpack.c.l.b16 %v1386
    %v1469 = vunpack.c.h.b16 %v1386
    %v1470 = vunpack.c.l.b16 %v1387
    %v1471 = vunpack.c.h.b16 %v1387
    %v1472 = vunpack.c.l.b16 %v1388
    %v1473 = vunpack.c.h.b16 %v1388
    %v1474 = vunpack.c.l.b16 %v1389
    %v1475 = vunpack.c.h.b16 %v1389
    %v1476 = vunpack.c.l.b16 %v1390
    %v1477 = vunpack.c.h.b16 %v1390
    %v1478 = vunpack.c.l.b16 %v1391
    %v1479 = vunpack.c.h.b16 %v1391
    %v1480 = vunpack.c.l.b16 %v1392
    %v1481 = vunpack.c.h.b16 %v1392
    %v1482 = vunpack.c.l.b16 %v1393
    %v1483 = vunpack.c.h.b16 %v1393
    %v1484 = vunpack.c.l.b16 %v1394
    %v1485 = vunpack.c.h.b16 %v1394
    %v1486 = vunpack.c.l.b16 %v1395
    %v1487 = vunpack.c.h.b16 %v1395
    %v1488 = vunpack.c.l.b16 %v1396
    %v1489 = vunpack.c.h.b16 %v1396
    %v1490 = vunpack.c.l.b16 %v1397
    %v1491 = vunpack.c.h.b16 %v1397
    %v1492 = vunpack.c.l.b16 %v1398
    %v1493 = vunpack.c.h.b16 %v1398
    %v1494 = vunpack.c.l.b16 %v1399
    %v1495 = vunpack.c.h.b16 %v1399
    %v1496 = vpack.c.b16 %v1436, %v1432
    %v1497 = vpack.c.b16 %v1437, %v1433
    %v1498 = vpack.c.b16 %v1438, %v1434
    %v1499 = vpack.c.b16 %v1439, %v1435
    %v1500 = vpack.c.b16 %v1444, %v1440
    %v1501 = vpack.c.b16 %v1445, %v1441
    %v1502 = vpack.c.b16 %v1446, %v1442
    %v1503 = vpack.c.b16 %v1447, %v1443
    %v1504 = vpack.c.b16 %v1452, %v1448
    %v1505 = vpack.c.b16 %v1453, %v1449
    %v1506 = vpack.c.b16 %v1454, %v1450
    %v1507 = vpack.c.b16 %v1455, %v1451
    %v1508 = vpack.c.b16 %v1460, %v1456
    %v1509 = vpack.c.b16 %v1461, %v1457
    %v1510 = vpack.c.b16 %v1462, %v1458
    %v1511 = vpack.c.b16 %v1463, %v1459
    %v1512 = vpack.c.b16 %v1468, %v1464
    %v1513 = vpack.c.b16 %v1469, %v1465
    %v1514 = vpack.c.b16 %v1470, %v1466
    %v1515 = vpack.c.b16 %v1471, %v1467
    %v1516 = vpack.c.b16 %v1476, %v1472
    %v1517 = vpack.c.b16 %v1477, %v1473
    %v1518 = vpack.c.b16 %v1478, %v1474
    %v1519 = vpack.c.b16 %v1479, %v1475
    %v1520 = vpack.c.b16 %v1484, %v1480
    %v1521 = vpack.c.b16 %v1485, %v1481
    %v1522 = vpack.c.b16 %v1486, %v1482
    %v1523 = vpack.c.b16 %v1487, %v1483
    %v1524 = vpack.c.b16 %v1492, %v1488
    %v1525 = vpack.c.b16 %v1493, %v1489
    %v1526 = vpack.c.b16 %v1494, %v1490
    %v1527 = vpack.c.b16 %v1495, %v1491
    %1560 = vmatprep.subr.bf16.mxu0 %v1497
    %1561 = vmatpush1.bf16.msra.mxu0 %v1496
    %1562 = vmatprep.subr.bf16.mxu0 %v1501
    %1563 = vmatpush1.bf16.msra.mxu0 %v1500
    %1564 = vmatprep.subr.bf16.mxu0 %v1505
    %1565 = vmatpush1.bf16.msra.mxu0 %v1504
    %1566 = vmatprep.subr.bf16.mxu0 %v1509
    %1567 = vmatpush1.bf16.msra.mxu0 %v1508
    %1568 = vmatprep.subr.bf16.mxu0 %v1513
    %1569 = vmatpush1.bf16.msra.mxu0 %v1512
    %1570 = vmatprep.subr.bf16.mxu0 %v1517
    %1571 = vmatpush1.bf16.msra.mxu0 %v1516
    %1572 = vmatprep.subr.bf16.mxu0 %v1521
    %1573 = vmatpush1.bf16.msra.mxu0 %v1520
    %1574 = vmatprep.subr.bf16.mxu0 %v1525
    %1575 = vmatpush1.bf16.msra.mxu0 %v1524
    %1576 = vmatprep.subr.bf16.mxu0 0
    %1577 = vmatpush1.bf16.msra.mxu0 0
    %1578 = vmatprep.subr.bf16.mxu0 0
    %1579 = vmatpush1.bf16.msra.mxu0 0
    %1580 = vmatprep.subr.bf16.mxu0 0
    %1581 = vmatpush1.bf16.msra.mxu0 0
    %1582 = vmatprep.subr.bf16.mxu0 0
    %1583 = vmatpush1.bf16.msra.mxu0 0
    %1584 = vmatprep.subr.bf16.mxu0 0
    %1585 = vmatpush1.bf16.msra.mxu0 0
    %1586 = vmatprep.subr.bf16.mxu0 0
    %1587 = vmatpush1.bf16.msra.mxu0 0
    %1588 = vmatprep.subr.bf16.mxu0 0
    %1589 = vmatpush1.bf16.msra.mxu0 0
    %1590 = vmatprep.subr.bf16.mxu0 0
    %1591 = vmatpush1.bf16.msra.mxu0 0
    %1592 = vmatprep.mubr.bf16.mxu0 0
    %1593 = vmatmul.mubr.bf16.gmra.mrb[0].mxu0 %v488
    %v1594 = vpop.f32.mrb[0].mxu0
    %v1595 = vadd.f32 0.0, %v1594
    %v1596 = vpop.f32.mrb[0].mxu0
    %v1597 = vadd.f32 0.0, %v1596
    %v1598 = vpop.f32.mrb[0].mxu0
    %v1599 = vadd.f32 0.0, %v1598
    %v1600 = vpop.f32.mrb[0].mxu0
    %v1601 = vadd.f32 0.0, %v1600
    %1602 = vmatprep.mubr.bf16.mxu0 0
    %1603 = vmatmul.mubr.bf16.gmra.mrb[0].mxu0 %v489
    %v1604 = vpop.f32.mrb[0].mxu0
    %v1605 = vadd.f32 0.0, %v1604
    %v1606 = vpop.f32.mrb[0].mxu0
    %v1607 = vadd.f32 0.0, %v1606
    %v1608 = vpop.f32.mrb[0].mxu0
    %v1609 = vadd.f32 0.0, %v1608
    %v1610 = vpop.f32.mrb[0].mxu0
    %v1611 = vadd.f32 0.0, %v1610
    %1612 = vmatprep.mubr.bf16.mxu0 0
    %1613 = vmatmul.mubr.bf16.gmra.mrb[0].mxu0 %v490
    %v1614 = vpop.f32.mrb[0].mxu0
    %v1615 = vadd.f32 0.0, %v1614
    %v1616 = vpop.f32.mrb[0].mxu0
    %v1617 = vadd.f32 0.0, %v1616
    %v1618 = vpop.f32.mrb[0].mxu0
    %v1619 = vadd.f32 0.0, %v1618
    %v1620 = vpop.f32.mrb[0].mxu0
    %v1621 = vadd.f32 0.0, %v1620
    %1622 = vmatprep.mubr.bf16.mxu0 0
    %1623 = vmatmul.mubr.bf16.gmra.mrb[0].mxu0 %v491
    %v1624 = vpop.f32.mrb[0].mxu0
    %v1625 = vadd.f32 0.0, %v1624
    %v1626 = vpop.f32.mrb[0].mxu0
    %v1627 = vadd.f32 0.0, %v1626
    %v1628 = vpop.f32.mrb[0].mxu0
    %v1629 = vadd.f32 0.0, %v1628
    %v1630 = vpop.f32.mrb[0].mxu0
    %v1631 = vadd.f32 0.0, %v1630
    %1632 = vmatprep.mubr.bf16.mxu0 0
    %1633 = vmatmul.mubr.bf16.gmra.mrb[0].mxu0 %v492
    %v1634 = vpop.f32.mrb[0].mxu0
    %v1635 = vadd.f32 0.0, %v1634
    %v1636 = vpop.f32.mrb[0].mxu0
    %v1637 = vadd.f32 0.0, %v1636
    %v1638 = vpop.f32.mrb[0].mxu0
    %v1639 = vadd.f32 0.0, %v1638
    %v1640 = vpop.f32.mrb[0].mxu0
    %v1641 = vadd.f32 0.0, %v1640
    %1642 = vmatprep.mubr.bf16.mxu0 0
    %1643 = vmatmul.mubr.bf16.gmra.mrb[0].mxu0 %v493
    %v1644 = vpop.f32.mrb[0].mxu0
    %v1645 = vadd.f32 0.0, %v1644
    %v1646 = vpop.f32.mrb[0].mxu0
    %v1647 = vadd.f32 0.0, %v1646
    %v1648 = vpop.f32.mrb[0].mxu0
    %v1649 = vadd.f32 0.0, %v1648
    %v1650 = vpop.f32.mrb[0].mxu0
    %v1651 = vadd.f32 0.0, %v1650
    %1652 = vmatprep.mubr.bf16.mxu0 0
    %1653 = vmatmul.mubr.bf16.gmra.mrb[0].mxu0 %v494
    %v1654 = vpop.f32.mrb[0].mxu0
    %v1655 = vadd.f32 0.0, %v1654
    %v1656 = vpop.f32.mrb[0].mxu0
    %v1657 = vadd.f32 0.0, %v1656
    %v1658 = vpop.f32.mrb[0].mxu0
    %v1659 = vadd.f32 0.0, %v1658
    %v1660 = vpop.f32.mrb[0].mxu0
    %v1661 = vadd.f32 0.0, %v1660
    %1662 = vmatprep.mubr.bf16.mxu0 0
    %1663 = vmatmul.mubr.bf16.gmra.mrb[0].mxu0 %v495
    %v1664 = vpop.f32.mrb[0].mxu0
    %v1665 = vadd.f32 0.0, %v1664
    %v1666 = vpop.f32.mrb[0].mxu0
    %v1667 = vadd.f32 0.0, %v1666
    %v1668 = vpop.f32.mrb[0].mxu0
    %v1669 = vadd.f32 0.0, %v1668
    %v1670 = vpop.f32.mrb[0].mxu0
    %v1671 = vadd.f32 0.0, %v1670
    %1672 = vdwg.mxu0
    %1673 = vmatprep.subr.bf16.mxu0 %v1499
    %1674 = vmatpush1.bf16.msra.mxu0 %v1498
    %1675 = vmatprep.subr.bf16.mxu0 %v1503
    %1676 = vmatpush1.bf16.msra.mxu0 %v1502
    %1677 = vmatprep.subr.bf16.mxu0 %v1507
    %1678 = vmatpush1.bf16.msra.mxu0 %v1506
    %1679 = vmatprep.subr.bf16.mxu0 %v1511
    %1680 = vmatpush1.bf16.msra.mxu0 %v1510
    %1681 = vmatprep.subr.bf16.mxu0 %v1515
    %1682 = vmatpush1.bf16.msra.mxu0 %v1514
    %1683 = vmatprep.subr.bf16.mxu0 %v1519
    %1684 = vmatpush1.bf16.msra.mxu0 %v1518
    %1685 = vmatprep.subr.bf16.mxu0 %v1523
    %1686 = vmatpush1.bf16.msra.mxu0 %v1522
    %1687 = vmatprep.subr.bf16.mxu0 %v1527
    %1688 = vmatpush1.bf16.msra.mxu0 %v1526
    %1689 = vmatprep.subr.bf16.mxu0 0
    %1690 = vmatpush1.bf16.msra.mxu0 0
    %1691 = vmatprep.subr.bf16.mxu0 0
    %1692 = vmatpush1.bf16.msra.mxu0 0
    %1693 = vmatprep.subr.bf16.mxu0 0
    %1694 = vmatpush1.bf16.msra.mxu0 0
    %1695 = vmatprep.subr.bf16.mxu0 0
    %1696 = vmatpush1.bf16.msra.mxu0 0
    %1697 = vmatprep.subr.bf16.mxu0 0
    %1698 = vmatpush1.bf16.msra.mxu0 0
    %1699 = vmatprep.subr.bf16.mxu0 0
    %1700 = vmatpush1.bf16.msra.mxu0 0
    %1701 = vmatprep.subr.bf16.mxu0 0
    %1702 = vmatpush1.bf16.msra.mxu0 0
    %1703 = vmatprep.subr.bf16.mxu0 0
    %1704 = vmatpush1.bf16.msra.mxu0 0
    %1705 = vmatprep.mubr.bf16.mxu0 0
    %1706 = vmatmul.mubr.bf16.gmra.mrb[0].mxu0 %v488
    %v1707 = vpop.f32.mrb[0].mxu0
    %v1708 = vadd.f32 0.0, %v1707
    %v1709 = vpop.f32.mrb[0].mxu0
    %v1710 = vadd.f32 0.0, %v1709
    %v1711 = vpop.f32.mrb[0].mxu0
    %v1712 = vadd.f32 0.0, %v1711
    %v1713 = vpop.f32.mrb[0].mxu0
    %v1714 = vadd.f32 0.0, %v1713
    %1715 = vmatprep.mubr.bf16.mxu0 0
    %1716 = vmatmul.mubr.bf16.gmra.mrb[0].mxu0 %v489
    %v1717 = vpop.f32.mrb[0].mxu0
    %v1718 = vadd.f32 0.0, %v1717
    %v1719 = vpop.f32.mrb[0].mxu0
    %v1720 = vadd.f32 0.0, %v1719
    %v1721 = vpop.f32.mrb[0].mxu0
    %v1722 = vadd.f32 0.0, %v1721
    %v1723 = vpop.f32.mrb[0].mxu0
    %v1724 = vadd.f32 0.0, %v1723
    %1725 = vmatprep.mubr.bf16.mxu0 0
    %1726 = vmatmul.mubr.bf16.gmra.mrb[0].mxu0 %v490
    %v1727 = vpop.f32.mrb[0].mxu0
    %v1728 = vadd.f32 0.0, %v1727
    %v1729 = vpop.f32.mrb[0].mxu0
    %v1730 = vadd.f32 0.0, %v1729
    %v1731 = vpop.f32.mrb[0].mxu0
    %v1732 = vadd.f32 0.0, %v1731
    %v1733 = vpop.f32.mrb[0].mxu0
    %v1734 = vadd.f32 0.0, %v1733
    %1735 = vmatprep.mubr.bf16.mxu0 0
    %1736 = vmatmul.mubr.bf16.gmra.mrb[0].mxu0 %v491
    %v1737 = vpop.f32.mrb[0].mxu0
    %v1738 = vadd.f32 0.0, %v1737
    %v1739 = vpop.f32.mrb[0].mxu0
    %v1740 = vadd.f32 0.0, %v1739
    %v1741 = vpop.f32.mrb[0].mxu0
    %v1742 = vadd.f32 0.0, %v1741
    %v1743 = vpop.f32.mrb[0].mxu0
    %v1744 = vadd.f32 0.0, %v1743
    %1745 = vmatprep.mubr.bf16.mxu0 0
    %1746 = vmatmul.mubr.bf16.gmra.mrb[0].mxu0 %v492
    %v1747 = vpop.f32.mrb[0].mxu0
    %v1748 = vadd.f32 0.0, %v1747
    %v1749 = vpop.f32.mrb[0].mxu0
    %v1750 = vadd.f32 0.0, %v1749
    %v1751 = vpop.f32.mrb[0].mxu0
    %v1752 = vadd.f32 0.0, %v1751
    %v1753 = vpop.f32.mrb[0].mxu0
    %v1754 = vadd.f32 0.0, %v1753
    %1755 = vmatprep.mubr.bf16.mxu0 0
    %1756 = vmatmul.mubr.bf16.gmra.mrb[0].mxu0 %v493
    %v1757 = vpop.f32.mrb[0].mxu0
    %v1758 = vadd.f32 0.0, %v1757
    %v1759 = vpop.f32.mrb[0].mxu0
    %v1760 = vadd.f32 0.0, %v1759
    %v1761 = vpop.f32.mrb[0].mxu0
    %v1762 = vadd.f32 0.0, %v1761
    %v1763 = vpop.f32.mrb[0].mxu0
    %v1764 = vadd.f32 0.0, %v1763
    %1765 = vmatprep.mubr.bf16.mxu0 0
    %1766 = vmatmul.mubr.bf16.gmra.mrb[0].mxu0 %v494
    %v1767 = vpop.f32.mrb[0].mxu0
    %v1768 = vadd.f32 0.0, %v1767
    %v1769 = vpop.f32.mrb[0].mxu0
    %v1770 = vadd.f32 0.0, %v1769
    %v1771 = vpop.f32.mrb[0].mxu0
    %v1772 = vadd.f32 0.0, %v1771
    %v1773 = vpop.f32.mrb[0].mxu0
    %v1774 = vadd.f32 0.0, %v1773
    %1775 = vmatprep.mubr.bf16.mxu0 0
    %1776 = vmatmul.mubr.bf16.gmra.mrb[0].mxu0 %v495
    %v1777 = vpop.f32.mrb[0].mxu0
    %v1778 = vadd.f32 0.0, %v1777
    %v1779 = vpop.f32.mrb[0].mxu0
    %v1780 = vadd.f32 0.0, %v1779
    %v1781 = vpop.f32.mrb[0].mxu0
    %v1782 = vadd.f32 0.0, %v1781
    %v1783 = vpop.f32.mrb[0].mxu0
    %v1784 = vadd.f32 0.0, %v1783
    %1785 = vdwg.mxu0
    %v1790 = vcombine.low %v1321, %v1323
    %v1791 = vcombine.high %v1321, %v1323
    %v1792 = vcombine.low %v1362, %v1364
    %v1793 = vcombine.high %v1362, %v1364
    %v1795 = vunpack.c.l.s4 1966171168
    %v1796 = vunpack.c.0.s8 %v1795
    %v1797 = vlaneseq
    %v1798 = vshrl.u32 %v1797, 7
    %v1799 = vsub.s32 %v1796, %v1798
    %v1800 = vrot.slane %v1790, %v1799
    %v1802 = vunpack.c.l.s4 1966171168
    %v1803 = vunpack.c.0.s8 %v1802
    %v1804 = vlaneseq
    %v1805 = vshrl.u32 %v1804, 7
    %v1806 = vsub.s32 %v1803, %v1805
    %v1807 = vrot.slane %v1791, %v1806
    %v1809 = vunpack.c.l.s4 1966171168
    %v1810 = vunpack.c.0.s8 %v1809
    %v1811 = vlaneseq
    %v1812 = vshrl.u32 %v1811, 7
    %v1813 = vsub.s32 %v1810, %v1812
    %v1814 = vrot.slane %v1792, %v1813
    %v1816 = vunpack.c.l.s4 1966171168
    %v1817 = vunpack.c.0.s8 %v1816
    %v1818 = vlaneseq
    %v1819 = vshrl.u32 %v1818, 7
    %v1820 = vsub.s32 %v1817, %v1819
    %v1821 = vrot.slane %v1793, %v1820
    %v1822 = vcombine.low %v1800, %v1814
    %v1823 = vcombine.high %v1800, %v1814
    %v1824 = vcombine.low %v1807, %v1821
    %v1825 = vcombine.high %v1807, %v1821
    %v1827 = vunpack.c.l.s4 1966171168
    %v1828 = vunpack.c.0.s8 %v1827
    %v1829 = vlaneseq
    %v1830 = vshrl.u32 %v1829, 7
    %v1831 = vsub.s32 %v1828, %v1830
    %v1832 = vrot.slane %v1822, %v1831
    %v1834 = vunpack.c.l.s4 1966171168
    %v1835 = vunpack.c.0.s8 %v1834
    %v1836 = vlaneseq
    %v1837 = vshrl.u32 %v1836, 7
    %v1838 = vsub.s32 %v1835, %v1837
    %v1839 = vrot.slane %v1824, %v1838
    %v1841 = vunpack.c.l.s4 1966171168
    %v1842 = vunpack.c.0.s8 %v1841
    %v1843 = vlaneseq
    %v1844 = vshrl.u32 %v1843, 7
    %v1845 = vsub.s32 %v1842, %v1844
    %v1846 = vrot.slane %v1823, %v1845
    %v1848 = vunpack.c.l.s4 1966171168
    %v1849 = vunpack.c.0.s8 %v1848
    %v1850 = vlaneseq
    %v1851 = vshrl.u32 %v1850, 7
    %v1852 = vsub.s32 %v1849, %v1851
    %v1853 = vrot.slane %v1825, %v1852
    %v1854 = vcombine.high %v1832, %v1832
    %v1855 = vcombine.high %v1839, %v1839
    %v1856 = vcombine.high %v1846, %v1846
    %v1857 = vcombine.high %v1853, %v1853
    %v1858 = vlaneseq
    %v1859 = vshrl.u32 %v1858, 7
    %v1860 = vsub.s32 0, %v1859
    %v1861 = vrot.slane %v1832, %v1860
    %v1862 = vlaneseq
    %v1863 = vshrl.u32 %v1862, 7
    %v1864 = vsub.s32 1, %v1863
    %v1865 = vrot.slane %v1832, %v1864
    %v1866 = vlaneseq
    %v1867 = vshrl.u32 %v1866, 7
    %v1868 = vsub.s32 2, %v1867
    %v1869 = vrot.slane %v1832, %v1868
    %v1870 = vlaneseq
    %v1871 = vshrl.u32 %v1870, 7
    %v1872 = vsub.s32 3, %v1871
    %v1873 = vrot.slane %v1832, %v1872
    %v1874 = vlaneseq
    %v1875 = vshrl.u32 %v1874, 7
    %v1876 = vsub.s32 0, %v1875
    %v1877 = vrot.slane %v1846, %v1876
    %v1878 = vlaneseq
    %v1879 = vshrl.u32 %v1878, 7
    %v1880 = vsub.s32 1, %v1879
    %v1881 = vrot.slane %v1846, %v1880
    %v1882 = vlaneseq
    %v1883 = vshrl.u32 %v1882, 7
    %v1884 = vsub.s32 2, %v1883
    %v1885 = vrot.slane %v1846, %v1884
    %v1886 = vlaneseq
    %v1887 = vshrl.u32 %v1886, 7
    %v1888 = vsub.s32 3, %v1887
    %v1889 = vrot.slane %v1846, %v1888
    %v1890 = vlaneseq
    %v1891 = vshrl.u32 %v1890, 7
    %v1892 = vsub.s32 0, %v1891
    %v1893 = vrot.slane %v1854, %v1892
    %v1894 = vlaneseq
    %v1895 = vshrl.u32 %v1894, 7
    %v1896 = vsub.s32 1, %v1895
    %v1897 = vrot.slane %v1854, %v1896
    %v1898 = vlaneseq
    %v1899 = vshrl.u32 %v1898, 7
    %v1900 = vsub.s32 2, %v1899
    %v1901 = vrot.slane %v1854, %v1900
    %v1902 = vlaneseq
    %v1903 = vshrl.u32 %v1902, 7
    %v1904 = vsub.s32 3, %v1903
    %v1905 = vrot.slane %v1854, %v1904
    %v1906 = vlaneseq
    %v1907 = vshrl.u32 %v1906, 7
    %v1908 = vsub.s32 0, %v1907
    %v1909 = vrot.slane %v1856, %v1908
    %v1910 = vlaneseq
    %v1911 = vshrl.u32 %v1910, 7
    %v1912 = vsub.s32 1, %v1911
    %v1913 = vrot.slane %v1856, %v1912
    %v1914 = vlaneseq
    %v1915 = vshrl.u32 %v1914, 7
    %v1916 = vsub.s32 2, %v1915
    %v1917 = vrot.slane %v1856, %v1916
    %v1918 = vlaneseq
    %v1919 = vshrl.u32 %v1918, 7
    %v1920 = vsub.s32 3, %v1919
    %v1921 = vrot.slane %v1856, %v1920
    %v1922 = vlaneseq
    %v1923 = vshrl.u32 %v1922, 7
    %v1924 = vsub.s32 0, %v1923
    %v1925 = vrot.slane %v1839, %v1924
    %v1926 = vlaneseq
    %v1927 = vshrl.u32 %v1926, 7
    %v1928 = vsub.s32 1, %v1927
    %v1929 = vrot.slane %v1839, %v1928
    %v1930 = vlaneseq
    %v1931 = vshrl.u32 %v1930, 7
    %v1932 = vsub.s32 2, %v1931
    %v1933 = vrot.slane %v1839, %v1932
    %v1934 = vlaneseq
    %v1935 = vshrl.u32 %v1934, 7
    %v1936 = vsub.s32 3, %v1935
    %v1937 = vrot.slane %v1839, %v1936
    %v1938 = vlaneseq
    %v1939 = vshrl.u32 %v1938, 7
    %v1940 = vsub.s32 0, %v1939
    %v1941 = vrot.slane %v1853, %v1940
    %v1942 = vlaneseq
    %v1943 = vshrl.u32 %v1942, 7
    %v1944 = vsub.s32 1, %v1943
    %v1945 = vrot.slane %v1853, %v1944
    %v1946 = vlaneseq
    %v1947 = vshrl.u32 %v1946, 7
    %v1948 = vsub.s32 2, %v1947
    %v1949 = vrot.slane %v1853, %v1948
    %v1950 = vlaneseq
    %v1951 = vshrl.u32 %v1950, 7
    %v1952 = vsub.s32 3, %v1951
    %v1953 = vrot.slane %v1853, %v1952
    %v1954 = vlaneseq
    %v1955 = vshrl.u32 %v1954, 7
    %v1956 = vsub.s32 0, %v1955
    %v1957 = vrot.slane %v1855, %v1956
    %v1958 = vlaneseq
    %v1959 = vshrl.u32 %v1958, 7
    %v1960 = vsub.s32 1, %v1959
    %v1961 = vrot.slane %v1855, %v1960
    %v1962 = vlaneseq
    %v1963 = vshrl.u32 %v1962, 7
    %v1964 = vsub.s32 2, %v1963
    %v1965 = vrot.slane %v1855, %v1964
    %v1966 = vlaneseq
    %v1967 = vshrl.u32 %v1966, 7
    %v1968 = vsub.s32 3, %v1967
    %v1969 = vrot.slane %v1855, %v1968
    %v1970 = vlaneseq
    %v1971 = vshrl.u32 %v1970, 7
    %v1972 = vsub.s32 0, %v1971
    %v1973 = vrot.slane %v1857, %v1972
    %v1974 = vlaneseq
    %v1975 = vshrl.u32 %v1974, 7
    %v1976 = vsub.s32 1, %v1975
    %v1977 = vrot.slane %v1857, %v1976
    %v1978 = vlaneseq
    %v1979 = vshrl.u32 %v1978, 7
    %v1980 = vsub.s32 2, %v1979
    %v1981 = vrot.slane %v1857, %v1980
    %v1982 = vlaneseq
    %v1983 = vshrl.u32 %v1982, 7
    %v1984 = vsub.s32 3, %v1983
    %v1985 = vrot.slane %v1857, %v1984
    %v2018 = vadd.f32 %v1595, %v1861
    %v2019 = vadd.f32 %v1597, %v1865
    %v2020 = vadd.f32 %v1708, %v1869
    %v2021 = vadd.f32 %v1710, %v1873
    %v2022 = vadd.f32 %v1599, %v1861
    %v2023 = vadd.f32 %v1601, %v1865
    %v2024 = vadd.f32 %v1712, %v1869
    %v2025 = vadd.f32 %v1714, %v1873
    %v2026 = vadd.f32 %v1605, %v1877
    %v2027 = vadd.f32 %v1607, %v1881
    %v2028 = vadd.f32 %v1718, %v1885
    %v2029 = vadd.f32 %v1720, %v1889
    %v2030 = vadd.f32 %v1609, %v1877
    %v2031 = vadd.f32 %v1611, %v1881
    %v2032 = vadd.f32 %v1722, %v1885
    %v2033 = vadd.f32 %v1724, %v1889
    %v2034 = vadd.f32 %v1615, %v1893
    %v2035 = vadd.f32 %v1617, %v1897
    %v2036 = vadd.f32 %v1728, %v1901
    %v2037 = vadd.f32 %v1730, %v1905
    %v2038 = vadd.f32 %v1619, %v1893
    %v2039 = vadd.f32 %v1621, %v1897
    %v2040 = vadd.f32 %v1732, %v1901
    %v2041 = vadd.f32 %v1734, %v1905
    %v2042 = vadd.f32 %v1625, %v1909
    %v2043 = vadd.f32 %v1627, %v1913
    %v2044 = vadd.f32 %v1738, %v1917
    %v2045 = vadd.f32 %v1740, %v1921
    %v2046 = vadd.f32 %v1629, %v1909
    %v2047 = vadd.f32 %v1631, %v1913
    %v2048 = vadd.f32 %v1742, %v1917
    %v2049 = vadd.f32 %v1744, %v1921
    %v2050 = vadd.f32 %v1635, %v1925
    %v2051 = vadd.f32 %v1637, %v1929
    %v2052 = vadd.f32 %v1748, %v1933
    %v2053 = vadd.f32 %v1750, %v1937
    %v2054 = vadd.f32 %v1639, %v1925
    %v2055 = vadd.f32 %v1641, %v1929
    %v2056 = vadd.f32 %v1752, %v1933
    %v2057 = vadd.f32 %v1754, %v1937
    %v2058 = vadd.f32 %v1645, %v1941
    %v2059 = vadd.f32 %v1647, %v1945
    %v2060 = vadd.f32 %v1758, %v1949
    %v2061 = vadd.f32 %v1760, %v1953
    %v2062 = vadd.f32 %v1649, %v1941
    %v2063 = vadd.f32 %v1651, %v1945
    %v2064 = vadd.f32 %v1762, %v1949
    %v2065 = vadd.f32 %v1764, %v1953
    %v2066 = vadd.f32 %v1655, %v1957
    %v2067 = vadd.f32 %v1657, %v1961
    %v2068 = vadd.f32 %v1768, %v1965
    %v2069 = vadd.f32 %v1770, %v1969
    %v2070 = vadd.f32 %v1659, %v1957
    %v2071 = vadd.f32 %v1661, %v1961
    %v2072 = vadd.f32 %v1772, %v1965
    %v2073 = vadd.f32 %v1774, %v1969
    %v2074 = vadd.f32 %v1665, %v1973
    %v2075 = vadd.f32 %v1667, %v1977
    %v2076 = vadd.f32 %v1778, %v1981
    %v2077 = vadd.f32 %v1780, %v1985
    %v2078 = vadd.f32 %v1669, %v1973
    %v2079 = vadd.f32 %v1671, %v1977
    %v2080 = vadd.f32 %v1782, %v1981
    %v2081 = vadd.f32 %v1784, %v1985
    %v2082 = vld [vmem:[%s7] sm:$0xf]
    %v2084 = vlaneseq
    %v2085 = vshrl.u32 %v2084, 7
    %v2086 = vsub.s32 0, %v2085
    %v2087 = vrot.slane %v2082, %v2086
    %v2088 = vlaneseq
    %v2089 = vshrl.u32 %v2088, 7
    %v2090 = vsub.s32 1, %v2089
    %v2091 = vrot.slane %v2082, %v2090
    %v2092 = vlaneseq
    %v2093 = vshrl.u32 %v2092, 7
    %v2094 = vsub.s32 2, %v2093
    %v2095 = vrot.slane %v2082, %v2094
    %v2096 = vlaneseq
    %v2097 = vshrl.u32 %v2096, 7
    %v2098 = vsub.s32 3, %v2097
    %v2099 = vrot.slane %v2082, %v2098
    %v2104 = vadd.f32 %v2018, %v2087
    %v2105 = vadd.f32 %v2019, %v2091
    %v2106 = vadd.f32 %v2020, %v2095
    %v2107 = vadd.f32 %v2021, %v2099
    %v2108 = vadd.f32 %v2022, %v2087
    %v2109 = vadd.f32 %v2023, %v2091
    %v2110 = vadd.f32 %v2024, %v2095
    %v2111 = vadd.f32 %v2025, %v2099
    %v2112 = vadd.f32 %v2026, %v2087
    %v2113 = vadd.f32 %v2027, %v2091
    %v2114 = vadd.f32 %v2028, %v2095
    %v2115 = vadd.f32 %v2029, %v2099
    %v2116 = vadd.f32 %v2030, %v2087
    %v2117 = vadd.f32 %v2031, %v2091
    %v2118 = vadd.f32 %v2032, %v2095
    %v2119 = vadd.f32 %v2033, %v2099
    %v2120 = vadd.f32 %v2034, %v2087
    %v2121 = vadd.f32 %v2035, %v2091
    %v2122 = vadd.f32 %v2036, %v2095
    %v2123 = vadd.f32 %v2037, %v2099
    %v2124 = vadd.f32 %v2038, %v2087
    %v2125 = vadd.f32 %v2039, %v2091
    %v2126 = vadd.f32 %v2040, %v2095
    %v2127 = vadd.f32 %v2041, %v2099
    %v2128 = vadd.f32 %v2042, %v2087
    %v2129 = vadd.f32 %v2043, %v2091
    %v2130 = vadd.f32 %v2044, %v2095
    %v2131 = vadd.f32 %v2045, %v2099
    %v2132 = vadd.f32 %v2046, %v2087
    %v2133 = vadd.f32 %v2047, %v2091
    %v2134 = vadd.f32 %v2048, %v2095
    %v2135 = vadd.f32 %v2049, %v2099
    %v2136 = vadd.f32 %v2050, %v2087
    %v2137 = vadd.f32 %v2051, %v2091
    %v2138 = vadd.f32 %v2052, %v2095
    %v2139 = vadd.f32 %v2053, %v2099
    %v2140 = vadd.f32 %v2054, %v2087
    %v2141 = vadd.f32 %v2055, %v2091
    %v2142 = vadd.f32 %v2056, %v2095
    %v2143 = vadd.f32 %v2057, %v2099
    %v2144 = vadd.f32 %v2058, %v2087
    %v2145 = vadd.f32 %v2059, %v2091
    %v2146 = vadd.f32 %v2060, %v2095
    %v2147 = vadd.f32 %v2061, %v2099
    %v2148 = vadd.f32 %v2062, %v2087
    %v2149 = vadd.f32 %v2063, %v2091
    %v2150 = vadd.f32 %v2064, %v2095
    %v2151 = vadd.f32 %v2065, %v2099
    %v2152 = vadd.f32 %v2066, %v2087
    %v2153 = vadd.f32 %v2067, %v2091
    %v2154 = vadd.f32 %v2068, %v2095
    %v2155 = vadd.f32 %v2069, %v2099
    %v2156 = vadd.f32 %v2070, %v2087
    %v2157 = vadd.f32 %v2071, %v2091
    %v2158 = vadd.f32 %v2072, %v2095
    %v2159 = vadd.f32 %v2073, %v2099
    %v2160 = vadd.f32 %v2074, %v2087
    %v2161 = vadd.f32 %v2075, %v2091
    %v2162 = vadd.f32 %v2076, %v2095
    %v2163 = vadd.f32 %v2077, %v2099
    %v2164 = vadd.f32 %v2078, %v2087
    %v2165 = vadd.f32 %v2079, %v2091
    %v2166 = vadd.f32 %v2080, %v2095
    %v2167 = vadd.f32 %v2081, %v2099
    %v2168 = vmax.f32 %v2104, 0.0
    %v2169 = vmax.f32 %v2105, 0.0
    %v2170 = vmax.f32 %v2106, 0.0
    %v2171 = vmax.f32 %v2107, 0.0
    %v2172 = vmax.f32 %v2108, 0.0
    %v2173 = vmax.f32 %v2109, 0.0
    %v2174 = vmax.f32 %v2110, 0.0
    %v2175 = vmax.f32 %v2111, 0.0
    %v2176 = vmax.f32 %v2112, 0.0
    %v2177 = vmax.f32 %v2113, 0.0
    %v2178 = vmax.f32 %v2114, 0.0
    %v2179 = vmax.f32 %v2115, 0.0
    %v2180 = vmax.f32 %v2116, 0.0
    %v2181 = vmax.f32 %v2117, 0.0
    %v2182 = vmax.f32 %v2118, 0.0
    %v2183 = vmax.f32 %v2119, 0.0
    %v2184 = vmax.f32 %v2120, 0.0
    %v2185 = vmax.f32 %v2121, 0.0
    %v2186 = vmax.f32 %v2122, 0.0
    %v2187 = vmax.f32 %v2123, 0.0
    %v2188 = vmax.f32 %v2124, 0.0
    %v2189 = vmax.f32 %v2125, 0.0
    %v2190 = vmax.f32 %v2126, 0.0
    %v2191 = vmax.f32 %v2127, 0.0
    %v2192 = vmax.f32 %v2128, 0.0
    %v2193 = vmax.f32 %v2129, 0.0
    %v2194 = vmax.f32 %v2130, 0.0
    %v2195 = vmax.f32 %v2131, 0.0
    %v2196 = vmax.f32 %v2132, 0.0
    %v2197 = vmax.f32 %v2133, 0.0
    %v2198 = vmax.f32 %v2134, 0.0
    %v2199 = vmax.f32 %v2135, 0.0
    %v2200 = vmax.f32 %v2136, 0.0
    %v2201 = vmax.f32 %v2137, 0.0
    %v2202 = vmax.f32 %v2138, 0.0
    %v2203 = vmax.f32 %v2139, 0.0
    %v2204 = vmax.f32 %v2140, 0.0
    %v2205 = vmax.f32 %v2141, 0.0
    %v2206 = vmax.f32 %v2142, 0.0
    %v2207 = vmax.f32 %v2143, 0.0
    %v2208 = vmax.f32 %v2144, 0.0
    %v2209 = vmax.f32 %v2145, 0.0
    %v2210 = vmax.f32 %v2146, 0.0
    %v2211 = vmax.f32 %v2147, 0.0
    %v2212 = vmax.f32 %v2148, 0.0
    %v2213 = vmax.f32 %v2149, 0.0
    %v2214 = vmax.f32 %v2150, 0.0
    %v2215 = vmax.f32 %v2151, 0.0
    %v2216 = vmax.f32 %v2152, 0.0
    %v2217 = vmax.f32 %v2153, 0.0
    %v2218 = vmax.f32 %v2154, 0.0
    %v2219 = vmax.f32 %v2155, 0.0
    %v2220 = vmax.f32 %v2156, 0.0
    %v2221 = vmax.f32 %v2157, 0.0
    %v2222 = vmax.f32 %v2158, 0.0
    %v2223 = vmax.f32 %v2159, 0.0
    %v2224 = vmax.f32 %v2160, 0.0
    %v2225 = vmax.f32 %v2161, 0.0
    %v2226 = vmax.f32 %v2162, 0.0
    %v2227 = vmax.f32 %v2163, 0.0
    %v2228 = vmax.f32 %v2164, 0.0
    %v2229 = vmax.f32 %v2165, 0.0
    %v2230 = vmax.f32 %v2166, 0.0
    %v2231 = vmax.f32 %v2167, 0.0
    %v2232 = vpack.c.bf16 %v2172, %v2168
    %v2233 = vpack.c.bf16 %v2173, %v2169
    %v2234 = vpack.c.bf16 %v2174, %v2170
    %v2235 = vpack.c.bf16 %v2175, %v2171
    %v2236 = vpack.c.bf16 %v2180, %v2176
    %v2237 = vpack.c.bf16 %v2181, %v2177
    %v2238 = vpack.c.bf16 %v2182, %v2178
    %v2239 = vpack.c.bf16 %v2183, %v2179
    %v2240 = vpack.c.bf16 %v2188, %v2184
    %v2241 = vpack.c.bf16 %v2189, %v2185
    %v2242 = vpack.c.bf16 %v2190, %v2186
    %v2243 = vpack.c.bf16 %v2191, %v2187
    %v2244 = vpack.c.bf16 %v2196, %v2192
    %v2245 = vpack.c.bf16 %v2197, %v2193
    %v2246 = vpack.c.bf16 %v2198, %v2194
    %v2247 = vpack.c.bf16 %v2199, %v2195
    %v2248 = vpack.c.bf16 %v2204, %v2200
    %v2249 = vpack.c.bf16 %v2205, %v2201
    %v2250 = vpack.c.bf16 %v2206, %v2202
    %v2251 = vpack.c.bf16 %v2207, %v2203
    %v2252 = vpack.c.bf16 %v2212, %v2208
    %v2253 = vpack.c.bf16 %v2213, %v2209
    %v2254 = vpack.c.bf16 %v2214, %v2210
    %v2255 = vpack.c.bf16 %v2215, %v2211
    %v2256 = vpack.c.bf16 %v2220, %v2216
    %v2257 = vpack.c.bf16 %v2221, %v2217
    %v2258 = vpack.c.bf16 %v2222, %v2218
    %v2259 = vpack.c.bf16 %v2223, %v2219
    %v2260 = vpack.c.bf16 %v2228, %v2224
    %v2261 = vpack.c.bf16 %v2229, %v2225
    %v2262 = vpack.c.bf16 %v2230, %v2226
    %v2263 = vpack.c.bf16 %v2231, %v2227
    %v2264 = vld [vmem:[#allocation11] sm:$0xff]
    %v2265 = vld [vmem:[#allocation11 + $0x8] sm:$0xff]
    %v2266 = vld [vmem:[#allocation11 + $0x10] sm:$0xff]
    %v2267 = vld [vmem:[#allocation11 + $0x18] sm:$0xff]
    %v2268 = vld [vmem:[#allocation11 + $0x20] sm:$0xff]
    %v2269 = vld [vmem:[#allocation11 + $0x28] sm:$0xff]
    %v2270 = vld [vmem:[#allocation11 + $0x30] sm:$0xff]
    %v2271 = vld [vmem:[#allocation11 + $0x38] sm:$0xff]
    %v2272 = vld [vmem:[#allocation11 + $0x40] sm:$0xff]
    %v2273 = vld [vmem:[#allocation11 + $0x48] sm:$0xff]
    %v2274 = vld [vmem:[#allocation11 + $0x50] sm:$0xff]
    %v2275 = vld [vmem:[#allocation11 + $0x58] sm:$0xff]
    %v2276 = vld [vmem:[#allocation11 + $0x60] sm:$0xff]
    %v2277 = vld [vmem:[#allocation11 + $0x68] sm:$0xff]
    %v2278 = vld [vmem:[#allocation11 + $0x70] sm:$0xff]
    %v2279 = vld [vmem:[#allocation11 + $0x78] sm:$0xff]
    %v2280 = vld [vmem:[#allocation11 + $0x80] sm:$0xff]
    %v2281 = vld [vmem:[#allocation11 + $0x88] sm:$0xff]
    %v2282 = vld [vmem:[#allocation11 + $0x90] sm:$0xff]
    %v2283 = vld [vmem:[#allocation11 + $0x98] sm:$0xff]
    %v2284 = vld [vmem:[#allocation11 + $0xa0] sm:$0xff]
    %v2285 = vld [vmem:[#allocation11 + $0xa8] sm:$0xff]
    %v2286 = vld [vmem:[#allocation11 + $0xb0] sm:$0xff]
    %v2287 = vld [vmem:[#allocation11 + $0xb8] sm:$0xff]
    %v2288 = vld [vmem:[#allocation11 + $0xc0] sm:$0xff]
    %v2289 = vld [vmem:[#allocation11 + $0xc8] sm:$0xff]
    %v2290 = vld [vmem:[#allocation11 + $0xd0] sm:$0xff]
    %v2291 = vld [vmem:[#allocation11 + $0xd8] sm:$0xff]
    %v2292 = vld [vmem:[#allocation11 + $0xe0] sm:$0xff]
    %v2293 = vld [vmem:[#allocation11 + $0xe8] sm:$0xff]
    %v2294 = vld [vmem:[#allocation11 + $0xf0] sm:$0xff]
    %v2295 = vld [vmem:[#allocation11 + $0xf8] sm:$0xff]
    %v2296 = vld [vmem:[#allocation11 + $0x100] sm:$0xff]
    %v2297 = vld [vmem:[#allocation11 + $0x108] sm:$0xff]
    %v2298 = vld [vmem:[#allocation11 + $0x110] sm:$0xff]
    %v2299 = vld [vmem:[#allocation11 + $0x118] sm:$0xff]
    %v2300 = vld [vmem:[#allocation11 + $0x120] sm:$0xff]
    %v2301 = vld [vmem:[#allocation11 + $0x128] sm:$0xff]
    %v2302 = vld [vmem:[#allocation11 + $0x130] sm:$0xff]
    %v2303 = vld [vmem:[#allocation11 + $0x138] sm:$0xff]
    %v2304 = vld [vmem:[#allocation11 + $0x140] sm:$0xff]
    %v2305 = vld [vmem:[#allocation11 + $0x148] sm:$0xff]
    %v2306 = vld [vmem:[#allocation11 + $0x150] sm:$0xff]
    %v2307 = vld [vmem:[#allocation11 + $0x158] sm:$0xff]
    %v2308 = vld [vmem:[#allocation11 + $0x160] sm:$0xff]
    %v2309 = vld [vmem:[#allocation11 + $0x168] sm:$0xff]
    %v2310 = vld [vmem:[#allocation11 + $0x170] sm:$0xff]
    %v2311 = vld [vmem:[#allocation11 + $0x178] sm:$0xff]
    %v2312 = vld [vmem:[#allocation11 + $0x180] sm:$0xff]
    %v2313 = vld [vmem:[#allocation11 + $0x188] sm:$0xff]
    %v2314 = vld [vmem:[#allocation11 + $0x190] sm:$0xff]
    %v2315 = vld [vmem:[#allocation11 + $0x198] sm:$0xff]
    %v2316 = vld [vmem:[#allocation11 + $0x1a0] sm:$0xff]
    %v2317 = vld [vmem:[#allocation11 + $0x1a8] sm:$0xff]
    %v2318 = vld [vmem:[#allocation11 + $0x1b0] sm:$0xff]
    %v2319 = vld [vmem:[#allocation11 + $0x1b8] sm:$0xff]
    %v2320 = vld [vmem:[#allocation11 + $0x1c0] sm:$0xff]
    %v2321 = vld [vmem:[#allocation11 + $0x1c8] sm:$0xff]
    %v2322 = vld [vmem:[#allocation11 + $0x1d0] sm:$0xff]
    %v2323 = vld [vmem:[#allocation11 + $0x1d8] sm:$0xff]
    %v2324 = vld [vmem:[#allocation11 + $0x1e0] sm:$0xff]
    %v2325 = vld [vmem:[#allocation11 + $0x1e8] sm:$0xff]
    %v2326 = vld [vmem:[#allocation11 + $0x1f0] sm:$0xff]
    %v2327 = vld [vmem:[#allocation11 + $0x1f8] sm:$0xff]
    %v2328 = vld [vmem:[%s9] sm:$0x3]
    %v2330 = vlaneseq
    %v2331 = vshrl.u32 %v2330, 7
    %v2332 = vsub.s32 0, %v2331
    %v2333 = vrot.slane %v2328, %v2332
    %v2334 = vlaneseq
    %v2335 = vshrl.u32 %v2334, 7
    %v2336 = vsub.s32 1, %v2335
    %v2337 = vrot.slane %v2328, %v2336
    %v2404 = vunpack.c.l.b16 %v2264
    %v2405 = vunpack.c.h.b16 %v2264
    %v2406 = vunpack.c.l.b16 %v2265
    %v2407 = vunpack.c.h.b16 %v2265
    %v2408 = vunpack.c.l.b16 %v2266
    %v2409 = vunpack.c.h.b16 %v2266
    %v2410 = vunpack.c.l.b16 %v2267
    %v2411 = vunpack.c.h.b16 %v2267
    %v2412 = vunpack.c.l.b16 %v2268
    %v2413 = vunpack.c.h.b16 %v2268
    %v2414 = vunpack.c.l.b16 %v2269
    %v2415 = vunpack.c.h.b16 %v2269
    %v2416 = vunpack.c.l.b16 %v2270
    %v2417 = vunpack.c.h.b16 %v2270
    %v2418 = vunpack.c.l.b16 %v2271
    %v2419 = vunpack.c.h.b16 %v2271
    %v2420 = vunpack.c.l.b16 %v2272
    %v2421 = vunpack.c.h.b16 %v2272
    %v2422 = vunpack.c.l.b16 %v2273
    %v2423 = vunpack.c.h.b16 %v2273
    %v2424 = vunpack.c.l.b16 %v2274
    %v2425 = vunpack.c.h.b16 %v2274
    %v2426 = vunpack.c.l.b16 %v2275
    %v2427 = vunpack.c.h.b16 %v2275
    %v2428 = vunpack.c.l.b16 %v2276
    %v2429 = vunpack.c.h.b16 %v2276
    %v2430 = vunpack.c.l.b16 %v2277
    %v2431 = vunpack.c.h.b16 %v2277
    %v2432 = vunpack.c.l.b16 %v2278
    %v2433 = vunpack.c.h.b16 %v2278
    %v2434 = vunpack.c.l.b16 %v2279
    %v2435 = vunpack.c.h.b16 %v2279
    %v2436 = vunpack.c.l.b16 %v2280
    %v2437 = vunpack.c.h.b16 %v2280
    %v2438 = vunpack.c.l.b16 %v2281
    %v2439 = vunpack.c.h.b16 %v2281
    %v2440 = vunpack.c.l.b16 %v2282
    %v2441 = vunpack.c.h.b16 %v2282
    %v2442 = vunpack.c.l.b16 %v2283
    %v2443 = vunpack.c.h.b16 %v2283
    %v2444 = vunpack.c.l.b16 %v2284
    %v2445 = vunpack.c.h.b16 %v2284
    %v2446 = vunpack.c.l.b16 %v2285
    %v2447 = vunpack.c.h.b16 %v2285
    %v2448 = vunpack.c.l.b16 %v2286
    %v2449 = vunpack.c.h.b16 %v2286
    %v2450 = vunpack.c.l.b16 %v2287
    %v2451 = vunpack.c.h.b16 %v2287
    %v2452 = vunpack.c.l.b16 %v2288
    %v2453 = vunpack.c.h.b16 %v2288
    %v2454 = vunpack.c.l.b16 %v2289
    %v2455 = vunpack.c.h.b16 %v2289
    %v2456 = vunpack.c.l.b16 %v2290
    %v2457 = vunpack.c.h.b16 %v2290
    %v2458 = vunpack.c.l.b16 %v2291
    %v2459 = vunpack.c.h.b16 %v2291
    %v2460 = vunpack.c.l.b16 %v2292
    %v2461 = vunpack.c.h.b16 %v2292
    %v2462 = vunpack.c.l.b16 %v2293
    %v2463 = vunpack.c.h.b16 %v2293
    %v2464 = vunpack.c.l.b16 %v2294
    %v2465 = vunpack.c.h.b16 %v2294
    %v2466 = vunpack.c.l.b16 %v2295
    %v2467 = vunpack.c.h.b16 %v2295
    %v2468 = vunpack.c.l.b16 %v2296
    %v2469 = vunpack.c.h.b16 %v2296
    %v2470 = vunpack.c.l.b16 %v2297
    %v2471 = vunpack.c.h.b16 %v2297
    %v2472 = vunpack.c.l.b16 %v2298
    %v2473 = vunpack.c.h.b16 %v2298
    %v2474 = vunpack.c.l.b16 %v2299
    %v2475 = vunpack.c.h.b16 %v2299
    %v2476 = vunpack.c.l.b16 %v2300
    %v2477 = vunpack.c.h.b16 %v2300
    %v2478 = vunpack.c.l.b16 %v2301
    %v2479 = vunpack.c.h.b16 %v2301
    %v2480 = vunpack.c.l.b16 %v2302
    %v2481 = vunpack.c.h.b16 %v2302
    %v2482 = vunpack.c.l.b16 %v2303
    %v2483 = vunpack.c.h.b16 %v2303
    %v2484 = vunpack.c.l.b16 %v2304
    %v2485 = vunpack.c.h.b16 %v2304
    %v2486 = vunpack.c.l.b16 %v2305
    %v2487 = vunpack.c.h.b16 %v2305
    %v2488 = vunpack.c.l.b16 %v2306
    %v2489 = vunpack.c.h.b16 %v2306
    %v2490 = vunpack.c.l.b16 %v2307
    %v2491 = vunpack.c.h.b16 %v2307
    %v2492 = vunpack.c.l.b16 %v2308
    %v2493 = vunpack.c.h.b16 %v2308
    %v2494 = vunpack.c.l.b16 %v2309
    %v2495 = vunpack.c.h.b16 %v2309
    %v2496 = vunpack.c.l.b16 %v2310
    %v2497 = vunpack.c.h.b16 %v2310
    %v2498 = vunpack.c.l.b16 %v2311
    %v2499 = vunpack.c.h.b16 %v2311
    %v2500 = vunpack.c.l.b16 %v2312
    %v2501 = vunpack.c.h.b16 %v2312
    %v2502 = vunpack.c.l.b16 %v2313
    %v2503 = vunpack.c.h.b16 %v2313
    %v2504 = vunpack.c.l.b16 %v2314
    %v2505 = vunpack.c.h.b16 %v2314
    %v2506 = vunpack.c.l.b16 %v2315
    %v2507 = vunpack.c.h.b16 %v2315
    %v2508 = vunpack.c.l.b16 %v2316
    %v2509 = vunpack.c.h.b16 %v2316
    %v2510 = vunpack.c.l.b16 %v2317
    %v2511 = vunpack.c.h.b16 %v2317
    %v2512 = vunpack.c.l.b16 %v2318
    %v2513 = vunpack.c.h.b16 %v2318
    %v2514 = vunpack.c.l.b16 %v2319
    %v2515 = vunpack.c.h.b16 %v2319
    %v2516 = vunpack.c.l.b16 %v2320
    %v2517 = vunpack.c.h.b16 %v2320
    %v2518 = vunpack.c.l.b16 %v2321
    %v2519 = vunpack.c.h.b16 %v2321
    %v2520 = vunpack.c.l.b16 %v2322
    %v2521 = vunpack.c.h.b16 %v2322
    %v2522 = vunpack.c.l.b16 %v2323
    %v2523 = vunpack.c.h.b16 %v2323
    %v2524 = vunpack.c.l.b16 %v2324
    %v2525 = vunpack.c.h.b16 %v2324
    %v2526 = vunpack.c.l.b16 %v2325
    %v2527 = vunpack.c.h.b16 %v2325
    %v2528 = vunpack.c.l.b16 %v2326
    %v2529 = vunpack.c.h.b16 %v2326
    %v2530 = vunpack.c.l.b16 %v2327
    %v2531 = vunpack.c.h.b16 %v2327
    %v2532 = vpack.c.b16 %v2406, %v2404
    %v2533 = vpack.c.b16 %v2407, %v2405
    %v2534 = vpack.c.b16 %v2410, %v2408
    %v2535 = vpack.c.b16 %v2411, %v2409
    %v2536 = vpack.c.b16 %v2414, %v2412
    %v2537 = vpack.c.b16 %v2415, %v2413
    %v2538 = vpack.c.b16 %v2418, %v2416
    %v2539 = vpack.c.b16 %v2419, %v2417
    %v2540 = vpack.c.b16 %v2422, %v2420
    %v2541 = vpack.c.b16 %v2423, %v2421
    %v2542 = vpack.c.b16 %v2426, %v2424
    %v2543 = vpack.c.b16 %v2427, %v2425
    %v2544 = vpack.c.b16 %v2430, %v2428
    %v2545 = vpack.c.b16 %v2431, %v2429
    %v2546 = vpack.c.b16 %v2434, %v2432
    %v2547 = vpack.c.b16 %v2435, %v2433
    %v2548 = vpack.c.b16 %v2438, %v2436
    %v2549 = vpack.c.b16 %v2439, %v2437
    %v2550 = vpack.c.b16 %v2442, %v2440
    %v2551 = vpack.c.b16 %v2443, %v2441
    %v2552 = vpack.c.b16 %v2446, %v2444
    %v2553 = vpack.c.b16 %v2447, %v2445
    %v2554 = vpack.c.b16 %v2450, %v2448
    %v2555 = vpack.c.b16 %v2451, %v2449
    %v2556 = vpack.c.b16 %v2454, %v2452
    %v2557 = vpack.c.b16 %v2455, %v2453
    %v2558 = vpack.c.b16 %v2458, %v2456
    %v2559 = vpack.c.b16 %v2459, %v2457
    %v2560 = vpack.c.b16 %v2462, %v2460
    %v2561 = vpack.c.b16 %v2463, %v2461
    %v2562 = vpack.c.b16 %v2466, %v2464
    %v2563 = vpack.c.b16 %v2467, %v2465
    %v2564 = vpack.c.b16 %v2470, %v2468
    %v2565 = vpack.c.b16 %v2471, %v2469
    %v2566 = vpack.c.b16 %v2474, %v2472
    %v2567 = vpack.c.b16 %v2475, %v2473
    %v2568 = vpack.c.b16 %v2478, %v2476
    %v2569 = vpack.c.b16 %v2479, %v2477
    %v2570 = vpack.c.b16 %v2482, %v2480
    %v2571 = vpack.c.b16 %v2483, %v2481
    %v2572 = vpack.c.b16 %v2486, %v2484
    %v2573 = vpack.c.b16 %v2487, %v2485
    %v2574 = vpack.c.b16 %v2490, %v2488
    %v2575 = vpack.c.b16 %v2491, %v2489
    %v2576 = vpack.c.b16 %v2494, %v2492
    %v2577 = vpack.c.b16 %v2495, %v2493
    %v2578 = vpack.c.b16 %v2498, %v2496
    %v2579 = vpack.c.b16 %v2499, %v2497
    %v2580 = vpack.c.b16 %v2502, %v2500
    %v2581 = vpack.c.b16 %v2503, %v2501
    %v2582 = vpack.c.b16 %v2506, %v2504
    %v2583 = vpack.c.b16 %v2507, %v2505
    %v2584 = vpack.c.b16 %v2510, %v2508
    %v2585 = vpack.c.b16 %v2511, %v2509
    %v2586 = vpack.c.b16 %v2514, %v2512
    %v2587 = vpack.c.b16 %v2515, %v2513
    %v2588 = vpack.c.b16 %v2518, %v2516
    %v2589 = vpack.c.b16 %v2519, %v2517
    %v2590 = vpack.c.b16 %v2522, %v2520
    %v2591 = vpack.c.b16 %v2523, %v2521
    %v2592 = vpack.c.b16 %v2526, %v2524
    %v2593 = vpack.c.b16 %v2527, %v2525
    %v2594 = vpack.c.b16 %v2530, %v2528
    %v2595 = vpack.c.b16 %v2531, %v2529
    %2660 = vmatprep.subr.bf16.mxu0 %v2533
    %2661 = vmatpush1.bf16.msra.mxu0 %v2532
    %2662 = vmatprep.subr.bf16.mxu0 %v2535
    %2663 = vmatpush1.bf16.msra.mxu0 %v2534
    %2664 = vmatprep.subr.bf16.mxu0 %v2537
    %2665 = vmatpush1.bf16.msra.mxu0 %v2536
    %2666 = vmatprep.subr.bf16.mxu0 %v2539
    %2667 = vmatpush1.bf16.msra.mxu0 %v2538
    %2668 = vmatprep.subr.bf16.mxu0 %v2541
    %2669 = vmatpush1.bf16.msra.mxu0 %v2540
    %2670 = vmatprep.subr.bf16.mxu0 %v2543
    %2671 = vmatpush1.bf16.msra.mxu0 %v2542
    %2672 = vmatprep.subr.bf16.mxu0 %v2545
    %2673 = vmatpush1.bf16.msra.mxu0 %v2544
    %2674 = vmatprep.subr.bf16.mxu0 %v2547
    %2675 = vmatpush1.bf16.msra.mxu0 %v2546
    %2676 = vmatprep.subr.bf16.mxu0 %v2549
    %2677 = vmatpush1.bf16.msra.mxu0 %v2548
    %2678 = vmatprep.subr.bf16.mxu0 %v2551
    %2679 = vmatpush1.bf16.msra.mxu0 %v2550
    %2680 = vmatprep.subr.bf16.mxu0 %v2553
    %2681 = vmatpush1.bf16.msra.mxu0 %v2552
    %2682 = vmatprep.subr.bf16.mxu0 %v2555
    %2683 = vmatpush1.bf16.msra.mxu0 %v2554
    %2684 = vmatprep.subr.bf16.mxu0 %v2557
    %2685 = vmatpush1.bf16.msra.mxu0 %v2556
    %2686 = vmatprep.subr.bf16.mxu0 %v2559
    %2687 = vmatpush1.bf16.msra.mxu0 %v2558
    %2688 = vmatprep.subr.bf16.mxu0 %v2561
    %2689 = vmatpush1.bf16.msra.mxu0 %v2560
    %2690 = vmatprep.subr.bf16.mxu0 %v2563
    %2691 = vmatpush1.bf16.msra.mxu0 %v2562
    %2692 = vmatprep.mubr.bf16.mxu0 %v2233
    %2693 = vmatmul.mubr.bf16.gmra.mrb[0].mxu0 %v2232
    %v2694 = vpop.f32.mrb[0].mxu0
    %v2695 = vadd.f32 %v2333, %v2694
    %v2696 = vpop.f32.mrb[0].mxu0
    %v2697 = vadd.f32 %v2337, %v2696
    %v2698 = vpop.f32.mrb[0].mxu0
    %v2699 = vadd.f32 %v2333, %v2698
    %v2700 = vpop.f32.mrb[0].mxu0
    %v2701 = vadd.f32 %v2337, %v2700
    %2702 = vmatprep.mubr.bf16.mxu0 %v2237
    %2703 = vmatmul.mubr.bf16.gmra.mrb[0].mxu0 %v2236
    %v2704 = vpop.f32.mrb[0].mxu0
    %v2705 = vadd.f32 %v2333, %v2704
    %v2706 = vpop.f32.mrb[0].mxu0
    %v2707 = vadd.f32 %v2337, %v2706
    %v2708 = vpop.f32.mrb[0].mxu0
    %v2709 = vadd.f32 %v2333, %v2708
    %v2710 = vpop.f32.mrb[0].mxu0
    %v2711 = vadd.f32 %v2337, %v2710
    %2712 = vmatprep.mubr.bf16.mxu0 %v2241
    %2713 = vmatmul.mubr.bf16.gmra.mrb[0].mxu0 %v2240
    %v2714 = vpop.f32.mrb[0].mxu0
    %v2715 = vadd.f32 %v2333, %v2714
    %v2716 = vpop.f32.mrb[0].mxu0
    %v2717 = vadd.f32 %v2337, %v2716
    %v2718 = vpop.f32.mrb[0].mxu0
    %v2719 = vadd.f32 %v2333, %v2718
    %v2720 = vpop.f32.mrb[0].mxu0
    %v2721 = vadd.f32 %v2337, %v2720
    %2722 = vmatprep.mubr.bf16.mxu0 %v2245
    %2723 = vmatmul.mubr.bf16.gmra.mrb[0].mxu0 %v2244
    %v2724 = vpop.f32.mrb[0].mxu0
    %v2725 = vadd.f32 %v2333, %v2724
    %v2726 = vpop.f32.mrb[0].mxu0
    %v2727 = vadd.f32 %v2337, %v2726
    %v2728 = vpop.f32.mrb[0].mxu0
    %v2729 = vadd.f32 %v2333, %v2728
    %v2730 = vpop.f32.mrb[0].mxu0
    %v2731 = vadd.f32 %v2337, %v2730
    %2732 = vmatprep.mubr.bf16.mxu0 %v2249
    %2733 = vmatmul.mubr.bf16.gmra.mrb[0].mxu0 %v2248
    %v2734 = vpop.f32.mrb[0].mxu0
    %v2735 = vadd.f32 %v2333, %v2734
    %v2736 = vpop.f32.mrb[0].mxu0
    %v2737 = vadd.f32 %v2337, %v2736
    %v2738 = vpop.f32.mrb[0].mxu0
    %v2739 = vadd.f32 %v2333, %v2738
    %v2740 = vpop.f32.mrb[0].mxu0
    %v2741 = vadd.f32 %v2337, %v2740
    %2742 = vmatprep.mubr.bf16.mxu0 %v2253
    %2743 = vmatmul.mubr.bf16.gmra.mrb[0].mxu0 %v2252
    %v2744 = vpop.f32.mrb[0].mxu0
    %v2745 = vadd.f32 %v2333, %v2744
    %v2746 = vpop.f32.mrb[0].mxu0
    %v2747 = vadd.f32 %v2337, %v2746
    %v2748 = vpop.f32.mrb[0].mxu0
    %v2749 = vadd.f32 %v2333, %v2748
    %v2750 = vpop.f32.mrb[0].mxu0
    %v2751 = vadd.f32 %v2337, %v2750
    %2752 = vmatprep.mubr.bf16.mxu0 %v2257
    %2753 = vmatmul.mubr.bf16.gmra.mrb[0].mxu0 %v2256
    %v2754 = vpop.f32.mrb[0].mxu0
    %v2755 = vadd.f32 %v2333, %v2754
    %v2756 = vpop.f32.mrb[0].mxu0
    %v2757 = vadd.f32 %v2337, %v2756
    %v2758 = vpop.f32.mrb[0].mxu0
    %v2759 = vadd.f32 %v2333, %v2758
    %v2760 = vpop.f32.mrb[0].mxu0
    %v2761 = vadd.f32 %v2337, %v2760
    %2762 = vmatprep.mubr.bf16.mxu0 %v2261
    %2763 = vmatmul.mubr.bf16.gmra.mrb[0].mxu0 %v2260
    %v2764 = vpop.f32.mrb[0].mxu0
    %v2765 = vadd.f32 %v2333, %v2764
    %v2766 = vpop.f32.mrb[0].mxu0
    %v2767 = vadd.f32 %v2337, %v2766
    %v2768 = vpop.f32.mrb[0].mxu0
    %v2769 = vadd.f32 %v2333, %v2768
    %v2770 = vpop.f32.mrb[0].mxu0
    %v2771 = vadd.f32 %v2337, %v2770
    %2772 = vdwg.mxu0
    %2773 = vmatprep.subr.bf16.mxu0 %v2565
    %2774 = vmatpush1.bf16.msra.mxu0 %v2564
    %2775 = vmatprep.subr.bf16.mxu0 %v2567
    %2776 = vmatpush1.bf16.msra.mxu0 %v2566
    %2777 = vmatprep.subr.bf16.mxu0 %v2569
    %2778 = vmatpush1.bf16.msra.mxu0 %v2568
    %2779 = vmatprep.subr.bf16.mxu0 %v2571
    %2780 = vmatpush1.bf16.msra.mxu0 %v2570
    %2781 = vmatprep.subr.bf16.mxu0 %v2573
    %2782 = vmatpush1.bf16.msra.mxu0 %v2572
    %2783 = vmatprep.subr.bf16.mxu0 %v2575
    %2784 = vmatpush1.bf16.msra.mxu0 %v2574
    %2785 = vmatprep.subr.bf16.mxu0 %v2577
    %2786 = vmatpush1.bf16.msra.mxu0 %v2576
    %2787 = vmatprep.subr.bf16.mxu0 %v2579
    %2788 = vmatpush1.bf16.msra.mxu0 %v2578
    %2789 = vmatprep.subr.bf16.mxu0 %v2581
    %2790 = vmatpush1.bf16.msra.mxu0 %v2580
    %2791 = vmatprep.subr.bf16.mxu0 %v2583
    %2792 = vmatpush1.bf16.msra.mxu0 %v2582
    %2793 = vmatprep.subr.bf16.mxu0 %v2585
    %2794 = vmatpush1.bf16.msra.mxu0 %v2584
    %2795 = vmatprep.subr.bf16.mxu0 %v2587
    %2796 = vmatpush1.bf16.msra.mxu0 %v2586
    %2797 = vmatprep.subr.bf16.mxu0 %v2589
    %2798 = vmatpush1.bf16.msra.mxu0 %v2588
    %2799 = vmatprep.subr.bf16.mxu0 %v2591
    %2800 = vmatpush1.bf16.msra.mxu0 %v2590
    %2801 = vmatprep.subr.bf16.mxu0 %v2593
    %2802 = vmatpush1.bf16.msra.mxu0 %v2592
    %2803 = vmatprep.subr.bf16.mxu0 %v2595
    %2804 = vmatpush1.bf16.msra.mxu0 %v2594
    %2805 = vmatprep.mubr.bf16.mxu0 %v2235
    %2806 = vmatmul.mubr.bf16.gmra.mrb[0].mxu0 %v2234
    %v2807 = vpop.f32.mrb[0].mxu0
    %v2808 = vadd.f32 %v2695, %v2807
    %v2809 = vpop.f32.mrb[0].mxu0
    %v2810 = vadd.f32 %v2697, %v2809
    %v2811 = vpop.f32.mrb[0].mxu0
    %v2812 = vadd.f32 %v2699, %v2811
    %v2813 = vpop.f32.mrb[0].mxu0
    %v2814 = vadd.f32 %v2701, %v2813
    %2815 = vmatprep.mubr.bf16.mxu0 %v2239
    %2816 = vmatmul.mubr.bf16.gmra.mrb[0].mxu0 %v2238
    %v2817 = vpop.f32.mrb[0].mxu0
    %v2818 = vadd.f32 %v2705, %v2817
    %v2819 = vpop.f32.mrb[0].mxu0
    %v2820 = vadd.f32 %v2707, %v2819
    %v2821 = vpop.f32.mrb[0].mxu0
    %v2822 = vadd.f32 %v2709, %v2821
    %v2823 = vpop.f32.mrb[0].mxu0
    %v2824 = vadd.f32 %v2711, %v2823
    %2825 = vmatprep.mubr.bf16.mxu0 %v2243
    %2826 = vmatmul.mubr.bf16.gmra.mrb[0].mxu0 %v2242
    %v2827 = vpop.f32.mrb[0].mxu0
    %v2828 = vadd.f32 %v2715, %v2827
    %v2829 = vpop.f32.mrb[0].mxu0
    %v2830 = vadd.f32 %v2717, %v2829
    %v2831 = vpop.f32.mrb[0].mxu0
    %v2832 = vadd.f32 %v2719, %v2831
    %v2833 = vpop.f32.mrb[0].mxu0
    %v2834 = vadd.f32 %v2721, %v2833
    %2835 = vmatprep.mubr.bf16.mxu0 %v2247
    %2836 = vmatmul.mubr.bf16.gmra.mrb[0].mxu0 %v2246
    %v2837 = vpop.f32.mrb[0].mxu0
    %v2838 = vadd.f32 %v2725, %v2837
    %v2839 = vpop.f32.mrb[0].mxu0
    %v2840 = vadd.f32 %v2727, %v2839
    %v2841 = vpop.f32.mrb[0].mxu0
    %v2842 = vadd.f32 %v2729, %v2841
    %v2843 = vpop.f32.mrb[0].mxu0
    %v2844 = vadd.f32 %v2731, %v2843
    %2845 = vmatprep.mubr.bf16.mxu0 %v2251
    %2846 = vmatmul.mubr.bf16.gmra.mrb[0].mxu0 %v2250
    %v2847 = vpop.f32.mrb[0].mxu0
    %v2848 = vadd.f32 %v2735, %v2847
    %v2849 = vpop.f32.mrb[0].mxu0
    %v2850 = vadd.f32 %v2737, %v2849
    %v2851 = vpop.f32.mrb[0].mxu0
    %v2852 = vadd.f32 %v2739, %v2851
    %v2853 = vpop.f32.mrb[0].mxu0
    %v2854 = vadd.f32 %v2741, %v2853
    %2855 = vmatprep.mubr.bf16.mxu0 %v2255
    %2856 = vmatmul.mubr.bf16.gmra.mrb[0].mxu0 %v2254
    %v2857 = vpop.f32.mrb[0].mxu0
    %v2858 = vadd.f32 %v2745, %v2857
    %v2859 = vpop.f32.mrb[0].mxu0
    %v2860 = vadd.f32 %v2747, %v2859
    %v2861 = vpop.f32.mrb[0].mxu0
    %v2862 = vadd.f32 %v2749, %v2861
    %v2863 = vpop.f32.mrb[0].mxu0
    %v2864 = vadd.f32 %v2751, %v2863
    %2865 = vmatprep.mubr.bf16.mxu0 %v2259
    %2866 = vmatmul.mubr.bf16.gmra.mrb[0].mxu0 %v2258
    %v2867 = vpop.f32.mrb[0].mxu0
    %v2868 = vadd.f32 %v2755, %v2867
    %v2869 = vpop.f32.mrb[0].mxu0
    %v2870 = vadd.f32 %v2757, %v2869
    %v2871 = vpop.f32.mrb[0].mxu0
    %v2872 = vadd.f32 %v2759, %v2871
    %v2873 = vpop.f32.mrb[0].mxu0
    %v2874 = vadd.f32 %v2761, %v2873
    %2875 = vmatprep.mubr.bf16.mxu0 %v2263
    %2876 = vmatmul.mubr.bf16.gmra.mrb[0].mxu0 %v2262
    %v2877 = vpop.f32.mrb[0].mxu0
    %v2878 = vadd.f32 %v2765, %v2877
    %v2879 = vpop.f32.mrb[0].mxu0
    %v2880 = vadd.f32 %v2767, %v2879
    %v2881 = vpop.f32.mrb[0].mxu0
    %v2882 = vadd.f32 %v2769, %v2881
    %v2883 = vpop.f32.mrb[0].mxu0
    %v2884 = vadd.f32 %v2771, %v2883
    %2885 = vdwg.mxu0
    %v2886 = vmax.f32 %v2808, %v2812
    %v2887 = vrot.slane %v2886, 4
    %v2888 = vmax.f32 %v2886, %v2887
    %v2889 = vrot.slane %v2888, 2
    %v2890 = vmax.f32 %v2888, %v2889
    %v2891 = vrot.slane %v2890, 1
    %v2892 = vmax.f32 %v2890, %v2891
    %v2893 = vmax.f32 %v2810, %v2814
    %v2894 = vrot.slane %v2893, 4
    %v2895 = vmax.f32 %v2893, %v2894
    %v2896 = vrot.slane %v2895, 2
    %v2897 = vmax.f32 %v2895, %v2896
    %v2898 = vrot.slane %v2897, 1
    %v2899 = vmax.f32 %v2897, %v2898
    %v2900 = vmax.f32 %v2818, %v2822
    %v2901 = vrot.slane %v2900, 4
    %v2902 = vmax.f32 %v2900, %v2901
    %v2903 = vrot.slane %v2902, 2
    %v2904 = vmax.f32 %v2902, %v2903
    %v2905 = vrot.slane %v2904, 1
    %v2906 = vmax.f32 %v2904, %v2905
    %v2907 = vmax.f32 %v2820, %v2824
    %v2908 = vrot.slane %v2907, 4
    %v2909 = vmax.f32 %v2907, %v2908
    %v2910 = vrot.slane %v2909, 2
    %v2911 = vmax.f32 %v2909, %v2910
    %v2912 = vrot.slane %v2911, 1
    %v2913 = vmax.f32 %v2911, %v2912
    %v2914 = vmax.f32 %v2828, %v2832
    %v2915 = vrot.slane %v2914, 4
    %v2916 = vmax.f32 %v2914, %v2915
    %v2917 = vrot.slane %v2916, 2
    %v2918 = vmax.f32 %v2916, %v2917
    %v2919 = vrot.slane %v2918, 1
    %v2920 = vmax.f32 %v2918, %v2919
    %v2921 = vmax.f32 %v2830, %v2834
    %v2922 = vrot.slane %v2921, 4
    %v2923 = vmax.f32 %v2921, %v2922
    %v2924 = vrot.slane %v2923, 2
    %v2925 = vmax.f32 %v2923, %v2924
    %v2926 = vrot.slane %v2925, 1
    %v2927 = vmax.f32 %v2925, %v2926
    %v2928 = vmax.f32 %v2838, %v2842
    %v2929 = vrot.slane %v2928, 4
    %v2930 = vmax.f32 %v2928, %v2929
    %v2931 = vrot.slane %v2930, 2
    %v2932 = vmax.f32 %v2930, %v2931
    %v2933 = vrot.slane %v2932, 1
    %v2934 = vmax.f32 %v2932, %v2933
    %v2935 = vmax.f32 %v2840, %v2844
    %v2936 = vrot.slane %v2935, 4
    %v2937 = vmax.f32 %v2935, %v2936
    %v2938 = vrot.slane %v2937, 2
    %v2939 = vmax.f32 %v2937, %v2938
    %v2940 = vrot.slane %v2939, 1
    %v2941 = vmax.f32 %v2939, %v2940
    %v2942 = vmax.f32 %v2848, %v2852
    %v2943 = vrot.slane %v2942, 4
    %v2944 = vmax.f32 %v2942, %v2943
    %v2945 = vrot.slane %v2944, 2
    %v2946 = vmax.f32 %v2944, %v2945
    %v2947 = vrot.slane %v2946, 1
    %v2948 = vmax.f32 %v2946, %v2947
    %v2949 = vmax.f32 %v2850, %v2854
    %v2950 = vrot.slane %v2949, 4
    %v2951 = vmax.f32 %v2949, %v2950
    %v2952 = vrot.slane %v2951, 2
    %v2953 = vmax.f32 %v2951, %v2952
    %v2954 = vrot.slane %v2953, 1
    %v2955 = vmax.f32 %v2953, %v2954
    %v2956 = vmax.f32 %v2858, %v2862
    %v2957 = vrot.slane %v2956, 4
    %v2958 = vmax.f32 %v2956, %v2957
    %v2959 = vrot.slane %v2958, 2
    %v2960 = vmax.f32 %v2958, %v2959
    %v2961 = vrot.slane %v2960, 1
    %v2962 = vmax.f32 %v2960, %v2961
    %v2963 = vmax.f32 %v2860, %v2864
    %v2964 = vrot.slane %v2963, 4
    %v2965 = vmax.f32 %v2963, %v2964
    %v2966 = vrot.slane %v2965, 2
    %v2967 = vmax.f32 %v2965, %v2966
    %v2968 = vrot.slane %v2967, 1
    %v2969 = vmax.f32 %v2967, %v2968
    %v2970 = vmax.f32 %v2868, %v2872
    %v2971 = vrot.slane %v2970, 4
    %v2972 = vmax.f32 %v2970, %v2971
    %v2973 = vrot.slane %v2972, 2
    %v2974 = vmax.f32 %v2972, %v2973
    %v2975 = vrot.slane %v2974, 1
    %v2976 = vmax.f32 %v2974, %v2975
    %v2977 = vmax.f32 %v2870, %v2874
    %v2978 = vrot.slane %v2977, 4
    %v2979 = vmax.f32 %v2977, %v2978
    %v2980 = vrot.slane %v2979, 2
    %v2981 = vmax.f32 %v2979, %v2980
    %v2982 = vrot.slane %v2981, 1
    %v2983 = vmax.f32 %v2981, %v2982
    %v2984 = vmax.f32 %v2878, %v2882
    %v2985 = vrot.slane %v2984, 4
    %v2986 = vmax.f32 %v2984, %v2985
    %v2987 = vrot.slane %v2986, 2
    %v2988 = vmax.f32 %v2986, %v2987
    %v2989 = vrot.slane %v2988, 1
    %v2990 = vmax.f32 %v2988, %v2989
    %v2991 = vmax.f32 %v2880, %v2884
    %v2992 = vrot.slane %v2991, 4
    %v2993 = vmax.f32 %v2991, %v2992
    %v2994 = vrot.slane %v2993, 2
    %v2995 = vmax.f32 %v2993, %v2994
    %v2996 = vrot.slane %v2995, 1
    %v2997 = vmax.f32 %v2995, %v2996
    %v3014 = vsel %vm941, %v2906, %v2892
    %v3015 = vsel %vm943, %v2920, %v3014
    %v3016 = vsel %vm945, %v2934, %v3015
    %v3017 = vsel %vm947, %v2948, %v3016
    %v3018 = vsel %vm949, %v2962, %v3017
    %v3019 = vsel %vm951, %v2976, %v3018
    %v3020 = vsel %vm953, %v2990, %v3019
    %v3021 = vsel %vm941, %v2913, %v2899
    %v3022 = vsel %vm943, %v2927, %v3021
    %v3023 = vsel %vm945, %v2941, %v3022
    %v3024 = vsel %vm947, %v2955, %v3023
    %v3025 = vsel %vm949, %v2969, %v3024
    %v3026 = vsel %vm951, %v2983, %v3025
    %v3027 = vsel %vm953, %v2997, %v3026
    %3030 = vst [vmem:[#allocation13] sm:$0xff] %v3020
    %3031 = vst [vmem:[#allocation13 + $0x8] sm:$0xff] %v3027
    // Predicated region
    $region66: #{tpu_custom_call.1} parent=1 // pred_check
      _
    $region67: #{tpu_custom_call.1} parent=1 // pred_check_branch
      %3033 = sbr.rel (0) target = $region69
    $region68: #{tpu_custom_call.1} parent=1 // pred_region
      %s3035 = ssub.s32 256, 256
      %3036 = vsyncadd [#allocation4], %s3035
      %s3038 = sshll.u32 [#allocation13], 4
      %s3039 = int_to_ptr.vmem [resolvable:$true] %s3038
      %3041 = dma.vmem_to_hbm [thread:$0]  %s3039, 256, %s10, [#allocation4]
    $region69: #{tpu_custom_call.1} parent=1 // pred_fallthru
      _
    // Predicated region
    $region70: #{tpu_custom_call.1} parent=1 // pred_check
      _
    $region71: #{tpu_custom_call.1} parent=1 // pred_check_branch
      %3043 = sbr.rel (0) target = $region73
    $region72: #{tpu_custom_call.1} parent=1 // pred_region
      %3044 = dma.done [#allocation4], 256
    $region73: #{tpu_custom_call.1} parent=1 // pred_fallthru
      _
    %3045 = vsyncpa [#allocation3], 1
    %3046 = vsyncpa [#allocation6], 1
    %3047 = vsyncpa [#allocation9], 1
    %3048 = vsyncpa [#allocation12], 1
    %3049 = vsyncpa [#allocation4], 1

// kernel: tpu_custom_call.1
$region0: #{tpu_custom_call.1}
  #allocation0 [shape = 'u32[]', space=smem, size = 0x4, offset = 0x4, fixed_abs, tag = 'smem constant byte address 0x4 - core index']
  #allocation1 [shape = 'u32[144,128]{1,0:T(1,128)}', space=vmem, size = 0x12000, scoped, tag = 'internal scratch']
  %s0 = inlined_call_operand.hbm [shape: f32[1,8,128], index: 0, kind: input, shape index: {}]
  %s1 = inlined_call_operand.hbm [shape: f32[3,128], index: 1, kind: input, shape index: {}]
  %s2 = inlined_call_operand.vmem [shape: f32[1,128], index: 2, kind: input, shape index: {}]
  %s3 = inlined_call_operand.hbm [shape: bf16[128,256], index: 3, kind: input, shape index: {}]
  %s4 = inlined_call_operand.vmem [shape: f32[1,256], index: 4, kind: input, shape index: {}]
  %s5 = inlined_call_operand.hbm [shape: bf16[256,512], index: 5, kind: input, shape index: {}]
  %s6 = inlined_call_operand.hbm [shape: bf16[128,512], index: 6, kind: input, shape index: {}]
  %s7 = inlined_call_operand.vmem [shape: f32[1,512], index: 7, kind: input, shape index: {}]
  %s8 = inlined_call_operand.hbm [shape: bf16[512,256], index: 8, kind: input, shape index: {}]
  %s9 = inlined_call_operand.vmem [shape: f32[1,256], index: 9, kind: input, shape index: {}]
  %s10 = inlined_call_operand.hbm [shape: f32[1,8,256], index: 10, kind: output, shape index: {}]
  %s11 = sld [smem:[#allocation0]]
  $region74: #{tpu_custom_call.1} parent=0
    _
  %s13 = ssub.s32 1, %s11
  %s14 = scalar_select 0, %s13, %s11
  $region1: #{tpu_custom_call.1} parent=0
    #allocation2 [shape = 'u8[4096]{0}', space=vmem, size = 0x1000, scoped, tag = 'input window, operand 0, single buffered']
    #allocation3 [shape = 's32[1]{0}', space=sflag, size = 0x4, scoped, tag = 'scoped memory for tpu_custom_call.1']
    #allocation4 [shape = 's32[1]{0}', space=sflag, size = 0x4, scoped, tag = 'scoped memory for tpu_custom_call.1']
    #allocation5 [shape = 'u8[2048]{0}', space=vmem, size = 0x800, scoped, tag = 'input window, operand 1, single buffered']
    #allocation6 [shape = 's32[1]{0}', space=sflag, size = 0x4, scoped, tag = 'scoped memory for tpu_custom_call.1']
    #allocation7 [shape = 'u8[65536]{0}', space=vmem, size = 0x10000, scoped, tag = 'input window, operand 3, single buffered']
    #allocation8 [shape = 'u8[262144]{0}', space=vmem, size = 0x40000, scoped, tag = 'input window, operand 5, single buffered']
    #allocation9 [shape = 's32[1]{0}', space=sflag, size = 0x4, scoped, tag = 'scoped memory for tpu_custom_call.1']
    #allocation10 [shape = 'u8[131072]{0}', space=vmem, size = 0x20000, scoped, tag = 'input window, operand 6, single buffered']
    #allocation11 [shape = 'u8[262144]{0}', space=vmem, size = 0x40000, scoped, tag = 'input window, operand 8, single buffered']
    #allocation12 [shape = 's32[1]{0}', space=sflag, size = 0x4, scoped, tag = 'scoped memory for tpu_custom_call.1']
    #allocation13 [shape = 'u8[8192]{0}', space=vmem, size = 0x2000, scoped, tag = 'output window, operand 0, single buffered']
    %15 = vsyncpa [#allocation3], 0
    %16 = vsyncpa [#allocation6], 0
    %17 = vsyncpa [#allocation9], 0
    %18 = vsyncpa [#allocation12], 0
    %19 = vsyncpa [#allocation4], 0
    // Predicated region
    $region2: #{tpu_custom_call.1} parent=1 // pred_check
      _
    $region3: #{tpu_custom_call.1} parent=1 // pred_check_branch
      %21 = sbr.rel (0) target = $region5
    $region4: #{tpu_custom_call.1} parent=1 // pred_region
      %s23 = ssub.s32 128, 128
      %24 = vsyncadd [#allocation3], %s23
      %s26 = sshll.u32 [#allocation2], 4
      %s27 = int_to_ptr.vmem [resolvable:$true] %s26
      %29 = dma.hbm_to_vmem [thread:$0]  %s0, 128, %s27, [#allocation3]
    $region5: #{tpu_custom_call.1} parent=1 // pred_fallthru
      _
    // Predicated region
    $region6: #{tpu_custom_call.1} parent=1 // pred_check
      _
    $region7: #{tpu_custom_call.1} parent=1 // pred_check_branch
      %31 = sbr.rel (0) target = $region9
    $region8: #{tpu_custom_call.1} parent=1 // pred_region
      %s33 = ssub.s32 64, 64
      %34 = vsyncadd [#allocation6], %s33
      %s36 = sshll.u32 [#allocation5], 4
      %s37 = int_to_ptr.vmem [resolvable:$true] %s36
      %39 = dma.hbm_to_vmem [thread:$0]  %s1, 64, %s37, [#allocation6]
    $region9: #{tpu_custom_call.1} parent=1 // pred_fallthru
      _
    // Predicated region
    $region10: #{tpu_custom_call.1} parent=1 // pred_check
      _
    $region11: #{tpu_custom_call.1} parent=1 // pred_check_branch
      %41 = sbr.rel (0) target = $region13
    $region12: #{tpu_custom_call.1} parent=1 // pred_region
      _
    $region13: #{tpu_custom_call.1} parent=1 // pred_fallthru
      _
    // Predicated region
    $region14: #{tpu_custom_call.1} parent=1 // pred_check
      _
    $region15: #{tpu_custom_call.1} parent=1 // pred_check_branch
      %43 = sbr.rel (0) target = $region17
    $region16: #{tpu_custom_call.1} parent=1 // pred_region
      %s45 = ssub.s32 2048, 2048
      %46 = vsyncadd [#allocation6], %s45
      %s47 = sshll.u32 [#allocation7], 4
      %s48 = int_to_ptr.vmem [resolvable:$true] %s47
      %53 = dma.hbm_to_vmem [thread:$0]  %s3, 2048, %s48, [#allocation6], 128, 128, 8
    $region17: #{tpu_custom_call.1} parent=1 // pred_fallthru
      _
    // Predicated region
    $region18: #{tpu_custom_call.1} parent=1 // pred_check
      _
    $region19: #{tpu_custom_call.1} parent=1 // pred_check_branch
      %55 = sbr.rel (0) target = $region21
    $region20: #{tpu_custom_call.1} parent=1 // pred_region
      _
    $region21: #{tpu_custom_call.1} parent=1 // pred_fallthru
      _
    // Predicated region
    $region22: #{tpu_custom_call.1} parent=1 // pred_check
      _
    $region23: #{tpu_custom_call.1} parent=1 // pred_check_branch
      %57 = sbr.rel (0) target = $region25
    $region24: #{tpu_custom_call.1} parent=1 // pred_region
      %s59 = ssub.s32 8192, 8192
      %60 = vsyncadd [#allocation9], %s59
      %s61 = sshll.u32 [#allocation8], 4
      %s62 = int_to_ptr.vmem [resolvable:$true] %s61
      %67 = dma.hbm_to_vmem [thread:$0]  %s5, 8192, %s62, [#allocation9], 256, 256, 16
    $region25: #{tpu_custom_call.1} parent=1 // pred_fallthru
      _
    // Predicated region
    $region26: #{tpu_custom_call.1} parent=1 // pred_check
      _
    $region27: #{tpu_custom_call.1} parent=1 // pred_check_branch
      %69 = sbr.rel (0) target = $region29
    $region28: #{tpu_custom_call.1} parent=1 // pred_region
      %s71 = ssub.s32 4096, 4096
      %72 = vsyncadd [#allocation9], %s71
      %s73 = sshll.u32 [#allocation10], 4
      %s74 = int_to_ptr.vmem [resolvable:$true] %s73
      %79 = dma.hbm_to_vmem [thread:$0]  %s6, 4096, %s74, [#allocation9], 256, 256, 16
    $region29: #{tpu_custom_call.1} parent=1 // pred_fallthru
      _
    // Predicated region
    $region30: #{tpu_custom_call.1} parent=1 // pred_check
      _
    $region31: #{tpu_custom_call.1} parent=1 // pred_check_branch
      %81 = sbr.rel (0) target = $region33
    $region32: #{tpu_custom_call.1} parent=1 // pred_region
      _
    $region33: #{tpu_custom_call.1} parent=1 // pred_fallthru
      _
    // Predicated region
    $region34: #{tpu_custom_call.1} parent=1 // pred_check
      _
    $region35: #{tpu_custom_call.1} parent=1 // pred_check_branch
      %83 = sbr.rel (0) target = $region37
    $region36: #{tpu_custom_call.1} parent=1 // pred_region
      %s85 = ssub.s32 8192, 8192
      %86 = vsyncadd [#allocation12], %s85
      %s87 = sshll.u32 [#allocation11], 4
      %s88 = int_to_ptr.vmem [resolvable:$true] %s87
      %93 = dma.hbm_to_vmem [thread:$0]  %s8, 8192, %s88, [#allocation12], 128, 128, 8
    $region37: #{tpu_custom_call.1} parent=1 // pred_fallthru
      _
    // Predicated region
    $region38: #{tpu_custom_call.1} parent=1 // pred_check
      _
    $region39: #{tpu_custom_call.1} parent=1 // pred_check_branch
      %95 = sbr.rel (0) target = $region41
    $region40: #{tpu_custom_call.1} parent=1 // pred_region
      _
    $region41: #{tpu_custom_call.1} parent=1 // pred_fallthru
      _
    // Predicated region
    $region42: #{tpu_custom_call.1} parent=1 // pred_check
      _
    $region43: #{tpu_custom_call.1} parent=1 // pred_check_branch
      %97 = sbr.rel (0) target = $region45
    $region44: #{tpu_custom_call.1} parent=1 // pred_region
      %98 = dma.done [#allocation3], 128
    $region45: #{tpu_custom_call.1} parent=1 // pred_fallthru
      _
    // Predicated region
    $region46: #{tpu_custom_call.1} parent=1 // pred_check
      _
    $region47: #{tpu_custom_call.1} parent=1 // pred_check_branch
      %100 = sbr.rel (0) target = $region49
    $region48: #{tpu_custom_call.1} parent=1 // pred_region
      %101 = dma.done [#allocation6], 64
    $region49: #{tpu_custom_call.1} parent=1 // pred_fallthru
      _
    // Predicated region
    $region50: #{tpu_custom_call.1} parent=1 // pred_check
      _
    $region51: #{tpu_custom_call.1} parent=1 // pred_check_branch
      %103 = sbr.rel (0) target = $region53
    $region52: #{tpu_custom_call.1} parent=1 // pred_region
      %104 = dma.done [#allocation6], 2048
    $region53: #{tpu_custom_call.1} parent=1 // pred_fallthru
      _
    // Predicated region
    $region54: #{tpu_custom_call.1} parent=1 // pred_check
      _
    $region55: #{tpu_custom_call.1} parent=1 // pred_check_branch
      %106 = sbr.rel (0) target = $region57
    $region56: #{tpu_custom_call.1} parent=1 // pred_region
      %107 = dma.done [#allocation9], 8192
    $region57: #{tpu_custom_call.1} parent=1 // pred_fallthru
      _
    // Predicated region
    $region58: #{tpu_custom_call.1} parent=1 // pred_check
      _
    $region59: #{tpu_custom_call.1} parent=1 // pred_check_branch
      %109 = sbr.rel (0) target = $region61
    $region60: #{tpu_custom_call.1} parent=1 // pred_region
      %110 = dma.done [#allocation9], 4096
    $region61: #{tpu_custom_call.1} parent=1 // pred_fallthru
      _
    // Predicated region
    $region62: #{tpu_custom_call.1} parent=1 // pred_check
      _
    $region63: #{tpu_custom_call.1} parent=1 // pred_check_branch
      %112 = sbr.rel (0) target = $region65
    $region64: #{tpu_custom_call.1} parent=1 // pred_region
      %113 = dma.done [#allocation12], 8192
    $region65: #{tpu_custom_call.1} parent=1 // pred_fallthru
      _
    %v115 = vld [vmem:[#allocation2] sm:$0xff]
    %116 = vxpose.xlu0.b32.start [1/16] %v115, 128
    %117 = vxpose.xlu0.b32.cont [2/16] 0.0, 128
    %118 = vxpose.xlu0.b32.cont [3/16] 0.0, 128
    %119 = vxpose.xlu0.b32.cont [4/16] 0.0, 128
    %120 = vxpose.xlu0.b32.cont [5/16] 0.0, 128
    %121 = vxpose.xlu0.b32.cont [6/16] 0.0, 128
    %122 = vxpose.xlu0.b32.cont [7/16] 0.0, 128
    %123 = vxpose.xlu0.b32.cont [8/16] 0.0, 128
    %124 = vxpose.xlu0.b32.cont [9/16] 0.0, 128
    %125 = vxpose.xlu0.b32.cont [10/16] 0.0, 128
    %126 = vxpose.xlu0.b32.cont [11/16] 0.0, 128
    %127 = vxpose.xlu0.b32.cont [12/16] 0.0, 128
    %128 = vxpose.xlu0.b32.cont [13/16] 0.0, 128
    %129 = vxpose.xlu0.b32.cont [14/16] 0.0, 128
    %130 = vxpose.xlu0.b32.cont [15/16] 0.0, 128
    %131 = vxpose.xlu0.b32.end [16/16] 0.0, 128
    %v132 = vpop.trf.xlu0
    %v133 = vpop.trf.xlu0
    %v134 = vpop.trf.xlu0
    %v135 = vpop.trf.xlu0
    %v136 = vpop.trf.xlu0
    %v137 = vpop.trf.xlu0
    %v138 = vpop.trf.xlu0
    %v139 = vpop.trf.xlu0
    %v140 = vpop.trf.xlu0
    %v141 = vpop.trf.xlu0
    %v142 = vpop.trf.xlu0
    %v143 = vpop.trf.xlu0
    %v144 = vpop.trf.xlu0
    %v145 = vpop.trf.xlu0
    %v146 = vpop.trf.xlu0
    %v147 = vpop.trf.xlu0
    %v148 = vld [vmem:[#allocation5] sm:$0x7]
    %150 = vset.pattern.permute.xlu0 0
    %151 = vperm.xlu0 %150, %v132
    %v152 = vpop.permute.xlu0 %151
    %155 = vset.pattern.permute.xlu0 0
    %156 = vperm.xlu0 %155, %v133
    %v157 = vpop.permute.xlu0 %156
    %160 = vset.pattern.permute.xlu0 0
    %161 = vperm.xlu0 %160, %v134
    %v162 = vpop.permute.xlu0 %161
    %165 = vset.pattern.permute.xlu0 0
    %166 = vperm.xlu0 %165, %v135
    %v167 = vpop.permute.xlu0 %166
    %170 = vset.pattern.permute.xlu0 0
    %171 = vperm.xlu0 %170, %v136
    %v172 = vpop.permute.xlu0 %171
    %175 = vset.pattern.permute.xlu0 0
    %176 = vperm.xlu0 %175, %v137
    %v177 = vpop.permute.xlu0 %176
    %180 = vset.pattern.permute.xlu0 0
    %181 = vperm.xlu0 %180, %v138
    %v182 = vpop.permute.xlu0 %181
    %185 = vset.pattern.permute.xlu0 0
    %186 = vperm.xlu0 %185, %v139
    %v187 = vpop.permute.xlu0 %186
    %190 = vset.pattern.permute.xlu0 0
    %191 = vperm.xlu0 %190, %v140
    %v192 = vpop.permute.xlu0 %191
    %195 = vset.pattern.permute.xlu0 0
    %196 = vperm.xlu0 %195, %v141
    %v197 = vpop.permute.xlu0 %196
    %200 = vset.pattern.permute.xlu0 0
    %201 = vperm.xlu0 %200, %v142
    %v202 = vpop.permute.xlu0 %201
    %205 = vset.pattern.permute.xlu0 0
    %206 = vperm.xlu0 %205, %v143
    %v207 = vpop.permute.xlu0 %206
    %210 = vset.pattern.permute.xlu0 0
    %211 = vperm.xlu0 %210, %v144
    %v212 = vpop.permute.xlu0 %211
    %215 = vset.pattern.permute.xlu0 0
    %216 = vperm.xlu0 %215, %v145
    %v217 = vpop.permute.xlu0 %216
    %220 = vset.pattern.permute.xlu0 0
    %221 = vperm.xlu0 %220, %v146
    %v222 = vpop.permute.xlu0 %221
    %225 = vset.pattern.permute.xlu0 0
    %226 = vperm.xlu0 %225, %v147
    %v227 = vpop.permute.xlu0 %226
    %v229 = vlaneseq
    %v230 = vshrl.u32 %v229, 7
    %v231 = vsub.s32 0, %v230
    %v232 = vrot.slane %v148, %v231
    %v233 = vmul.f32 %v152, %v232
    %v234 = vmul.f32 %v157, %v232
    %v235 = vmul.f32 %v162, %v232
    %v236 = vmul.f32 %v167, %v232
    %v237 = vmul.f32 %v172, %v232
    %v238 = vmul.f32 %v177, %v232
    %v239 = vmul.f32 %v182, %v232
    %v240 = vmul.f32 %v187, %v232
    %v241 = vmul.f32 %v192, %v232
    %v242 = vmul.f32 %v197, %v232
    %v243 = vmul.f32 %v202, %v232
    %v244 = vmul.f32 %v207, %v232
    %v245 = vmul.f32 %v212, %v232
    %v246 = vmul.f32 %v217, %v232
    %v247 = vmul.f32 %v222, %v232
    %v248 = vmul.f32 %v227, %v232
    %249 = vset.pattern.permute.xlu0 1
    %250 = vperm.xlu0 %249, %v132
    %v251 = vpop.permute.xlu0 %250
    %253 = vset.pattern.permute.xlu0 1
    %254 = vperm.xlu0 %253, %v133
    %v255 = vpop.permute.xlu0 %254
    %257 = vset.pattern.permute.xlu0 1
    %258 = vperm.xlu0 %257, %v134
    %v259 = vpop.permute.xlu0 %258
    %261 = vset.pattern.permute.xlu0 1
    %262 = vperm.xlu0 %261, %v135
    %v263 = vpop.permute.xlu0 %262
    %265 = vset.pattern.permute.xlu0 1
    %266 = vperm.xlu0 %265, %v136
    %v267 = vpop.permute.xlu0 %266
    %269 = vset.pattern.permute.xlu0 1
    %270 = vperm.xlu0 %269, %v137
    %v271 = vpop.permute.xlu0 %270
    %273 = vset.pattern.permute.xlu0 1
    %274 = vperm.xlu0 %273, %v138
    %v275 = vpop.permute.xlu0 %274
    %277 = vset.pattern.permute.xlu0 1
    %278 = vperm.xlu0 %277, %v139
    %v279 = vpop.permute.xlu0 %278
    %281 = vset.pattern.permute.xlu0 1
    %282 = vperm.xlu0 %281, %v140
    %v283 = vpop.permute.xlu0 %282
    %285 = vset.pattern.permute.xlu0 1
    %286 = vperm.xlu0 %285, %v141
    %v287 = vpop.permute.xlu0 %286
    %289 = vset.pattern.permute.xlu0 1
    %290 = vperm.xlu0 %289, %v142
    %v291 = vpop.permute.xlu0 %290
    %293 = vset.pattern.permute.xlu0 1
    %294 = vperm.xlu0 %293, %v143
    %v295 = vpop.permute.xlu0 %294
    %297 = vset.pattern.permute.xlu0 1
    %298 = vperm.xlu0 %297, %v144
    %v299 = vpop.permute.xlu0 %298
    %301 = vset.pattern.permute.xlu0 1
    %302 = vperm.xlu0 %301, %v145
    %v303 = vpop.permute.xlu0 %302
    %305 = vset.pattern.permute.xlu0 1
    %306 = vperm.xlu0 %305, %v146
    %v307 = vpop.permute.xlu0 %306
    %309 = vset.pattern.permute.xlu0 1
    %310 = vperm.xlu0 %309, %v147
    %v311 = vpop.permute.xlu0 %310
    %v313 = vlaneseq
    %v314 = vshrl.u32 %v313, 7
    %v315 = vsub.s32 1, %v314
    %v316 = vrot.slane %v148, %v315
    %v317 = vmul.f32 %v251, %v316
    %v318 = vmul.f32 %v255, %v316
    %v319 = vmul.f32 %v259, %v316
    %v320 = vmul.f32 %v263, %v316
    %v321 = vmul.f32 %v267, %v316
    %v322 = vmul.f32 %v271, %v316
    %v323 = vmul.f32 %v275, %v316
    %v324 = vmul.f32 %v279, %v316
    %v325 = vmul.f32 %v283, %v316
    %v326 = vmul.f32 %v287, %v316
    %v327 = vmul.f32 %v291, %v316
    %v328 = vmul.f32 %v295, %v316
    %v329 = vmul.f32 %v299, %v316
    %v330 = vmul.f32 %v303, %v316
    %v331 = vmul.f32 %v307, %v316
    %v332 = vmul.f32 %v311, %v316
    %v333 = vadd.f32 %v233, %v317
    %v334 = vadd.f32 %v234, %v318
    %v335 = vadd.f32 %v235, %v319
    %v336 = vadd.f32 %v236, %v320
    %v337 = vadd.f32 %v237, %v321
    %v338 = vadd.f32 %v238, %v322
    %v339 = vadd.f32 %v239, %v323
    %v340 = vadd.f32 %v240, %v324
    %v341 = vadd.f32 %v241, %v325
    %v342 = vadd.f32 %v242, %v326
    %v343 = vadd.f32 %v243, %v327
    %v344 = vadd.f32 %v244, %v328
    %v345 = vadd.f32 %v245, %v329
    %v346 = vadd.f32 %v246, %v330
    %v347 = vadd.f32 %v247, %v331
    %v348 = vadd.f32 %v248, %v332
    %349 = vset.pattern.permute.xlu0 2
    %350 = vperm.xlu0 %349, %v132
    %v351 = vpop.permute.xlu0 %350
    %353 = vset.pattern.permute.xlu0 2
    %354 = vperm.xlu0 %353, %v133
    %v355 = vpop.permute.xlu0 %354
    %357 = vset.pattern.permute.xlu0 2
    %358 = vperm.xlu0 %357, %v134
    %v359 = vpop.permute.xlu0 %358
    %361 = vset.pattern.permute.xlu0 2
    %362 = vperm.xlu0 %361, %v135
    %v363 = vpop.permute.xlu0 %362
    %365 = vset.pattern.permute.xlu0 2
    %366 = vperm.xlu0 %365, %v136
    %v367 = vpop.permute.xlu0 %366
    %369 = vset.pattern.permute.xlu0 2
    %370 = vperm.xlu0 %369, %v137
    %v371 = vpop.permute.xlu0 %370
    %373 = vset.pattern.permute.xlu0 2
    %374 = vperm.xlu0 %373, %v138
    %v375 = vpop.permute.xlu0 %374
    %377 = vset.pattern.permute.xlu0 2
    %378 = vperm.xlu0 %377, %v139
    %v379 = vpop.permute.xlu0 %378
    %381 = vset.pattern.permute.xlu0 2
    %382 = vperm.xlu0 %381, %v140
    %v383 = vpop.permute.xlu0 %382
    %385 = vset.pattern.permute.xlu0 2
    %386 = vperm.xlu0 %385, %v141
    %v387 = vpop.permute.xlu0 %386
    %389 = vset.pattern.permute.xlu0 2
    %390 = vperm.xlu0 %389, %v142
    %v391 = vpop.permute.xlu0 %390
    %393 = vset.pattern.permute.xlu0 2
    %394 = vperm.xlu0 %393, %v143
    %v395 = vpop.permute.xlu0 %394
    %397 = vset.pattern.permute.xlu0 2
    %398 = vperm.xlu0 %397, %v144
    %v399 = vpop.permute.xlu0 %398
    %401 = vset.pattern.permute.xlu0 2
    %402 = vperm.xlu0 %401, %v145
    %v403 = vpop.permute.xlu0 %402
    %405 = vset.pattern.permute.xlu0 2
    %406 = vperm.xlu0 %405, %v146
    %v407 = vpop.permute.xlu0 %406
    %409 = vset.pattern.permute.xlu0 2
    %410 = vperm.xlu0 %409, %v147
    %v411 = vpop.permute.xlu0 %410
    %v413 = vlaneseq
    %v414 = vshrl.u32 %v413, 7
    %v415 = vsub.s32 2, %v414
    %v416 = vrot.slane %v148, %v415
    %v417 = vmul.f32 %v351, %v416
    %v418 = vmul.f32 %v355, %v416
    %v419 = vmul.f32 %v359, %v416
    %v420 = vmul.f32 %v363, %v416
    %v421 = vmul.f32 %v367, %v416
    %v422 = vmul.f32 %v371, %v416
    %v423 = vmul.f32 %v375, %v416
    %v424 = vmul.f32 %v379, %v416
    %v425 = vmul.f32 %v383, %v416
    %v426 = vmul.f32 %v387, %v416
    %v427 = vmul.f32 %v391, %v416
    %v428 = vmul.f32 %v395, %v416
    %v429 = vmul.f32 %v399, %v416
    %v430 = vmul.f32 %v403, %v416
    %v431 = vmul.f32 %v407, %v416
    %v432 = vmul.f32 %v411, %v416
    %v433 = vadd.f32 %v333, %v417
    %v434 = vadd.f32 %v334, %v418
    %v435 = vadd.f32 %v335, %v419
    %v436 = vadd.f32 %v336, %v420
    %v437 = vadd.f32 %v337, %v421
    %v438 = vadd.f32 %v338, %v422
    %v439 = vadd.f32 %v339, %v423
    %v440 = vadd.f32 %v340, %v424
    %v441 = vadd.f32 %v341, %v425
    %v442 = vadd.f32 %v342, %v426
    %v443 = vadd.f32 %v343, %v427
    %v444 = vadd.f32 %v344, %v428
    %v445 = vadd.f32 %v345, %v429
    %v446 = vadd.f32 %v346, %v430
    %v447 = vadd.f32 %v347, %v431
    %v448 = vadd.f32 %v348, %v432
    %v449 = vld [vmem:[%s2] sm:$0x1]
    %v451 = vlaneseq
    %v452 = vshrl.u32 %v451, 7
    %v453 = vsub.s32 0, %v452
    %v454 = vrot.slane %v449, %v453
    %v456 = vadd.f32 %v433, %v454
    %v457 = vadd.f32 %v434, %v454
    %v458 = vadd.f32 %v435, %v454
    %v459 = vadd.f32 %v436, %v454
    %v460 = vadd.f32 %v437, %v454
    %v461 = vadd.f32 %v438, %v454
    %v462 = vadd.f32 %v439, %v454
    %v463 = vadd.f32 %v440, %v454
    %v464 = vadd.f32 %v441, %v454
    %v465 = vadd.f32 %v442, %v454
    %v466 = vadd.f32 %v443, %v454
    %v467 = vadd.f32 %v444, %v454
    %v468 = vadd.f32 %v445, %v454
    %v469 = vadd.f32 %v446, %v454
    %v470 = vadd.f32 %v447, %v454
    %v471 = vadd.f32 %v448, %v454
    %v472 = vmax.f32 %v456, 0.0
    %v473 = vmax.f32 %v457, 0.0
    %v474 = vmax.f32 %v458, 0.0
    %v475 = vmax.f32 %v459, 0.0
    %v476 = vmax.f32 %v460, 0.0
    %v477 = vmax.f32 %v461, 0.0
    %v478 = vmax.f32 %v462, 0.0
    %v479 = vmax.f32 %v463, 0.0
    %v480 = vmax.f32 %v464, 0.0
    %v481 = vmax.f32 %v465, 0.0
    %v482 = vmax.f32 %v466, 0.0
    %v483 = vmax.f32 %v467, 0.0
    %v484 = vmax.f32 %v468, 0.0
    %v485 = vmax.f32 %v469, 0.0
    %v486 = vmax.f32 %v470, 0.0
    %v487 = vmax.f32 %v471, 0.0
    %v488 = vpack.c.bf16 %v473, %v472
    %v489 = vpack.c.bf16 %v475, %v474
    %v490 = vpack.c.bf16 %v477, %v476
    %v491 = vpack.c.bf16 %v479, %v478
    %v492 = vpack.c.bf16 %v481, %v480
    %v493 = vpack.c.bf16 %v483, %v482
    %v494 = vpack.c.bf16 %v485, %v484
    %v495 = vpack.c.bf16 %v487, %v486
    %v496 = vld [vmem:[#allocation7] sm:$0xff]
    %v497 = vld [vmem:[#allocation7 + $0x8] sm:$0xff]
    %v498 = vld [vmem:[#allocation7 + $0x10] sm:$0xff]
    %v499 = vld [vmem:[#allocation7 + $0x18] sm:$0xff]
    %v500 = vld [vmem:[#allocation7 + $0x20] sm:$0xff]
    %v501 = vld [vmem:[#allocation7 + $0x28] sm:$0xff]
    %v502 = vld [vmem:[#allocation7 + $0x30] sm:$0xff]
    %v503 = vld [vmem:[#allocation7 + $0x38] sm:$0xff]
    %v504 = vld [vmem:[#allocation7 + $0x40] sm:$0xff]
    %v505 = vld [vmem:[#allocation7 + $0x48] sm:$0xff]
    %v506 = vld [vmem:[#allocation7 + $0x50] sm:$0xff]
    %v507 = vld [vmem:[#allocation7 + $0x58] sm:$0xff]
    %v508 = vld [vmem:[#allocation7 + $0x60] sm:$0xff]
    %v509 = vld [vmem:[#allocation7 + $0x68] sm:$0xff]
    %v510 = vld [vmem:[#allocation7 + $0x70] sm:$0xff]
    %v511 = vld [vmem:[#allocation7 + $0x78] sm:$0xff]
    %v512 = vld [vmem:[%s4] sm:$0x3]
    %v514 = vlaneseq
    %v515 = vshrl.u32 %v514, 7
    %v516 = vsub.s32 0, %v515
    %v517 = vrot.slane %v512, %v516
    %v518 = vlaneseq
    %v519 = vshrl.u32 %v518, 7
    %v520 = vsub.s32 1, %v519
    %v521 = vrot.slane %v512, %v520
    %v540 = vunpack.c.l.b16 %v496
    %v541 = vunpack.c.h.b16 %v496
    %v542 = vunpack.c.l.b16 %v497
    %v543 = vunpack.c.h.b16 %v497
    %v544 = vunpack.c.l.b16 %v498
    %v545 = vunpack.c.h.b16 %v498
    %v546 = vunpack.c.l.b16 %v499
    %v547 = vunpack.c.h.b16 %v499
    %v548 = vunpack.c.l.b16 %v500
    %v549 = vunpack.c.h.b16 %v500
    %v550 = vunpack.c.l.b16 %v501
    %v551 = vunpack.c.h.b16 %v501
    %v552 = vunpack.c.l.b16 %v502
    %v553 = vunpack.c.h.b16 %v502
    %v554 = vunpack.c.l.b16 %v503
    %v555 = vunpack.c.h.b16 %v503
    %v556 = vunpack.c.l.b16 %v504
    %v557 = vunpack.c.h.b16 %v504
    %v558 = vunpack.c.l.b16 %v505
    %v559 = vunpack.c.h.b16 %v505
    %v560 = vunpack.c.l.b16 %v506
    %v561 = vunpack.c.h.b16 %v506
    %v562 = vunpack.c.l.b16 %v507
    %v563 = vunpack.c.h.b16 %v507
    %v564 = vunpack.c.l.b16 %v508
    %v565 = vunpack.c.h.b16 %v508
    %v566 = vunpack.c.l.b16 %v509
    %v567 = vunpack.c.h.b16 %v509
    %v568 = vunpack.c.l.b16 %v510
    %v569 = vunpack.c.h.b16 %v510
    %v570 = vunpack.c.l.b16 %v511
    %v571 = vunpack.c.h.b16 %v511
    %v572 = vpack.c.b16 %v542, %v540
    %v573 = vpack.c.b16 %v543, %v541
    %v574 = vpack.c.b16 %v546, %v544
    %v575 = vpack.c.b16 %v547, %v545
    %v576 = vpack.c.b16 %v550, %v548
    %v577 = vpack.c.b16 %v551, %v549
    %v578 = vpack.c.b16 %v554, %v552
    %v579 = vpack.c.b16 %v555, %v553
    %v580 = vpack.c.b16 %v558, %v556
    %v581 = vpack.c.b16 %v559, %v557
    %v582 = vpack.c.b16 %v562, %v560
    %v583 = vpack.c.b16 %v563, %v561
    %v584 = vpack.c.b16 %v566, %v564
    %v585 = vpack.c.b16 %v567, %v565
    %v586 = vpack.c.b16 %v570, %v568
    %v587 = vpack.c.b16 %v571, %v569
    %604 = vmatprep.subr.bf16.mxu0 %v573
    %605 = vmatpush1.bf16.msra.mxu0 %v572
    %606 = vmatprep.subr.bf16.mxu0 %v575
    %607 = vmatpush1.bf16.msra.mxu0 %v574
    %608 = vmatprep.subr.bf16.mxu0 %v577
    %609 = vmatpush1.bf16.msra.mxu0 %v576
    %610 = vmatprep.subr.bf16.mxu0 %v579
    %611 = vmatpush1.bf16.msra.mxu0 %v578
    %612 = vmatprep.subr.bf16.mxu0 %v581
    %613 = vmatpush1.bf16.msra.mxu0 %v580
    %614 = vmatprep.subr.bf16.mxu0 %v583
    %615 = vmatpush1.bf16.msra.mxu0 %v582
    %616 = vmatprep.subr.bf16.mxu0 %v585
    %617 = vmatpush1.bf16.msra.mxu0 %v584
    %618 = vmatprep.subr.bf16.mxu0 %v587
    %619 = vmatpush1.bf16.msra.mxu0 %v586
    %620 = vmatprep.subr.bf16.mxu0 0
    %621 = vmatpush1.bf16.msra.mxu0 0
    %622 = vmatprep.subr.bf16.mxu0 0
    %623 = vmatpush1.bf16.msra.mxu0 0
    %624 = vmatprep.subr.bf16.mxu0 0
    %625 = vmatpush1.bf16.msra.mxu0 0
    %626 = vmatprep.subr.bf16.mxu0 0
    %627 = vmatpush1.bf16.msra.mxu0 0
    %628 = vmatprep.subr.bf16.mxu0 0
    %629 = vmatpush1.bf16.msra.mxu0 0
    %630 = vmatprep.subr.bf16.mxu0 0
    %631 = vmatpush1.bf16.msra.mxu0 0
    %632 = vmatprep.subr.bf16.mxu0 0
    %633 = vmatpush1.bf16.msra.mxu0 0
    %634 = vmatprep.subr.bf16.mxu0 0
    %635 = vmatpush1.bf16.msra.mxu0 0
    %636 = vmatprep.mubr.bf16.mxu0 0
    %637 = vmatmul.mubr.bf16.gmra.mrb[0].mxu0 %v488
    %v638 = vpop.f32.mrb[0].mxu0
    %v639 = vadd.f32 %v517, %v638
    %v640 = vpop.f32.mrb[0].mxu0
    %v641 = vadd.f32 %v521, %v640
    %v642 = vpop.f32.mrb[0].mxu0
    %v643 = vadd.f32 %v517, %v642
    %v644 = vpop.f32.mrb[0].mxu0
    %v645 = vadd.f32 %v521, %v644
    %646 = vmatprep.mubr.bf16.mxu0 0
    %647 = vmatmul.mubr.bf16.gmra.mrb[0].mxu0 %v489
    %v648 = vpop.f32.mrb[0].mxu0
    %v649 = vadd.f32 %v517, %v648
    %v650 = vpop.f32.mrb[0].mxu0
    %v651 = vadd.f32 %v521, %v650
    %v652 = vpop.f32.mrb[0].mxu0
    %v653 = vadd.f32 %v517, %v652
    %v654 = vpop.f32.mrb[0].mxu0
    %v655 = vadd.f32 %v521, %v654
    %656 = vmatprep.mubr.bf16.mxu0 0
    %657 = vmatmul.mubr.bf16.gmra.mrb[0].mxu0 %v490
    %v658 = vpop.f32.mrb[0].mxu0
    %v659 = vadd.f32 %v517, %v658
    %v660 = vpop.f32.mrb[0].mxu0
    %v661 = vadd.f32 %v521, %v660
    %v662 = vpop.f32.mrb[0].mxu0
    %v663 = vadd.f32 %v517, %v662
    %v664 = vpop.f32.mrb[0].mxu0
    %v665 = vadd.f32 %v521, %v664
    %666 = vmatprep.mubr.bf16.mxu0 0
    %667 = vmatmul.mubr.bf16.gmra.mrb[0].mxu0 %v491
    %v668 = vpop.f32.mrb[0].mxu0
    %v669 = vadd.f32 %v517, %v668
    %v670 = vpop.f32.mrb[0].mxu0
    %v671 = vadd.f32 %v521, %v670
    %v672 = vpop.f32.mrb[0].mxu0
    %v673 = vadd.f32 %v517, %v672
    %v674 = vpop.f32.mrb[0].mxu0
    %v675 = vadd.f32 %v521, %v674
    %676 = vmatprep.mubr.bf16.mxu0 0
    %677 = vmatmul.mubr.bf16.gmra.mrb[0].mxu0 %v492
    %v678 = vpop.f32.mrb[0].mxu0
    %v679 = vadd.f32 %v517, %v678
    %v680 = vpop.f32.mrb[0].mxu0
    %v681 = vadd.f32 %v521, %v680
    %v682 = vpop.f32.mrb[0].mxu0
    %v683 = vadd.f32 %v517, %v682
    %v684 = vpop.f32.mrb[0].mxu0
    %v685 = vadd.f32 %v521, %v684
    %686 = vmatprep.mubr.bf16.mxu0 0
    %687 = vmatmul.mubr.bf16.gmra.mrb[0].mxu0 %v493
    %v688 = vpop.f32.mrb[0].mxu0
    %v689 = vadd.f32 %v517, %v688
    %v690 = vpop.f32.mrb[0].mxu0
    %v691 = vadd.f32 %v521, %v690
    %v692 = vpop.f32.mrb[0].mxu0
    %v693 = vadd.f32 %v517, %v692
    %v694 = vpop.f32.mrb[0].mxu0
    %v695 = vadd.f32 %v521, %v694
    %696 = vmatprep.mubr.bf16.mxu0 0
    %697 = vmatmul.mubr.bf16.gmra.mrb[0].mxu0 %v494
    %v698 = vpop.f32.mrb[0].mxu0
    %v699 = vadd.f32 %v517, %v698
    %v700 = vpop.f32.mrb[0].mxu0
    %v701 = vadd.f32 %v521, %v700
    %v702 = vpop.f32.mrb[0].mxu0
    %v703 = vadd.f32 %v517, %v702
    %v704 = vpop.f32.mrb[0].mxu0
    %v705 = vadd.f32 %v521, %v704
    %706 = vmatprep.mubr.bf16.mxu0 0
    %707 = vmatmul.mubr.bf16.gmra.mrb[0].mxu0 %v495
    %v708 = vpop.f32.mrb[0].mxu0
    %v709 = vadd.f32 %v517, %v708
    %v710 = vpop.f32.mrb[0].mxu0
    %v711 = vadd.f32 %v521, %v710
    %v712 = vpop.f32.mrb[0].mxu0
    %v713 = vadd.f32 %v517, %v712
    %v714 = vpop.f32.mrb[0].mxu0
    %v715 = vadd.f32 %v521, %v714
    %716 = vdwg.mxu0
    %v717 = vmax.f32 %v639, %v643
    %v718 = vrot.slane %v717, 4
    %v719 = vmax.f32 %v717, %v718
    %v720 = vrot.slane %v719, 2
    %v721 = vmax.f32 %v719, %v720
    %v722 = vrot.slane %v721, 1
    %v723 = vmax.f32 %v721, %v722
    %v724 = vmax.f32 %v641, %v645
    %v725 = vrot.slane %v724, 4
    %v726 = vmax.f32 %v724, %v725
    %v727 = vrot.slane %v726, 2
    %v728 = vmax.f32 %v726, %v727
    %v729 = vrot.slane %v728, 1
    %v730 = vmax.f32 %v728, %v729
    %v731 = vmax.f32 %v649, %v653
    %v732 = vrot.slane %v731, 4
    %v733 = vmax.f32 %v731, %v732
    %v734 = vrot.slane %v733, 2
    %v735 = vmax.f32 %v733, %v734
    %v736 = vrot.slane %v735, 1
    %v737 = vmax.f32 %v735, %v736
    %v738 = vmax.f32 %v651, %v655
    %v739 = vrot.slane %v738, 4
    %v740 = vmax.f32 %v738, %v739
    %v741 = vrot.slane %v740, 2
    %v742 = vmax.f32 %v740, %v741
    %v743 = vrot.slane %v742, 1
    %v744 = vmax.f32 %v742, %v743
    %v745 = vmax.f32 %v659, %v663
    %v746 = vrot.slane %v745, 4
    %v747 = vmax.f32 %v745, %v746
    %v748 = vrot.slane %v747, 2
    %v749 = vmax.f32 %v747, %v748
    %v750 = vrot.slane %v749, 1
    %v751 = vmax.f32 %v749, %v750
    %v752 = vmax.f32 %v661, %v665
    %v753 = vrot.slane %v752, 4
    %v754 = vmax.f32 %v752, %v753
    %v755 = vrot.slane %v754, 2
    %v756 = vmax.f32 %v754, %v755
    %v757 = vrot.slane %v756, 1
    %v758 = vmax.f32 %v756, %v757
    %v759 = vmax.f32 %v669, %v673
    %v760 = vrot.slane %v759, 4
    %v761 = vmax.f32 %v759, %v760
    %v762 = vrot.slane %v761, 2
    %v763 = vmax.f32 %v761, %v762
    %v764 = vrot.slane %v763, 1
    %v765 = vmax.f32 %v763, %v764
    %v766 = vmax.f32 %v671, %v675
    %v767 = vrot.slane %v766, 4
    %v768 = vmax.f32 %v766, %v767
    %v769 = vrot.slane %v768, 2
    %v770 = vmax.f32 %v768, %v769
    %v771 = vrot.slane %v770, 1
    %v772 = vmax.f32 %v770, %v771
    %v773 = vmax.f32 %v679, %v683
    %v774 = vrot.slane %v773, 4
    %v775 = vmax.f32 %v773, %v774
    %v776 = vrot.slane %v775, 2
    %v777 = vmax.f32 %v775, %v776
    %v778 = vrot.slane %v777, 1
    %v779 = vmax.f32 %v777, %v778
    %v780 = vmax.f32 %v681, %v685
    %v781 = vrot.slane %v780, 4
    %v782 = vmax.f32 %v780, %v781
    %v783 = vrot.slane %v782, 2
    %v784 = vmax.f32 %v782, %v783
    %v785 = vrot.slane %v784, 1
    %v786 = vmax.f32 %v784, %v785
    %v787 = vmax.f32 %v689, %v693
    %v788 = vrot.slane %v787, 4
    %v789 = vmax.f32 %v787, %v788
    %v790 = vrot.slane %v789, 2
    %v791 = vmax.f32 %v789, %v790
    %v792 = vrot.slane %v791, 1
    %v793 = vmax.f32 %v791, %v792
    %v794 = vmax.f32 %v691, %v695
    %v795 = vrot.slane %v794, 4
    %v796 = vmax.f32 %v794, %v795
    %v797 = vrot.slane %v796, 2
    %v798 = vmax.f32 %v796, %v797
    %v799 = vrot.slane %v798, 1
    %v800 = vmax.f32 %v798, %v799
    %v801 = vmax.f32 %v699, %v703
    %v802 = vrot.slane %v801, 4
    %v803 = vmax.f32 %v801, %v802
    %v804 = vrot.slane %v803, 2
    %v805 = vmax.f32 %v803, %v804
    %v806 = vrot.slane %v805, 1
    %v807 = vmax.f32 %v805, %v806
    %v808 = vmax.f32 %v701, %v705
    %v809 = vrot.slane %v808, 4
    %v810 = vmax.f32 %v808, %v809
    %v811 = vrot.slane %v810, 2
    %v812 = vmax.f32 %v810, %v811
    %v813 = vrot.slane %v812, 1
    %v814 = vmax.f32 %v812, %v813
    %v815 = vmax.f32 %v709, %v713
    %v816 = vrot.slane %v815, 4
    %v817 = vmax.f32 %v815, %v816
    %v818 = vrot.slane %v817, 2
    %v819 = vmax.f32 %v817, %v818
    %v820 = vrot.slane %v819, 1
    %v821 = vmax.f32 %v819, %v820
    %v822 = vmax.f32 %v711, %v715
    %v823 = vrot.slane %v822, 4
    %v824 = vmax.f32 %v822, %v823
    %v825 = vrot.slane %v824, 2
    %v826 = vmax.f32 %v824, %v825
    %v827 = vrot.slane %v826, 1
    %v828 = vmax.f32 %v826, %v827
    %v829 = vpack.c.bf16 %v723, %v723
    %v830 = vpack.c.bf16 %v730, %v730
    %v831 = vpack.c.bf16 %v737, %v737
    %v832 = vpack.c.bf16 %v744, %v744
    %v833 = vpack.c.bf16 %v751, %v751
    %v834 = vpack.c.bf16 %v758, %v758
    %v835 = vpack.c.bf16 %v765, %v765
    %v836 = vpack.c.bf16 %v772, %v772
    %v837 = vpack.c.bf16 %v779, %v779
    %v838 = vpack.c.bf16 %v786, %v786
    %v839 = vpack.c.bf16 %v793, %v793
    %v840 = vpack.c.bf16 %v800, %v800
    %v841 = vpack.c.bf16 %v807, %v807
    %v842 = vpack.c.bf16 %v814, %v814
    %v843 = vpack.c.bf16 %v821, %v821
    %v844 = vpack.c.bf16 %v828, %v828
    %v845 = vld [vmem:[#allocation8] sm:$0xff]
    %v846 = vld [vmem:[#allocation8 + $0x8] sm:$0xff]
    %v847 = vld [vmem:[#allocation8 + $0x10] sm:$0xff]
    %v848 = vld [vmem:[#allocation8 + $0x18] sm:$0xff]
    %v849 = vld [vmem:[#allocation8 + $0x20] sm:$0xff]
    %v850 = vld [vmem:[#allocation8 + $0x28] sm:$0xff]
    %v851 = vld [vmem:[#allocation8 + $0x30] sm:$0xff]
    %v852 = vld [vmem:[#allocation8 + $0x38] sm:$0xff]
    %v853 = vld [vmem:[#allocation8 + $0x40] sm:$0xff]
    %v854 = vld [vmem:[#allocation8 + $0x48] sm:$0xff]
    %v855 = vld [vmem:[#allocation8 + $0x50] sm:$0xff]
    %v856 = vld [vmem:[#allocation8 + $0x58] sm:$0xff]
    %v857 = vld [vmem:[#allocation8 + $0x60] sm:$0xff]
    %v858 = vld [vmem:[#allocation8 + $0x68] sm:$0xff]
    %v859 = vld [vmem:[#allocation8 + $0x70] sm:$0xff]
    %v860 = vld [vmem:[#allocation8 + $0x78] sm:$0xff]
    %v861 = vld [vmem:[#allocation8 + $0x80] sm:$0xff]
    %v862 = vld [vmem:[#allocation8 + $0x88] sm:$0xff]
    %v863 = vld [vmem:[#allocation8 + $0x90] sm:$0xff]
    %v864 = vld [vmem:[#allocation8 + $0x98] sm:$0xff]
    %v865 = vld [vmem:[#allocation8 + $0xa0] sm:$0xff]
    %v866 = vld [vmem:[#allocation8 + $0xa8] sm:$0xff]
    %v867 = vld [vmem:[#allocation8 + $0xb0] sm:$0xff]
    %v868 = vld [vmem:[#allocation8 + $0xb8] sm:$0xff]
    %v869 = vld [vmem:[#allocation8 + $0xc0] sm:$0xff]
    %v870 = vld [vmem:[#allocation8 + $0xc8] sm:$0xff]
    %v871 = vld [vmem:[#allocation8 + $0xd0] sm:$0xff]
    %v872 = vld [vmem:[#allocation8 + $0xd8] sm:$0xff]
    %v873 = vld [vmem:[#allocation8 + $0xe0] sm:$0xff]
    %v874 = vld [vmem:[#allocation8 + $0xe8] sm:$0xff]
    %v875 = vld [vmem:[#allocation8 + $0xf0] sm:$0xff]
    %v876 = vld [vmem:[#allocation8 + $0xf8] sm:$0xff]
    %v877 = vld [vmem:[#allocation8 + $0x100] sm:$0xff]
    %v878 = vld [vmem:[#allocation8 + $0x108] sm:$0xff]
    %v879 = vld [vmem:[#allocation8 + $0x110] sm:$0xff]
    %v880 = vld [vmem:[#allocation8 + $0x118] sm:$0xff]
    %v881 = vld [vmem:[#allocation8 + $0x120] sm:$0xff]
    %v882 = vld [vmem:[#allocation8 + $0x128] sm:$0xff]
    %v883 = vld [vmem:[#allocation8 + $0x130] sm:$0xff]
    %v884 = vld [vmem:[#allocation8 + $0x138] sm:$0xff]
    %v885 = vld [vmem:[#allocation8 + $0x140] sm:$0xff]
    %v886 = vld [vmem:[#allocation8 + $0x148] sm:$0xff]
    %v887 = vld [vmem:[#allocation8 + $0x150] sm:$0xff]
    %v888 = vld [vmem:[#allocation8 + $0x158] sm:$0xff]
    %v889 = vld [vmem:[#allocation8 + $0x160] sm:$0xff]
    %v890 = vld [vmem:[#allocation8 + $0x168] sm:$0xff]
    %v891 = vld [vmem:[#allocation8 + $0x170] sm:$0xff]
    %v892 = vld [vmem:[#allocation8 + $0x178] sm:$0xff]
    %v893 = vld [vmem:[#allocation8 + $0x180] sm:$0xff]
    %v894 = vld [vmem:[#allocation8 + $0x188] sm:$0xff]
    %v895 = vld [vmem:[#allocation8 + $0x190] sm:$0xff]
    %v896 = vld [vmem:[#allocation8 + $0x198] sm:$0xff]
    %v897 = vld [vmem:[#allocation8 + $0x1a0] sm:$0xff]
    %v898 = vld [vmem:[#allocation8 + $0x1a8] sm:$0xff]
    %v899 = vld [vmem:[#allocation8 + $0x1b0] sm:$0xff]
    %v900 = vld [vmem:[#allocation8 + $0x1b8] sm:$0xff]
    %v901 = vld [vmem:[#allocation8 + $0x1c0] sm:$0xff]
    %v902 = vld [vmem:[#allocation8 + $0x1c8] sm:$0xff]
    %v903 = vld [vmem:[#allocation8 + $0x1d0] sm:$0xff]
    %v904 = vld [vmem:[#allocation8 + $0x1d8] sm:$0xff]
    %v905 = vld [vmem:[#allocation8 + $0x1e0] sm:$0xff]
    %v906 = vld [vmem:[#allocation8 + $0x1e8] sm:$0xff]
    %v907 = vld [vmem:[#allocation8 + $0x1f0] sm:$0xff]
    %v908 = vld [vmem:[#allocation8 + $0x1f8] sm:$0xff]
    %v925 = vunpack.c.l.b16 %v829
    %v926 = vunpack.c.l.b16 %v830
    %v927 = vunpack.c.l.b16 %v831
    %v928 = vunpack.c.l.b16 %v832
    %v929 = vunpack.c.l.b16 %v833
    %v930 = vunpack.c.l.b16 %v834
    %v931 = vunpack.c.l.b16 %v835
    %v932 = vunpack.c.l.b16 %v836
    %v933 = vunpack.c.l.b16 %v837
    %v934 = vunpack.c.l.b16 %v838
    %v935 = vunpack.c.l.b16 %v839
    %v936 = vunpack.c.l.b16 %v840
    %v937 = vunpack.c.l.b16 %v841
    %v938 = vunpack.c.l.b16 %v842
    %v939 = vunpack.c.l.b16 %v843
    %v940 = vunpack.c.l.b16 %v844
    %vm941 = vcmask 1041409
    %v942 = vsel %vm941, %v927, %v925
    %vm943 = vcmask 1042434
    %v944 = vsel %vm943, %v929, %v942
    %vm945 = vcmask 1043459
    %v946 = vsel %vm945, %v931, %v944
    %vm947 = vcmask 1044484
    %v948 = vsel %vm947, %v933, %v946
    %vm949 = vcmask 1045509
    %v950 = vsel %vm949, %v935, %v948
    %vm951 = vcmask 1046534
    %v952 = vsel %vm951, %v937, %v950
    %vm953 = vcmask 1047559
    %v954 = vsel %vm953, %v939, %v952
    %v955 = vsel %vm941, %v928, %v926
    %v956 = vsel %vm943, %v930, %v955
    %v957 = vsel %vm945, %v932, %v956
    %v958 = vsel %vm947, %v934, %v957
    %v959 = vsel %vm949, %v936, %v958
    %v960 = vsel %vm951, %v938, %v959
    %v961 = vsel %vm953, %v940, %v960
    %v962 = vpack.c.b16 %v954, %v954
    %v963 = vpack.c.b16 %v961, %v961
    %v1030 = vunpack.c.l.b16 %v845
    %v1031 = vunpack.c.h.b16 %v845
    %v1032 = vunpack.c.l.b16 %v846
    %v1033 = vunpack.c.h.b16 %v846
    %v1034 = vunpack.c.l.b16 %v847
    %v1035 = vunpack.c.h.b16 %v847
    %v1036 = vunpack.c.l.b16 %v848
    %v1037 = vunpack.c.h.b16 %v848
    %v1038 = vunpack.c.l.b16 %v849
    %v1039 = vunpack.c.h.b16 %v849
    %v1040 = vunpack.c.l.b16 %v850
    %v1041 = vunpack.c.h.b16 %v850
    %v1042 = vunpack.c.l.b16 %v851
    %v1043 = vunpack.c.h.b16 %v851
    %v1044 = vunpack.c.l.b16 %v852
    %v1045 = vunpack.c.h.b16 %v852
    %v1046 = vunpack.c.l.b16 %v853
    %v1047 = vunpack.c.h.b16 %v853
    %v1048 = vunpack.c.l.b16 %v854
    %v1049 = vunpack.c.h.b16 %v854
    %v1050 = vunpack.c.l.b16 %v855
    %v1051 = vunpack.c.h.b16 %v855
    %v1052 = vunpack.c.l.b16 %v856
    %v1053 = vunpack.c.h.b16 %v856
    %v1054 = vunpack.c.l.b16 %v857
    %v1055 = vunpack.c.h.b16 %v857
    %v1056 = vunpack.c.l.b16 %v858
    %v1057 = vunpack.c.h.b16 %v858
    %v1058 = vunpack.c.l.b16 %v859
    %v1059 = vunpack.c.h.b16 %v859
    %v1060 = vunpack.c.l.b16 %v860
    %v1061 = vunpack.c.h.b16 %v860
    %v1062 = vunpack.c.l.b16 %v861
    %v1063 = vunpack.c.h.b16 %v861
    %v1064 = vunpack.c.l.b16 %v862
    %v1065 = vunpack.c.h.b16 %v862
    %v1066 = vunpack.c.l.b16 %v863
    %v1067 = vunpack.c.h.b16 %v863
    %v1068 = vunpack.c.l.b16 %v864
    %v1069 = vunpack.c.h.b16 %v864
    %v1070 = vunpack.c.l.b16 %v865
    %v1071 = vunpack.c.h.b16 %v865
    %v1072 = vunpack.c.l.b16 %v866
    %v1073 = vunpack.c.h.b16 %v866
    %v1074 = vunpack.c.l.b16 %v867
    %v1075 = vunpack.c.h.b16 %v867
    %v1076 = vunpack.c.l.b16 %v868
    %v1077 = vunpack.c.h.b16 %v868
    %v1078 = vunpack.c.l.b16 %v869
    %v1079 = vunpack.c.h.b16 %v869
    %v1080 = vunpack.c.l.b16 %v870
    %v1081 = vunpack.c.h.b16 %v870
    %v1082 = vunpack.c.l.b16 %v871
    %v1083 = vunpack.c.h.b16 %v871
    %v1084 = vunpack.c.l.b16 %v872
    %v1085 = vunpack.c.h.b16 %v872
    %v1086 = vunpack.c.l.b16 %v873
    %v1087 = vunpack.c.h.b16 %v873
    %v1088 = vunpack.c.l.b16 %v874
    %v1089 = vunpack.c.h.b16 %v874
    %v1090 = vunpack.c.l.b16 %v875
    %v1091 = vunpack.c.h.b16 %v875
    %v1092 = vunpack.c.l.b16 %v876
    %v1093 = vunpack.c.h.b16 %v876
    %v1094 = vunpack.c.l.b16 %v877
    %v1095 = vunpack.c.h.b16 %v877
    %v1096 = vunpack.c.l.b16 %v878
    %v1097 = vunpack.c.h.b16 %v878
    %v1098 = vunpack.c.l.b16 %v879
    %v1099 = vunpack.c.h.b16 %v879
    %v1100 = vunpack.c.l.b16 %v880
    %v1101 = vunpack.c.h.b16 %v880
    %v1102 = vunpack.c.l.b16 %v881
    %v1103 = vunpack.c.h.b16 %v881
    %v1104 = vunpack.c.l.b16 %v882
    %v1105 = vunpack.c.h.b16 %v882
    %v1106 = vunpack.c.l.b16 %v883
    %v1107 = vunpack.c.h.b16 %v883
    %v1108 = vunpack.c.l.b16 %v884
    %v1109 = vunpack.c.h.b16 %v884
    %v1110 = vunpack.c.l.b16 %v885
    %v1111 = vunpack.c.h.b16 %v885
    %v1112 = vunpack.c.l.b16 %v886
    %v1113 = vunpack.c.h.b16 %v886
    %v1114 = vunpack.c.l.b16 %v887
    %v1115 = vunpack.c.h.b16 %v887
    %v1116 = vunpack.c.l.b16 %v888
    %v1117 = vunpack.c.h.b16 %v888
    %v1118 = vunpack.c.l.b16 %v889
    %v1119 = vunpack.c.h.b16 %v889
    %v1120 = vunpack.c.l.b16 %v890
    %v1121 = vunpack.c.h.b16 %v890
    %v1122 = vunpack.c.l.b16 %v891
    %v1123 = vunpack.c.h.b16 %v891
    %v1124 = vunpack.c.l.b16 %v892
    %v1125 = vunpack.c.h.b16 %v892
    %v1126 = vunpack.c.l.b16 %v893
    %v1127 = vunpack.c.h.b16 %v893
    %v1128 = vunpack.c.l.b16 %v894
    %v1129 = vunpack.c.h.b16 %v894
    %v1130 = vunpack.c.l.b16 %v895
    %v1131 = vunpack.c.h.b16 %v895
    %v1132 = vunpack.c.l.b16 %v896
    %v1133 = vunpack.c.h.b16 %v896
    %v1134 = vunpack.c.l.b16 %v897
    %v1135 = vunpack.c.h.b16 %v897
    %v1136 = vunpack.c.l.b16 %v898
    %v1137 = vunpack.c.h.b16 %v898
    %v1138 = vunpack.c.l.b16 %v899
    %v1139 = vunpack.c.h.b16 %v899
    %v1140 = vunpack.c.l.b16 %v900
    %v1141 = vunpack.c.h.b16 %v900
    %v1142 = vunpack.c.l.b16 %v901
    %v1143 = vunpack.c.h.b16 %v901
    %v1144 = vunpack.c.l.b16 %v902
    %v1145 = vunpack.c.h.b16 %v902
    %v1146 = vunpack.c.l.b16 %v903
    %v1147 = vunpack.c.h.b16 %v903
    %v1148 = vunpack.c.l.b16 %v904
    %v1149 = vunpack.c.h.b16 %v904
    %v1150 = vunpack.c.l.b16 %v905
    %v1151 = vunpack.c.h.b16 %v905
    %v1152 = vunpack.c.l.b16 %v906
    %v1153 = vunpack.c.h.b16 %v906
    %v1154 = vunpack.c.l.b16 %v907
    %v1155 = vunpack.c.h.b16 %v907
    %v1156 = vunpack.c.l.b16 %v908
    %v1157 = vunpack.c.h.b16 %v908
    %v1158 = vpack.c.b16 %v1034, %v1030
    %v1159 = vpack.c.b16 %v1035, %v1031
    %v1160 = vpack.c.b16 %v1036, %v1032
    %v1161 = vpack.c.b16 %v1037, %v1033
    %v1162 = vpack.c.b16 %v1042, %v1038
    %v1163 = vpack.c.b16 %v1043, %v1039
    %v1164 = vpack.c.b16 %v1044, %v1040
    %v1165 = vpack.c.b16 %v1045, %v1041
    %v1166 = vpack.c.b16 %v1050, %v1046
    %v1167 = vpack.c.b16 %v1051, %v1047
    %v1168 = vpack.c.b16 %v1052, %v1048
    %v1169 = vpack.c.b16 %v1053, %v1049
    %v1170 = vpack.c.b16 %v1058, %v1054
    %v1171 = vpack.c.b16 %v1059, %v1055
    %v1172 = vpack.c.b16 %v1060, %v1056
    %v1173 = vpack.c.b16 %v1061, %v1057
    %v1174 = vpack.c.b16 %v1066, %v1062
    %v1175 = vpack.c.b16 %v1067, %v1063
    %v1176 = vpack.c.b16 %v1068, %v1064
    %v1177 = vpack.c.b16 %v1069, %v1065
    %v1178 = vpack.c.b16 %v1074, %v1070
    %v1179 = vpack.c.b16 %v1075, %v1071
    %v1180 = vpack.c.b16 %v1076, %v1072
    %v1181 = vpack.c.b16 %v1077, %v1073
    %v1182 = vpack.c.b16 %v1082, %v1078
    %v1183 = vpack.c.b16 %v1083, %v1079
    %v1184 = vpack.c.b16 %v1084, %v1080
    %v1185 = vpack.c.b16 %v1085, %v1081
    %v1186 = vpack.c.b16 %v1090, %v1086
    %v1187 = vpack.c.b16 %v1091, %v1087
    %v1188 = vpack.c.b16 %v1092, %v1088
    %v1189 = vpack.c.b16 %v1093, %v1089
    %v1190 = vpack.c.b16 %v1098, %v1094
    %v1191 = vpack.c.b16 %v1099, %v1095
    %v1192 = vpack.c.b16 %v1100, %v1096
    %v1193 = vpack.c.b16 %v1101, %v1097
    %v1194 = vpack.c.b16 %v1106, %v1102
    %v1195 = vpack.c.b16 %v1107, %v1103
    %v1196 = vpack.c.b16 %v1108, %v1104
    %v1197 = vpack.c.b16 %v1109, %v1105
    %v1198 = vpack.c.b16 %v1114, %v1110
    %v1199 = vpack.c.b16 %v1115, %v1111
    %v1200 = vpack.c.b16 %v1116, %v1112
    %v1201 = vpack.c.b16 %v1117, %v1113
    %v1202 = vpack.c.b16 %v1122, %v1118
    %v1203 = vpack.c.b16 %v1123, %v1119
    %v1204 = vpack.c.b16 %v1124, %v1120
    %v1205 = vpack.c.b16 %v1125, %v1121
    %v1206 = vpack.c.b16 %v1130, %v1126
    %v1207 = vpack.c.b16 %v1131, %v1127
    %v1208 = vpack.c.b16 %v1132, %v1128
    %v1209 = vpack.c.b16 %v1133, %v1129
    %v1210 = vpack.c.b16 %v1138, %v1134
    %v1211 = vpack.c.b16 %v1139, %v1135
    %v1212 = vpack.c.b16 %v1140, %v1136
    %v1213 = vpack.c.b16 %v1141, %v1137
    %v1214 = vpack.c.b16 %v1146, %v1142
    %v1215 = vpack.c.b16 %v1147, %v1143
    %v1216 = vpack.c.b16 %v1148, %v1144
    %v1217 = vpack.c.b16 %v1149, %v1145
    %v1218 = vpack.c.b16 %v1154, %v1150
    %v1219 = vpack.c.b16 %v1155, %v1151
    %v1220 = vpack.c.b16 %v1156, %v1152
    %v1221 = vpack.c.b16 %v1157, %v1153
    %1286 = vmatprep.subr.bf16.mxu0 %v1159
    %1287 = vmatpush1.bf16.msra.mxu0 %v1158
    %1288 = vmatprep.subr.bf16.mxu0 %v1163
    %1289 = vmatpush1.bf16.msra.mxu0 %v1162
    %1290 = vmatprep.subr.bf16.mxu0 %v1167
    %1291 = vmatpush1.bf16.msra.mxu0 %v1166
    %1292 = vmatprep.subr.bf16.mxu0 %v1171
    %1293 = vmatpush1.bf16.msra.mxu0 %v1170
    %1294 = vmatprep.subr.bf16.mxu0 %v1175
    %1295 = vmatpush1.bf16.msra.mxu0 %v1174
    %1296 = vmatprep.subr.bf16.mxu0 %v1179
    %1297 = vmatpush1.bf16.msra.mxu0 %v1178
    %1298 = vmatprep.subr.bf16.mxu0 %v1183
    %1299 = vmatpush1.bf16.msra.mxu0 %v1182
    %1300 = vmatprep.subr.bf16.mxu0 %v1187
    %1301 = vmatpush1.bf16.msra.mxu0 %v1186
    %1302 = vmatprep.subr.bf16.mxu0 %v1191
    %1303 = vmatpush1.bf16.msra.mxu0 %v1190
    %1304 = vmatprep.subr.bf16.mxu0 %v1195
    %1305 = vmatpush1.bf16.msra.mxu0 %v1194
    %1306 = vmatprep.subr.bf16.mxu0 %v1199
    %1307 = vmatpush1.bf16.msra.mxu0 %v1198
    %1308 = vmatprep.subr.bf16.mxu0 %v1203
    %1309 = vmatpush1.bf16.msra.mxu0 %v1202
    %1310 = vmatprep.subr.bf16.mxu0 %v1207
    %1311 = vmatpush1.bf16.msra.mxu0 %v1206
    %1312 = vmatprep.subr.bf16.mxu0 %v1211
    %1313 = vmatpush1.bf16.msra.mxu0 %v1210
    %1314 = vmatprep.subr.bf16.mxu0 %v1215
    %1315 = vmatpush1.bf16.msra.mxu0 %v1214
    %1316 = vmatprep.subr.bf16.mxu0 %v1219
    %1317 = vmatpush1.bf16.msra.mxu0 %v1218
    %1318 = vmatprep.mubr.bf16.mxu0 %v963
    %1319 = vmatmul.mubr.bf16.gmra.mrb[0].mxu0 %v962
    %v1320 = vpop.f32.mrb[0].mxu0
    %v1321 = vadd.f32 0.0, %v1320
    %v1322 = vpop.f32.mrb[0].mxu0
    %v1323 = vadd.f32 0.0, %v1322
    %v1324 = vpop.f32.mrb[0].mxu0
    %v1325 = vpop.f32.mrb[0].mxu0
    %1326 = vdwg.mxu0
    %1327 = vmatprep.subr.bf16.mxu0 %v1161
    %1328 = vmatpush1.bf16.msra.mxu0 %v1160
    %1329 = vmatprep.subr.bf16.mxu0 %v1165
    %1330 = vmatpush1.bf16.msra.mxu0 %v1164
    %1331 = vmatprep.subr.bf16.mxu0 %v1169
    %1332 = vmatpush1.bf16.msra.mxu0 %v1168
    %1333 = vmatprep.subr.bf16.mxu0 %v1173
    %1334 = vmatpush1.bf16.msra.mxu0 %v1172
    %1335 = vmatprep.subr.bf16.mxu0 %v1177
    %1336 = vmatpush1.bf16.msra.mxu0 %v1176
    %1337 = vmatprep.subr.bf16.mxu0 %v1181
    %1338 = vmatpush1.bf16.msra.mxu0 %v1180
    %1339 = vmatprep.subr.bf16.mxu0 %v1185
    %1340 = vmatpush1.bf16.msra.mxu0 %v1184
    %1341 = vmatprep.subr.bf16.mxu0 %v1189
    %1342 = vmatpush1.bf16.msra.mxu0 %v1188
    %1343 = vmatprep.subr.bf16.mxu0 %v1193
    %1344 = vmatpush1.bf16.msra.mxu0 %v1192
    %1345 = vmatprep.subr.bf16.mxu0 %v1197
    %1346 = vmatpush1.bf16.msra.mxu0 %v1196
    %1347 = vmatprep.subr.bf16.mxu0 %v1201
    %1348 = vmatpush1.bf16.msra.mxu0 %v1200
    %1349 = vmatprep.subr.bf16.mxu0 %v1205
    %1350 = vmatpush1.bf16.msra.mxu0 %v1204
    %1351 = vmatprep.subr.bf16.mxu0 %v1209
    %1352 = vmatpush1.bf16.msra.mxu0 %v1208
    %1353 = vmatprep.subr.bf16.mxu0 %v1213
    %1354 = vmatpush1.bf16.msra.mxu0 %v1212
    %1355 = vmatprep.subr.bf16.mxu0 %v1217
    %1356 = vmatpush1.bf16.msra.mxu0 %v1216
    %1357 = vmatprep.subr.bf16.mxu0 %v1221
    %1358 = vmatpush1.bf16.msra.mxu0 %v1220
    %1359 = vmatprep.mubr.bf16.mxu0 %v963
    %1360 = vmatmul.mubr.bf16.gmra.mrb[0].mxu0 %v962
    %v1361 = vpop.f32.mrb[0].mxu0
    %v1362 = vadd.f32 0.0, %v1361
    %v1363 = vpop.f32.mrb[0].mxu0
    %v1364 = vadd.f32 0.0, %v1363
    %v1365 = vpop.f32.mrb[0].mxu0
    %v1366 = vpop.f32.mrb[0].mxu0
    %1367 = vdwg.mxu0
    %v1368 = vld [vmem:[#allocation10] sm:$0xff]
    %v1369 = vld [vmem:[#allocation10 + $0x8] sm:$0xff]
    %v1370 = vld [vmem:[#allocation10 + $0x10] sm:$0xff]
    %v1371 = vld [vmem:[#allocation10 + $0x18] sm:$0xff]
    %v1372 = vld [vmem:[#allocation10 + $0x20] sm:$0xff]
    %v1373 = vld [vmem:[#allocation10 + $0x28] sm:$0xff]
    %v1374 = vld [vmem:[#allocation10 + $0x30] sm:$0xff]
    %v1375 = vld [vmem:[#allocation10 + $0x38] sm:$0xff]
    %v1376 = vld [vmem:[#allocation10 + $0x40] sm:$0xff]
    %v1377 = vld [vmem:[#allocation10 + $0x48] sm:$0xff]
    %v1378 = vld [vmem:[#allocation10 + $0x50] sm:$0xff]
    %v1379 = vld [vmem:[#allocation10 + $0x58] sm:$0xff]
    %v1380 = vld [vmem:[#allocation10 + $0x60] sm:$0xff]
    %v1381 = vld [vmem:[#allocation10 + $0x68] sm:$0xff]
    %v1382 = vld [vmem:[#allocation10 + $0x70] sm:$0xff]
    %v1383 = vld [vmem:[#allocation10 + $0x78] sm:$0xff]
    %v1384 = vld [vmem:[#allocation10 + $0x80] sm:$0xff]
    %v1385 = vld [vmem:[#allocation10 + $0x88] sm:$0xff]
    %v1386 = vld [vmem:[#allocation10 + $0x90] sm:$0xff]
    %v1387 = vld [vmem:[#allocation10 + $0x98] sm:$0xff]
    %v1388 = vld [vmem:[#allocation10 + $0xa0] sm:$0xff]
    %v1389 = vld [vmem:[#allocation10 + $0xa8] sm:$0xff]
    %v1390 = vld [vmem:[#allocation10 + $0xb0] sm:$0xff]
    %v1391 = vld [vmem:[#allocation10 + $0xb8] sm:$0xff]
    %v1392 = vld [vmem:[#allocation10 + $0xc0] sm:$0xff]
    %v1393 = vld [vmem:[#allocation10 + $0xc8] sm:$0xff]
    %v1394 = vld [vmem:[#allocation10 + $0xd0] sm:$0xff]
    %v1395 = vld [vmem:[#allocation10 + $0xd8] sm:$0xff]
    %v1396 = vld [vmem:[#allocation10 + $0xe0] sm:$0xff]
    %v1397 = vld [vmem:[#allocation10 + $0xe8] sm:$0xff]
    %v1398 = vld [vmem:[#allocation10 + $0xf0] sm:$0xff]
    %v1399 = vld [vmem:[#allocation10 + $0xf8] sm:$0xff]
    %v1432 = vunpack.c.l.b16 %v1368
    %v1433 = vunpack.c.h.b16 %v1368
    %v1434 = vunpack.c.l.b16 %v1369
    %v1435 = vunpack.c.h.b16 %v1369
    %v1436 = vunpack.c.l.b16 %v1370
    %v1437 = vunpack.c.h.b16 %v1370
    %v1438 = vunpack.c.l.b16 %v1371
    %v1439 = vunpack.c.h.b16 %v1371
    %v1440 = vunpack.c.l.b16 %v1372
    %v1441 = vunpack.c.h.b16 %v1372
    %v1442 = vunpack.c.l.b16 %v1373
    %v1443 = vunpack.c.h.b16 %v1373
    %v1444 = vunpack.c.l.b16 %v1374
    %v1445 = vunpack.c.h.b16 %v1374
    %v1446 = vunpack.c.l.b16 %v1375
    %v1447 = vunpack.c.h.b16 %v1375
    %v1448 = vunpack.c.l.b16 %v1376
    %v1449 = vunpack.c.h.b16 %v1376
    %v1450 = vunpack.c.l.b16 %v1377
    %v1451 = vunpack.c.h.b16 %v1377
    %v1452 = vunpack.c.l.b16 %v1378
    %v1453 = vunpack.c.h.b16 %v1378
    %v1454 = vunpack.c.l.b16 %v1379
    %v1455 = vunpack.c.h.b16 %v1379
    %v1456 = vunpack.c.l.b16 %v1380
    %v1457 = vunpack.c.h.b16 %v1380
    %v1458 = vunpack.c.l.b16 %v1381
    %v1459 = vunpack.c.h.b16 %v1381
    %v1460 = vunpack.c.l.b16 %v1382
    %v1461 = vunpack.c.h.b16 %v1382
    %v1462 = vunpack.c.l.b16 %v1383
    %v1463 = vunpack.c.h.b16 %v1383
    %v1464 = vunpack.c.l.b16 %v1384
    %v1465 = vunpack.c.h.b16 %v1384
    %v1466 = vunpack.c.l.b16 %v1385
    %v1467 = vunpack.c.h.b16 %v1385
    %v1468 = vunpack.c.l.b16 %v1386
    %v1469 = vunpack.c.h.b16 %v1386
    %v1470 = vunpack.c.l.b16 %v1387
    %v1471 = vunpack.c.h.b16 %v1387
    %v1472 = vunpack.c.l.b16 %v1388
    %v1473 = vunpack.c.h.b16 %v1388
    %v1474 = vunpack.c.l.b16 %v1389
    %v1475 = vunpack.c.h.b16 %v1389
    %v1476 = vunpack.c.l.b16 %v1390
    %v1477 = vunpack.c.h.b16 %v1390
    %v1478 = vunpack.c.l.b16 %v1391
    %v1479 = vunpack.c.h.b16 %v1391
    %v1480 = vunpack.c.l.b16 %v1392
    %v1481 = vunpack.c.h.b16 %v1392
    %v1482 = vunpack.c.l.b16 %v1393
    %v1483 = vunpack.c.h.b16 %v1393
    %v1484 = vunpack.c.l.b16 %v1394
    %v1485 = vunpack.c.h.b16 %v1394
    %v1486 = vunpack.c.l.b16 %v1395
    %v1487 = vunpack.c.h.b16 %v1395
    %v1488 = vunpack.c.l.b16 %v1396
    %v1489 = vunpack.c.h.b16 %v1396
    %v1490 = vunpack.c.l.b16 %v1397
    %v1491 = vunpack.c.h.b16 %v1397
    %v1492 = vunpack.c.l.b16 %v1398
    %v1493 = vunpack.c.h.b16 %v1398
    %v1494 = vunpack.c.l.b16 %v1399
    %v1495 = vunpack.c.h.b16 %v1399
    %v1496 = vpack.c.b16 %v1436, %v1432
    %v1497 = vpack.c.b16 %v1437, %v1433
    %v1498 = vpack.c.b16 %v1438, %v1434
    %v1499 = vpack.c.b16 %v1439, %v1435
    %v1500 = vpack.c.b16 %v1444, %v1440
    %v1501 = vpack.c.b16 %v1445, %v1441
    %v1502 = vpack.c.b16 %v1446, %v1442
    %v1503 = vpack.c.b16 %v1447, %v1443
    %v1504 = vpack.c.b16 %v1452, %v1448
    %v1505 = vpack.c.b16 %v1453, %v1449
    %v1506 = vpack.c.b16 %v1454, %v1450
    %v1507 = vpack.c.b16 %v1455, %v1451
    %v1508 = vpack.c.b16 %v1460, %v1456
    %v1509 = vpack.c.b16 %v1461, %v1457
    %v1510 = vpack.c.b16 %v1462, %v1458
    %v1511 = vpack.c.b16 %v1463, %v1459
    %v1512 = vpack.c.b16 %v1468, %v1464
    %v1513 = vpack.c.b16 %v1469, %v1465
    %v1514 = vpack.c.b16 %v1470, %v1466
    %v1515 = vpack.c.b16 %v1471, %v1467
    %v1516 = vpack.c.b16 %v1476, %v1472
    %v1517 = vpack.c.b16 %v1477, %v1473
    %v1518 = vpack.c.b16 %v1478, %v1474
    %v1519 = vpack.c.b16 %v1479, %v1475
    %v1520 = vpack.c.b16 %v1484, %v1480
    %v1521 = vpack.c.b16 %v1485, %v1481
    %v1522 = vpack.c.b16 %v1486, %v1482
    %v1523 = vpack.c.b16 %v1487, %v1483
    %v1524 = vpack.c.b16 %v1492, %v1488
    %v1525 = vpack.c.b16 %v1493, %v1489
    %v1526 = vpack.c.b16 %v1494, %v1490
    %v1527 = vpack.c.b16 %v1495, %v1491
    %1560 = vmatprep.subr.bf16.mxu0 %v1497
    %1561 = vmatpush1.bf16.msra.mxu0 %v1496
    %1562 = vmatprep.subr.bf16.mxu0 %v1501
    %1563 = vmatpush1.bf16.msra.mxu0 %v1500
    %1564 = vmatprep.subr.bf16.mxu0 %v1505
    %1565 = vmatpush1.bf16.msra.mxu0 %v1504
    %1566 = vmatprep.subr.bf16.mxu0 %v1509
    %1567 = vmatpush1.bf16.msra.mxu0 %v1508
    %1568 = vmatprep.subr.bf16.mxu0 %v1513
    %1569 = vmatpush1.bf16.msra.mxu0 %v1512
    %1570 = vmatprep.subr.bf16.mxu0 %v1517
    %1571 = vmatpush1.bf16.msra.mxu0 %v1516
    %1572 = vmatprep.subr.bf16.mxu0 %v1521
    %1573 = vmatpush1.bf16.msra.mxu0 %v1520
    %1574 = vmatprep.subr.bf16.mxu0 %v1525
    %1575 = vmatpush1.bf16.msra.mxu0 %v1524
    %1576 = vmatprep.subr.bf16.mxu0 0
    %1577 = vmatpush1.bf16.msra.mxu0 0
    %1578 = vmatprep.subr.bf16.mxu0 0
    %1579 = vmatpush1.bf16.msra.mxu0 0
    %1580 = vmatprep.subr.bf16.mxu0 0
    %1581 = vmatpush1.bf16.msra.mxu0 0
    %1582 = vmatprep.subr.bf16.mxu0 0
    %1583 = vmatpush1.bf16.msra.mxu0 0
    %1584 = vmatprep.subr.bf16.mxu0 0
    %1585 = vmatpush1.bf16.msra.mxu0 0
    %1586 = vmatprep.subr.bf16.mxu0 0
    %1587 = vmatpush1.bf16.msra.mxu0 0
    %1588 = vmatprep.subr.bf16.mxu0 0
    %1589 = vmatpush1.bf16.msra.mxu0 0
    %1590 = vmatprep.subr.bf16.mxu0 0
    %1591 = vmatpush1.bf16.msra.mxu0 0
    %1592 = vmatprep.mubr.bf16.mxu0 0
    %1593 = vmatmul.mubr.bf16.gmra.mrb[0].mxu0 %v488
    %v1594 = vpop.f32.mrb[0].mxu0
    %v1595 = vadd.f32 0.0, %v1594
    %v1596 = vpop.f32.mrb[0].mxu0
    %v1597 = vadd.f32 0.0, %v1596
    %v1598 = vpop.f32.mrb[0].mxu0
    %v1599 = vadd.f32 0.0, %v1598
    %v1600 = vpop.f32.mrb[0].mxu0
    %v1601 = vadd.f32 0.0, %v1600
    %1602 = vmatprep.mubr.bf16.mxu0 0
    %1603 = vmatmul.mubr.bf16.gmra.mrb[0].mxu0 %v489
    %v1604 = vpop.f32.mrb[0].mxu0
    %v1605 = vadd.f32 0.0, %v1604
    %v1606 = vpop.f32.mrb[0].mxu0
    %v1607 = vadd.f32 0.0, %v1606
    %v1608 = vpop.f32.mrb[0].mxu0
    %v1609 = vadd.f32 0.0, %v1608
    %v1610 = vpop.f32.mrb[0].mxu0
    %v1611 = vadd.f32 0.0, %v1610
    %1612 = vmatprep.mubr.bf16.mxu0 0
    %1613 = vmatmul.mubr.bf16.gmra.mrb[0].mxu0 %v490
    %v1614 = vpop.f32.mrb[0].mxu0
    %v1615 = vadd.f32 0.0, %v1614
    %v1616 = vpop.f32.mrb[0].mxu0
    %v1617 = vadd.f32 0.0, %v1616
    %v1618 = vpop.f32.mrb[0].mxu0
    %v1619 = vadd.f32 0.0, %v1618
    %v1620 = vpop.f32.mrb[0].mxu0
    %v1621 = vadd.f32 0.0, %v1620
    %1622 = vmatprep.mubr.bf16.mxu0 0
    %1623 = vmatmul.mubr.bf16.gmra.mrb[0].mxu0 %v491
    %v1624 = vpop.f32.mrb[0].mxu0
    %v1625 = vadd.f32 0.0, %v1624
    %v1626 = vpop.f32.mrb[0].mxu0
    %v1627 = vadd.f32 0.0, %v1626
    %v1628 = vpop.f32.mrb[0].mxu0
    %v1629 = vadd.f32 0.0, %v1628
    %v1630 = vpop.f32.mrb[0].mxu0
    %v1631 = vadd.f32 0.0, %v1630
    %1632 = vmatprep.mubr.bf16.mxu0 0
    %1633 = vmatmul.mubr.bf16.gmra.mrb[0].mxu0 %v492
    %v1634 = vpop.f32.mrb[0].mxu0
    %v1635 = vadd.f32 0.0, %v1634
    %v1636 = vpop.f32.mrb[0].mxu0
    %v1637 = vadd.f32 0.0, %v1636
    %v1638 = vpop.f32.mrb[0].mxu0
    %v1639 = vadd.f32 0.0, %v1638
    %v1640 = vpop.f32.mrb[0].mxu0
    %v1641 = vadd.f32 0.0, %v1640
    %1642 = vmatprep.mubr.bf16.mxu0 0
    %1643 = vmatmul.mubr.bf16.gmra.mrb[0].mxu0 %v493
    %v1644 = vpop.f32.mrb[0].mxu0
    %v1645 = vadd.f32 0.0, %v1644
    %v1646 = vpop.f32.mrb[0].mxu0
    %v1647 = vadd.f32 0.0, %v1646
    %v1648 = vpop.f32.mrb[0].mxu0
    %v1649 = vadd.f32 0.0, %v1648
    %v1650 = vpop.f32.mrb[0].mxu0
    %v1651 = vadd.f32 0.0, %v1650
    %1652 = vmatprep.mubr.bf16.mxu0 0
    %1653 = vmatmul.mubr.bf16.gmra.mrb[0].mxu0 %v494
    %v1654 = vpop.f32.mrb[0].mxu0
    %v1655 = vadd.f32 0.0, %v1654
    %v1656 = vpop.f32.mrb[0].mxu0
    %v1657 = vadd.f32 0.0, %v1656
    %v1658 = vpop.f32.mrb[0].mxu0
    %v1659 = vadd.f32 0.0, %v1658
    %v1660 = vpop.f32.mrb[0].mxu0
    %v1661 = vadd.f32 0.0, %v1660
    %1662 = vmatprep.mubr.bf16.mxu0 0
    %1663 = vmatmul.mubr.bf16.gmra.mrb[0].mxu0 %v495
    %v1664 = vpop.f32.mrb[0].mxu0
    %v1665 = vadd.f32 0.0, %v1664
    %v1666 = vpop.f32.mrb[0].mxu0
    %v1667 = vadd.f32 0.0, %v1666
    %v1668 = vpop.f32.mrb[0].mxu0
    %v1669 = vadd.f32 0.0, %v1668
    %v1670 = vpop.f32.mrb[0].mxu0
    %v1671 = vadd.f32 0.0, %v1670
    %1672 = vdwg.mxu0
    %1673 = vmatprep.subr.bf16.mxu0 %v1499
    %1674 = vmatpush1.bf16.msra.mxu0 %v1498
    %1675 = vmatprep.subr.bf16.mxu0 %v1503
    %1676 = vmatpush1.bf16.msra.mxu0 %v1502
    %1677 = vmatprep.subr.bf16.mxu0 %v1507
    %1678 = vmatpush1.bf16.msra.mxu0 %v1506
    %1679 = vmatprep.subr.bf16.mxu0 %v1511
    %1680 = vmatpush1.bf16.msra.mxu0 %v1510
    %1681 = vmatprep.subr.bf16.mxu0 %v1515
    %1682 = vmatpush1.bf16.msra.mxu0 %v1514
    %1683 = vmatprep.subr.bf16.mxu0 %v1519
    %1684 = vmatpush1.bf16.msra.mxu0 %v1518
    %1685 = vmatprep.subr.bf16.mxu0 %v1523
    %1686 = vmatpush1.bf16.msra.mxu0 %v1522
    %1687 = vmatprep.subr.bf16.mxu0 %v1527
    %1688 = vmatpush1.bf16.msra.mxu0 %v1526
    %1689 = vmatprep.subr.bf16.mxu0 0
    %1690 = vmatpush1.bf16.msra.mxu0 0
    %1691 = vmatprep.subr.bf16.mxu0 0
    %1692 = vmatpush1.bf16.msra.mxu0 0
    %1693 = vmatprep.subr.bf16.mxu0 0
    %1694 = vmatpush1.bf16.msra.mxu0 0
    %1695 = vmatprep.subr.bf16.mxu0 0
    %1696 = vmatpush1.bf16.msra.mxu0 0
    %1697 = vmatprep.subr.bf16.mxu0 0
    %1698 = vmatpush1.bf16.msra.mxu0 0
    %1699 = vmatprep.subr.bf16.mxu0 0
    %1700 = vmatpush1.bf16.msra.mxu0 0
    %1701 = vmatprep.subr.bf16.mxu0 0
    %1702 = vmatpush1.bf16.msra.mxu0 0
    %1703 = vmatprep.subr.bf16.mxu0 0
    %1704 = vmatpush1.bf16.msra.mxu0 0
    %1705 = vmatprep.mubr.bf16.mxu0 0
    %1706 = vmatmul.mubr.bf16.gmra.mrb[0].mxu0 %v488
    %v1707 = vpop.f32.mrb[0].mxu0
    %v1708 = vadd.f32 0.0, %v1707
    %v1709 = vpop.f32.mrb[0].mxu0
    %v1710 = vadd.f32 0.0, %v1709
    %v1711 = vpop.f32.mrb[0].mxu0
    %v1712 = vadd.f32 0.0, %v1711
    %v1713 = vpop.f32.mrb[0].mxu0
    %v1714 = vadd.f32 0.0, %v1713
    %1715 = vmatprep.mubr.bf16.mxu0 0
    %1716 = vmatmul.mubr.bf16.gmra.mrb[0].mxu0 %v489
    %v1717 = vpop.f32.mrb[0].mxu0
    %v1718 = vadd.f32 0.0, %v1717
    %v1719 = vpop.f32.mrb[0].mxu0
    %v1720 = vadd.f32 0.0, %v1719
    %v1721 = vpop.f32.mrb[0].mxu0
    %v1722 = vadd.f32 0.0, %v1721
    %v1723 = vpop.f32.mrb[0].mxu0
    %v1724 = vadd.f32 0.0, %v1723
    %1725 = vmatprep.mubr.bf16.mxu0 0
    %1726 = vmatmul.mubr.bf16.gmra.mrb[0].mxu0 %v490
    %v1727 = vpop.f32.mrb[0].mxu0
    %v1728 = vadd.f32 0.0, %v1727
    %v1729 = vpop.f32.mrb[0].mxu0
    %v1730 = vadd.f32 0.0, %v1729
    %v1731 = vpop.f32.mrb[0].mxu0
    %v1732 = vadd.f32 0.0, %v1731
    %v1733 = vpop.f32.mrb[0].mxu0
    %v1734 = vadd.f32 0.0, %v1733
    %1735 = vmatprep.mubr.bf16.mxu0 0
    %1736 = vmatmul.mubr.bf16.gmra.mrb[0].mxu0 %v491
    %v1737 = vpop.f32.mrb[0].mxu0
    %v1738 = vadd.f32 0.0, %v1737
    %v1739 = vpop.f32.mrb[0].mxu0
    %v1740 = vadd.f32 0.0, %v1739
    %v1741 = vpop.f32.mrb[0].mxu0
    %v1742 = vadd.f32 0.0, %v1741
    %v1743 = vpop.f32.mrb[0].mxu0
    %v1744 = vadd.f32 0.0, %v1743
    %1745 = vmatprep.mubr.bf16.mxu0 0
    %1746 = vmatmul.mubr.bf16.gmra.mrb[0].mxu0 %v492
    %v1747 = vpop.f32.mrb[0].mxu0
    %v1748 = vadd.f32 0.0, %v1747
    %v1749 = vpop.f32.mrb[0].mxu0
    %v1750 = vadd.f32 0.0, %v1749
    %v1751 = vpop.f32.mrb[0].mxu0
    %v1752 = vadd.f32 0.0, %v1751
    %v1753 = vpop.f32.mrb[0].mxu0
    %v1754 = vadd.f32 0.0, %v1753
    %1755 = vmatprep.mubr.bf16.mxu0 0
    %1756 = vmatmul.mubr.bf16.gmra.mrb[0].mxu0 %v493
    %v1757 = vpop.f32.mrb[0].mxu0
    %v1758 = vadd.f32 0.0, %v1757
    %v1759 = vpop.f32.mrb[0].mxu0
    %v1760 = vadd.f32 0.0, %v1759
    %v1761 = vpop.f32.mrb[0].mxu0
    %v1762 = vadd.f32 0.0, %v1761
    %v1763 = vpop.f32.mrb[0].mxu0
    %v1764 = vadd.f32 0.0, %v1763
    %1765 = vmatprep.mubr.bf16.mxu0 0
    %1766 = vmatmul.mubr.bf16.gmra.mrb[0].mxu0 %v494
    %v1767 = vpop.f32.mrb[0].mxu0
    %v1768 = vadd.f32 0.0, %v1767
    %v1769 = vpop.f32.mrb[0].mxu0
    %v1770 = vadd.f32 0.0, %v1769
    %v1771 = vpop.f32.mrb[0].mxu0
    %v1772 = vadd.f32 0.0, %v1771
    %v1773 = vpop.f32.mrb[0].mxu0
    %v1774 = vadd.f32 0.0, %v1773
    %1775 = vmatprep.mubr.bf16.mxu0 0
    %1776 = vmatmul.mubr.bf16.gmra.mrb[0].mxu0 %v495
    %v1777 = vpop.f32.mrb[0].mxu0
    %v1778 = vadd.f32 0.0, %v1777
    %v1779 = vpop.f32.mrb[0].mxu0
    %v1780 = vadd.f32 0.0, %v1779
    %v1781 = vpop.f32.mrb[0].mxu0
    %v1782 = vadd.f32 0.0, %v1781
    %v1783 = vpop.f32.mrb[0].mxu0
    %v1784 = vadd.f32 0.0, %v1783
    %1785 = vdwg.mxu0
    %v1790 = vcombine.low %v1321, %v1323
    %v1791 = vcombine.high %v1321, %v1323
    %v1792 = vcombine.low %v1362, %v1364
    %v1793 = vcombine.high %v1362, %v1364
    %v1795 = vunpack.c.l.s4 1966171168
    %v1796 = vunpack.c.0.s8 %v1795
    %v1797 = vlaneseq
    %v1798 = vshrl.u32 %v1797, 7
    %v1799 = vsub.s32 %v1796, %v1798
    %v1800 = vrot.slane %v1790, %v1799
    %v1802 = vunpack.c.l.s4 1966171168
    %v1803 = vunpack.c.0.s8 %v1802
    %v1804 = vlaneseq
    %v1805 = vshrl.u32 %v1804, 7
    %v1806 = vsub.s32 %v1803, %v1805
    %v1807 = vrot.slane %v1791, %v1806
    %v1809 = vunpack.c.l.s4 1966171168
    %v1810 = vunpack.c.0.s8 %v1809
    %v1811 = vlaneseq
    %v1812 = vshrl.u32 %v1811, 7
    %v1813 = vsub.s32 %v1810, %v1812
    %v1814 = vrot.slane %v1792, %v1813
    %v1816 = vunpack.c.l.s4 1966171168
    %v1817 = vunpack.c.0.s8 %v1816
    %v1818 = vlaneseq
    %v1819 = vshrl.u32 %v1818, 7
    %v1820 = vsub.s32 %v1817, %v1819
    %v1821 = vrot.slane %v1793, %v1820
    %v1822 = vcombine.low %v1800, %v1814
    %v1823 = vcombine.high %v1800, %v1814
    %v1824 = vcombine.low %v1807, %v1821
    %v1825 = vcombine.high %v1807, %v1821
    %v1827 = vunpack.c.l.s4 1966171168
    %v1828 = vunpack.c.0.s8 %v1827
    %v1829 = vlaneseq
    %v1830 = vshrl.u32 %v1829, 7
    %v1831 = vsub.s32 %v1828, %v1830
    %v1832 = vrot.slane %v1822, %v1831
    %v1834 = vunpack.c.l.s4 1966171168
    %v1835 = vunpack.c.0.s8 %v1834
    %v1836 = vlaneseq
    %v1837 = vshrl.u32 %v1836, 7
    %v1838 = vsub.s32 %v1835, %v1837
    %v1839 = vrot.slane %v1824, %v1838
    %v1841 = vunpack.c.l.s4 1966171168
    %v1842 = vunpack.c.0.s8 %v1841
    %v1843 = vlaneseq
    %v1844 = vshrl.u32 %v1843, 7
    %v1845 = vsub.s32 %v1842, %v1844
    %v1846 = vrot.slane %v1823, %v1845
    %v1848 = vunpack.c.l.s4 1966171168
    %v1849 = vunpack.c.0.s8 %v1848
    %v1850 = vlaneseq
    %v1851 = vshrl.u32 %v1850, 7
    %v1852 = vsub.s32 %v1849, %v1851
    %v1853 = vrot.slane %v1825, %v1852
    %v1854 = vcombine.high %v1832, %v1832
    %v1855 = vcombine.high %v1839, %v1839
    %v1856 = vcombine.high %v1846, %v1846
    %v1857 = vcombine.high %v1853, %v1853
    %v1858 = vlaneseq
    %v1859 = vshrl.u32 %v1858, 7
    %v1860 = vsub.s32 0, %v1859
    %v1861 = vrot.slane %v1832, %v1860
    %v1862 = vlaneseq
    %v1863 = vshrl.u32 %v1862, 7
    %v1864 = vsub.s32 1, %v1863
    %v1865 = vrot.slane %v1832, %v1864
    %v1866 = vlaneseq
    %v1867 = vshrl.u32 %v1866, 7
    %v1868 = vsub.s32 2, %v1867
    %v1869 = vrot.slane %v1832, %v1868
    %v1870 = vlaneseq
    %v1871 = vshrl.u32 %v1870, 7
    %v1872 = vsub.s32 3, %v1871
    %v1873 = vrot.slane %v1832, %v1872
    %v1874 = vlaneseq
    %v1875 = vshrl.u32 %v1874, 7
    %v1876 = vsub.s32 0, %v1875
    %v1877 = vrot.slane %v1846, %v1876
    %v1878 = vlaneseq
    %v1879 = vshrl.u32 %v1878, 7
    %v1880 = vsub.s32 1, %v1879
    %v1881 = vrot.slane %v1846, %v1880
    %v1882 = vlaneseq
    %v1883 = vshrl.u32 %v1882, 7
    %v1884 = vsub.s32 2, %v1883
    %v1885 = vrot.slane %v1846, %v1884
    %v1886 = vlaneseq
    %v1887 = vshrl.u32 %v1886, 7
    %v1888 = vsub.s32 3, %v1887
    %v1889 = vrot.slane %v1846, %v1888
    %v1890 = vlaneseq
    %v1891 = vshrl.u32 %v1890, 7
    %v1892 = vsub.s32 0, %v1891
    %v1893 = vrot.slane %v1854, %v1892
    %v1894 = vlaneseq
    %v1895 = vshrl.u32 %v1894, 7
    %v1896 = vsub.s32 1, %v1895
    %v1897 = vrot.slane %v1854, %v1896
    %v1898 = vlaneseq
    %v1899 = vshrl.u32 %v1898, 7
    %v1900 = vsub.s32 2, %v1899
    %v1901 = vrot.slane %v1854, %v1900
    %v1902 = vlaneseq
    %v1903 = vshrl.u32 %v1902, 7
    %v1904 = vsub.s32 3, %v1903
    %v1905 = vrot.slane %v1854, %v1904
    %v1906 = vlaneseq
    %v1907 = vshrl.u32 %v1906, 7
    %v1908 = vsub.s32 0, %v1907
    %v1909 = vrot.slane %v1856, %v1908
    %v1910 = vlaneseq
    %v1911 = vshrl.u32 %v1910, 7
    %v1912 = vsub.s32 1, %v1911
    %v1913 = vrot.slane %v1856, %v1912
    %v1914 = vlaneseq
    %v1915 = vshrl.u32 %v1914, 7
    %v1916 = vsub.s32 2, %v1915
    %v1917 = vrot.slane %v1856, %v1916
    %v1918 = vlaneseq
    %v1919 = vshrl.u32 %v1918, 7
    %v1920 = vsub.s32 3, %v1919
    %v1921 = vrot.slane %v1856, %v1920
    %v1922 = vlaneseq
    %v1923 = vshrl.u32 %v1922, 7
    %v1924 = vsub.s32 0, %v1923
    %v1925 = vrot.slane %v1839, %v1924
    %v1926 = vlaneseq
    %v1927 = vshrl.u32 %v1926, 7
    %v1928 = vsub.s32 1, %v1927
    %v1929 = vrot.slane %v1839, %v1928
    %v1930 = vlaneseq
    %v1931 = vshrl.u32 %v1930, 7
    %v1932 = vsub.s32 2, %v1931
    %v1933 = vrot.slane %v1839, %v1932
    %v1934 = vlaneseq
    %v1935 = vshrl.u32 %v1934, 7
    %v1936 = vsub.s32 3, %v1935
    %v1937 = vrot.slane %v1839, %v1936
    %v1938 = vlaneseq
    %v1939 = vshrl.u32 %v1938, 7
    %v1940 = vsub.s32 0, %v1939
    %v1941 = vrot.slane %v1853, %v1940
    %v1942 = vlaneseq
    %v1943 = vshrl.u32 %v1942, 7
    %v1944 = vsub.s32 1, %v1943
    %v1945 = vrot.slane %v1853, %v1944
    %v1946 = vlaneseq
    %v1947 = vshrl.u32 %v1946, 7
    %v1948 = vsub.s32 2, %v1947
    %v1949 = vrot.slane %v1853, %v1948
    %v1950 = vlaneseq
    %v1951 = vshrl.u32 %v1950, 7
    %v1952 = vsub.s32 3, %v1951
    %v1953 = vrot.slane %v1853, %v1952
    %v1954 = vlaneseq
    %v1955 = vshrl.u32 %v1954, 7
    %v1956 = vsub.s32 0, %v1955
    %v1957 = vrot.slane %v1855, %v1956
    %v1958 = vlaneseq
    %v1959 = vshrl.u32 %v1958, 7
    %v1960 = vsub.s32 1, %v1959
    %v1961 = vrot.slane %v1855, %v1960
    %v1962 = vlaneseq
    %v1963 = vshrl.u32 %v1962, 7
    %v1964 = vsub.s32 2, %v1963
    %v1965 = vrot.slane %v1855, %v1964
    %v1966 = vlaneseq
    %v1967 = vshrl.u32 %v1966, 7
    %v1968 = vsub.s32 3, %v1967
    %v1969 = vrot.slane %v1855, %v1968
    %v1970 = vlaneseq
    %v1971 = vshrl.u32 %v1970, 7
    %v1972 = vsub.s32 0, %v1971
    %v1973 = vrot.slane %v1857, %v1972
    %v1974 = vlaneseq
    %v1975 = vshrl.u32 %v1974, 7
    %v1976 = vsub.s32 1, %v1975
    %v1977 = vrot.slane %v1857, %v1976
    %v1978 = vlaneseq
    %v1979 = vshrl.u32 %v1978, 7
    %v1980 = vsub.s32 2, %v1979
    %v1981 = vrot.slane %v1857, %v1980
    %v1982 = vlaneseq
    %v1983 = vshrl.u32 %v1982, 7
    %v1984 = vsub.s32 3, %v1983
    %v1985 = vrot.slane %v1857, %v1984
    %v2018 = vadd.f32 %v1595, %v1861
    %v2019 = vadd.f32 %v1597, %v1865
    %v2020 = vadd.f32 %v1708, %v1869
    %v2021 = vadd.f32 %v1710, %v1873
    %v2022 = vadd.f32 %v1599, %v1861
    %v2023 = vadd.f32 %v1601, %v1865
    %v2024 = vadd.f32 %v1712, %v1869
    %v2025 = vadd.f32 %v1714, %v1873
    %v2026 = vadd.f32 %v1605, %v1877
    %v2027 = vadd.f32 %v1607, %v1881
    %v2028 = vadd.f32 %v1718, %v1885
    %v2029 = vadd.f32 %v1720, %v1889
    %v2030 = vadd.f32 %v1609, %v1877
    %v2031 = vadd.f32 %v1611, %v1881
    %v2032 = vadd.f32 %v1722, %v1885
    %v2033 = vadd.f32 %v1724, %v1889
    %v2034 = vadd.f32 %v1615, %v1893
    %v2035 = vadd.f32 %v1617, %v1897
    %v2036 = vadd.f32 %v1728, %v1901
    %v2037 = vadd.f32 %v1730, %v1905
    %v2038 = vadd.f32 %v1619, %v1893
    %v2039 = vadd.f32 %v1621, %v1897
    %v2040 = vadd.f32 %v1732, %v1901
    %v2041 = vadd.f32 %v1734, %v1905
    %v2042 = vadd.f32 %v1625, %v1909
    %v2043 = vadd.f32 %v1627, %v1913
    %v2044 = vadd.f32 %v1738, %v1917
    %v2045 = vadd.f32 %v1740, %v1921
    %v2046 = vadd.f32 %v1629, %v1909
    %v2047 = vadd.f32 %v1631, %v1913
    %v2048 = vadd.f32 %v1742, %v1917
    %v2049 = vadd.f32 %v1744, %v1921
    %v2050 = vadd.f32 %v1635, %v1925
    %v2051 = vadd.f32 %v1637, %v1929
    %v2052 = vadd.f32 %v1748, %v1933
    %v2053 = vadd.f32 %v1750, %v1937
    %v2054 = vadd.f32 %v1639, %v1925
    %v2055 = vadd.f32 %v1641, %v1929
    %v2056 = vadd.f32 %v1752, %v1933
    %v2057 = vadd.f32 %v1754, %v1937
    %v2058 = vadd.f32 %v1645, %v1941
    %v2059 = vadd.f32 %v1647, %v1945
    %v2060 = vadd.f32 %v1758, %v1949
    %v2061 = vadd.f32 %v1760, %v1953
    %v2062 = vadd.f32 %v1649, %v1941
    %v2063 = vadd.f32 %v1651, %v1945
    %v2064 = vadd.f32 %v1762, %v1949
    %v2065 = vadd.f32 %v1764, %v1953
    %v2066 = vadd.f32 %v1655, %v1957
    %v2067 = vadd.f32 %v1657, %v1961
    %v2068 = vadd.f32 %v1768, %v1965
    %v2069 = vadd.f32 %v1770, %v1969
    %v2070 = vadd.f32 %v1659, %v1957
    %v2071 = vadd.f32 %v1661, %v1961
    %v2072 = vadd.f32 %v1772, %v1965
    %v2073 = vadd.f32 %v1774, %v1969
    %v2074 = vadd.f32 %v1665, %v1973
    %v2075 = vadd.f32 %v1667, %v1977
    %v2076 = vadd.f32 %v1778, %v1981
    %v2077 = vadd.f32 %v1780, %v1985
    %v2078 = vadd.f32 %v1669, %v1973
    %v2079 = vadd.f32 %v1671, %v1977
    %v2080 = vadd.f32 %v1782, %v1981
    %v2081 = vadd.f32 %v1784, %v1985
    %v2082 = vld [vmem:[%s7] sm:$0xf]
    %v2084 = vlaneseq
    %v2085 = vshrl.u32 %v2084, 7
    %v2086 = vsub.s32 0, %v2085
    %v2087 = vrot.slane %v2082, %v2086
    %v2088 = vlaneseq
    %v2089 = vshrl.u32 %v2088, 7
    %v2090 = vsub.s32 1, %v2089
    %v2091 = vrot.slane %v2082, %v2090
    %v2092 = vlaneseq
    %v2093 = vshrl.u32 %v2092, 7
    %v2094 = vsub.s32 2, %v2093
    %v2095 = vrot.slane %v2082, %v2094
    %v2096 = vlaneseq
    %v2097 = vshrl.u32 %v2096, 7
    %v2098 = vsub.s32 3, %v2097
    %v2099 = vrot.slane %v2082, %v2098
    %v2104 = vadd.f32 %v2018, %v2087
    %v2105 = vadd.f32 %v2019, %v2091
    %v2106 = vadd.f32 %v2020, %v2095
    %v2107 = vadd.f32 %v2021, %v2099
    %v2108 = vadd.f32 %v2022, %v2087
    %v2109 = vadd.f32 %v2023, %v2091
    %v2110 = vadd.f32 %v2024, %v2095
    %v2111 = vadd.f32 %v2025, %v2099
    %v2112 = vadd.f32 %v2026, %v2087
    %v2113 = vadd.f32 %v2027, %v2091
    %v2114 = vadd.f32 %v2028, %v2095
    %v2115 = vadd.f32 %v2029, %v2099
    %v2116 = vadd.f32 %v2030, %v2087
    %v2117 = vadd.f32 %v2031, %v2091
    %v2118 = vadd.f32 %v2032, %v2095
    %v2119 = vadd.f32 %v2033, %v2099
    %v2120 = vadd.f32 %v2034, %v2087
    %v2121 = vadd.f32 %v2035, %v2091
    %v2122 = vadd.f32 %v2036, %v2095
    %v2123 = vadd.f32 %v2037, %v2099
    %v2124 = vadd.f32 %v2038, %v2087
    %v2125 = vadd.f32 %v2039, %v2091
    %v2126 = vadd.f32 %v2040, %v2095
    %v2127 = vadd.f32 %v2041, %v2099
    %v2128 = vadd.f32 %v2042, %v2087
    %v2129 = vadd.f32 %v2043, %v2091
    %v2130 = vadd.f32 %v2044, %v2095
    %v2131 = vadd.f32 %v2045, %v2099
    %v2132 = vadd.f32 %v2046, %v2087
    %v2133 = vadd.f32 %v2047, %v2091
    %v2134 = vadd.f32 %v2048, %v2095
    %v2135 = vadd.f32 %v2049, %v2099
    %v2136 = vadd.f32 %v2050, %v2087
    %v2137 = vadd.f32 %v2051, %v2091
    %v2138 = vadd.f32 %v2052, %v2095
    %v2139 = vadd.f32 %v2053, %v2099
    %v2140 = vadd.f32 %v2054, %v2087
    %v2141 = vadd.f32 %v2055, %v2091
    %v2142 = vadd.f32 %v2056, %v2095
    %v2143 = vadd.f32 %v2057, %v2099
    %v2144 = vadd.f32 %v2058, %v2087
    %v2145 = vadd.f32 %v2059, %v2091
    %v2146 = vadd.f32 %v2060, %v2095
    %v2147 = vadd.f32 %v2061, %v2099
    %v2148 = vadd.f32 %v2062, %v2087
    %v2149 = vadd.f32 %v2063, %v2091
    %v2150 = vadd.f32 %v2064, %v2095
    %v2151 = vadd.f32 %v2065, %v2099
    %v2152 = vadd.f32 %v2066, %v2087
    %v2153 = vadd.f32 %v2067, %v2091
    %v2154 = vadd.f32 %v2068, %v2095
    %v2155 = vadd.f32 %v2069, %v2099
    %v2156 = vadd.f32 %v2070, %v2087
    %v2157 = vadd.f32 %v2071, %v2091
    %v2158 = vadd.f32 %v2072, %v2095
    %v2159 = vadd.f32 %v2073, %v2099
    %v2160 = vadd.f32 %v2074, %v2087
    %v2161 = vadd.f32 %v2075, %v2091
    %v2162 = vadd.f32 %v2076, %v2095
    %v2163 = vadd.f32 %v2077, %v2099
    %v2164 = vadd.f32 %v2078, %v2087
    %v2165 = vadd.f32 %v2079, %v2091
    %v2166 = vadd.f32 %v2080, %v2095
    %v2167 = vadd.f32 %v2081, %v2099
    %v2168 = vmax.f32 %v2104, 0.0
    %v2169 = vmax.f32 %v2105, 0.0
    %v2170 = vmax.f32 %v2106, 0.0
    %v2171 = vmax.f32 %v2107, 0.0
    %v2172 = vmax.f32 %v2108, 0.0
    %v2173 = vmax.f32 %v2109, 0.0
    %v2174 = vmax.f32 %v2110, 0.0
    %v2175 = vmax.f32 %v2111, 0.0
    %v2176 = vmax.f32 %v2112, 0.0
    %v2177 = vmax.f32 %v2113, 0.0
    %v2178 = vmax.f32 %v2114, 0.0
    %v2179 = vmax.f32 %v2115, 0.0
    %v2180 = vmax.f32 %v2116, 0.0
    %v2181 = vmax.f32 %v2117, 0.0
    %v2182 = vmax.f32 %v2118, 0.0
    %v2183 = vmax.f32 %v2119, 0.0
    %v2184 = vmax.f32 %v2120, 0.0
    %v2185 = vmax.f32 %v2121, 0.0
    %v2186 = vmax.f32 %v2122, 0.0
    %v2187 = vmax.f32 %v2123, 0.0
    %v2188 = vmax.f32 %v2124, 0.0
    %v2189 = vmax.f32 %v2125, 0.0
    %v2190 = vmax.f32 %v2126, 0.0
    %v2191 = vmax.f32 %v2127, 0.0
    %v2192 = vmax.f32 %v2128, 0.0
    %v2193 = vmax.f32 %v2129, 0.0
    %v2194 = vmax.f32 %v2130, 0.0
    %v2195 = vmax.f32 %v2131, 0.0
    %v2196 = vmax.f32 %v2132, 0.0
    %v2197 = vmax.f32 %v2133, 0.0
    %v2198 = vmax.f32 %v2134, 0.0
    %v2199 = vmax.f32 %v2135, 0.0
    %v2200 = vmax.f32 %v2136, 0.0
    %v2201 = vmax.f32 %v2137, 0.0
    %v2202 = vmax.f32 %v2138, 0.0
    %v2203 = vmax.f32 %v2139, 0.0
    %v2204 = vmax.f32 %v2140, 0.0
    %v2205 = vmax.f32 %v2141, 0.0
    %v2206 = vmax.f32 %v2142, 0.0
    %v2207 = vmax.f32 %v2143, 0.0
    %v2208 = vmax.f32 %v2144, 0.0
    %v2209 = vmax.f32 %v2145, 0.0
    %v2210 = vmax.f32 %v2146, 0.0
    %v2211 = vmax.f32 %v2147, 0.0
    %v2212 = vmax.f32 %v2148, 0.0
    %v2213 = vmax.f32 %v2149, 0.0
    %v2214 = vmax.f32 %v2150, 0.0
    %v2215 = vmax.f32 %v2151, 0.0
    %v2216 = vmax.f32 %v2152, 0.0
    %v2217 = vmax.f32 %v2153, 0.0
    %v2218 = vmax.f32 %v2154, 0.0
    %v2219 = vmax.f32 %v2155, 0.0
    %v2220 = vmax.f32 %v2156, 0.0
    %v2221 = vmax.f32 %v2157, 0.0
    %v2222 = vmax.f32 %v2158, 0.0
    %v2223 = vmax.f32 %v2159, 0.0
    %v2224 = vmax.f32 %v2160, 0.0
    %v2225 = vmax.f32 %v2161, 0.0
    %v2226 = vmax.f32 %v2162, 0.0
    %v2227 = vmax.f32 %v2163, 0.0
    %v2228 = vmax.f32 %v2164, 0.0
    %v2229 = vmax.f32 %v2165, 0.0
    %v2230 = vmax.f32 %v2166, 0.0
    %v2231 = vmax.f32 %v2167, 0.0
    %v2232 = vpack.c.bf16 %v2172, %v2168
    %v2233 = vpack.c.bf16 %v2173, %v2169
    %v2234 = vpack.c.bf16 %v2174, %v2170
    %v2235 = vpack.c.bf16 %v2175, %v2171
    %v2236 = vpack.c.bf16 %v2180, %v2176
    %v2237 = vpack.c.bf16 %v2181, %v2177
    %v2238 = vpack.c.bf16 %v2182, %v2178
    %v2239 = vpack.c.bf16 %v2183, %v2179
    %v2240 = vpack.c.bf16 %v2188, %v2184
    %v2241 = vpack.c.bf16 %v2189, %v2185
    %v2242 = vpack.c.bf16 %v2190, %v2186
    %v2243 = vpack.c.bf16 %v2191, %v2187
    %v2244 = vpack.c.bf16 %v2196, %v2192
    %v2245 = vpack.c.bf16 %v2197, %v2193
    %v2246 = vpack.c.bf16 %v2198, %v2194
    %v2247 = vpack.c.bf16 %v2199, %v2195
    %v2248 = vpack.c.bf16 %v2204, %v2200
    %v2249 = vpack.c.bf16 %v2205, %v2201
    %v2250 = vpack.c.bf16 %v2206, %v2202
    %v2251 = vpack.c.bf16 %v2207, %v2203
    %v2252 = vpack.c.bf16 %v2212, %v2208
    %v2253 = vpack.c.bf16 %v2213, %v2209
    %v2254 = vpack.c.bf16 %v2214, %v2210
    %v2255 = vpack.c.bf16 %v2215, %v2211
    %v2256 = vpack.c.bf16 %v2220, %v2216
    %v2257 = vpack.c.bf16 %v2221, %v2217
    %v2258 = vpack.c.bf16 %v2222, %v2218
    %v2259 = vpack.c.bf16 %v2223, %v2219
    %v2260 = vpack.c.bf16 %v2228, %v2224
    %v2261 = vpack.c.bf16 %v2229, %v2225
    %v2262 = vpack.c.bf16 %v2230, %v2226
    %v2263 = vpack.c.bf16 %v2231, %v2227
    %v2264 = vld [vmem:[#allocation11] sm:$0xff]
    %v2265 = vld [vmem:[#allocation11 + $0x8] sm:$0xff]
    %v2266 = vld [vmem:[#allocation11 + $0x10] sm:$0xff]
    %v2267 = vld [vmem:[#allocation11 + $0x18] sm:$0xff]
    %v2268 = vld [vmem:[#allocation11 + $0x20] sm:$0xff]
    %v2269 = vld [vmem:[#allocation11 + $0x28] sm:$0xff]
    %v2270 = vld [vmem:[#allocation11 + $0x30] sm:$0xff]
    %v2271 = vld [vmem:[#allocation11 + $0x38] sm:$0xff]
    %v2272 = vld [vmem:[#allocation11 + $0x40] sm:$0xff]
    %v2273 = vld [vmem:[#allocation11 + $0x48] sm:$0xff]
    %v2274 = vld [vmem:[#allocation11 + $0x50] sm:$0xff]
    %v2275 = vld [vmem:[#allocation11 + $0x58] sm:$0xff]
    %v2276 = vld [vmem:[#allocation11 + $0x60] sm:$0xff]
    %v2277 = vld [vmem:[#allocation11 + $0x68] sm:$0xff]
    %v2278 = vld [vmem:[#allocation11 + $0x70] sm:$0xff]
    %v2279 = vld [vmem:[#allocation11 + $0x78] sm:$0xff]
    %v2280 = vld [vmem:[#allocation11 + $0x80] sm:$0xff]
    %v2281 = vld [vmem:[#allocation11 + $0x88] sm:$0xff]
    %v2282 = vld [vmem:[#allocation11 + $0x90] sm:$0xff]
    %v2283 = vld [vmem:[#allocation11 + $0x98] sm:$0xff]
    %v2284 = vld [vmem:[#allocation11 + $0xa0] sm:$0xff]
    %v2285 = vld [vmem:[#allocation11 + $0xa8] sm:$0xff]
    %v2286 = vld [vmem:[#allocation11 + $0xb0] sm:$0xff]
    %v2287 = vld [vmem:[#allocation11 + $0xb8] sm:$0xff]
    %v2288 = vld [vmem:[#allocation11 + $0xc0] sm:$0xff]
    %v2289 = vld [vmem:[#allocation11 + $0xc8] sm:$0xff]
    %v2290 = vld [vmem:[#allocation11 + $0xd0] sm:$0xff]
    %v2291 = vld [vmem:[#allocation11 + $0xd8] sm:$0xff]
    %v2292 = vld [vmem:[#allocation11 + $0xe0] sm:$0xff]
    %v2293 = vld [vmem:[#allocation11 + $0xe8] sm:$0xff]
    %v2294 = vld [vmem:[#allocation11 + $0xf0] sm:$0xff]
    %v2295 = vld [vmem:[#allocation11 + $0xf8] sm:$0xff]
    %v2296 = vld [vmem:[#allocation11 + $0x100] sm:$0xff]
    %v2297 = vld [vmem:[#allocation11 + $0x108] sm:$0xff]
    %v2298 = vld [vmem:[#allocation11 + $0x110] sm:$0xff]
    %v2299 = vld [vmem:[#allocation11 + $0x118] sm:$0xff]
    %v2300 = vld [vmem:[#allocation11 + $0x120] sm:$0xff]
    %v2301 = vld [vmem:[#allocation11 + $0x128] sm:$0xff]
    %v2302 = vld [vmem:[#allocation11 + $0x130] sm:$0xff]
    %v2303 = vld [vmem:[#allocation11 + $0x138] sm:$0xff]
    %v2304 = vld [vmem:[#allocation11 + $0x140] sm:$0xff]
    %v2305 = vld [vmem:[#allocation11 + $0x148] sm:$0xff]
    %v2306 = vld [vmem:[#allocation11 + $0x150] sm:$0xff]
    %v2307 = vld [vmem:[#allocation11 + $0x158] sm:$0xff]
    %v2308 = vld [vmem:[#allocation11 + $0x160] sm:$0xff]
    %v2309 = vld [vmem:[#allocation11 + $0x168] sm:$0xff]
    %v2310 = vld [vmem:[#allocation11 + $0x170] sm:$0xff]
    %v2311 = vld [vmem:[#allocation11 + $0x178] sm:$0xff]
    %v2312 = vld [vmem:[#allocation11 + $0x180] sm:$0xff]
    %v2313 = vld [vmem:[#allocation11 + $0x188] sm:$0xff]
    %v2314 = vld [vmem:[#allocation11 + $0x190] sm:$0xff]
    %v2315 = vld [vmem:[#allocation11 + $0x198] sm:$0xff]
    %v2316 = vld [vmem:[#allocation11 + $0x1a0] sm:$0xff]
    %v2317 = vld [vmem:[#allocation11 + $0x1a8] sm:$0xff]
    %v2318 = vld [vmem:[#allocation11 + $0x1b0] sm:$0xff]
    %v2319 = vld [vmem:[#allocation11 + $0x1b8] sm:$0xff]
    %v2320 = vld [vmem:[#allocation11 + $0x1c0] sm:$0xff]
    %v2321 = vld [vmem:[#allocation11 + $0x1c8] sm:$0xff]
    %v2322 = vld [vmem:[#allocation11 + $0x1d0] sm:$0xff]
    %v2323 = vld [vmem:[#allocation11 + $0x1d8] sm:$0xff]
    %v2324 = vld [vmem:[#allocation11 + $0x1e0] sm:$0xff]
    %v2325 = vld [vmem:[#allocation11 + $0x1e8] sm:$0xff]
    %v2326 = vld [vmem:[#allocation11 + $0x1f0] sm:$0xff]
    %v2327 = vld [vmem:[#allocation11 + $0x1f8] sm:$0xff]
    %v2328 = vld [vmem:[%s9] sm:$0x3]
    %v2330 = vlaneseq
    %v2331 = vshrl.u32 %v2330, 7
    %v2332 = vsub.s32 0, %v2331
    %v2333 = vrot.slane %v2328, %v2332
    %v2334 = vlaneseq
    %v2335 = vshrl.u32 %v2334, 7
    %v2336 = vsub.s32 1, %v2335
    %v2337 = vrot.slane %v2328, %v2336
    %v2404 = vunpack.c.l.b16 %v2264
    %v2405 = vunpack.c.h.b16 %v2264
    %v2406 = vunpack.c.l.b16 %v2265
    %v2407 = vunpack.c.h.b16 %v2265
    %v2408 = vunpack.c.l.b16 %v2266
    %v2409 = vunpack.c.h.b16 %v2266
    %v2410 = vunpack.c.l.b16 %v2267
    %v2411 = vunpack.c.h.b16 %v2267
    %v2412 = vunpack.c.l.b16 %v2268
    %v2413 = vunpack.c.h.b16 %v2268
    %v2414 = vunpack.c.l.b16 %v2269
    %v2415 = vunpack.c.h.b16 %v2269
    %v2416 = vunpack.c.l.b16 %v2270
    %v2417 = vunpack.c.h.b16 %v2270
    %v2418 = vunpack.c.l.b16 %v2271
    %v2419 = vunpack.c.h.b16 %v2271
    %v2420 = vunpack.c.l.b16 %v2272
    %v2421 = vunpack.c.h.b16 %v2272
    %v2422 = vunpack.c.l.b16 %v2273
    %v2423 = vunpack.c.h.b16 %v2273
    %v2424 = vunpack.c.l.b16 %v2274
    %v2425 = vunpack.c.h.b16 %v2274
    %v2426 = vunpack.c.l.b16 %v2275
    %v2427 = vunpack.c.h.b16 %v2275
    %v2428 = vunpack.c.l.b16 %v2276
    %v2429 = vunpack.c.h.b16 %v2276
    %v2430 = vunpack.c.l.b16 %v2277
    %v2431 = vunpack.c.h.b16 %v2277
    %v2432 = vunpack.c.l.b16 %v2278
    %v2433 = vunpack.c.h.b16 %v2278
    %v2434 = vunpack.c.l.b16 %v2279
    %v2435 = vunpack.c.h.b16 %v2279
    %v2436 = vunpack.c.l.b16 %v2280
    %v2437 = vunpack.c.h.b16 %v2280
    %v2438 = vunpack.c.l.b16 %v2281
    %v2439 = vunpack.c.h.b16 %v2281
    %v2440 = vunpack.c.l.b16 %v2282
    %v2441 = vunpack.c.h.b16 %v2282
    %v2442 = vunpack.c.l.b16 %v2283
    %v2443 = vunpack.c.h.b16 %v2283
    %v2444 = vunpack.c.l.b16 %v2284
    %v2445 = vunpack.c.h.b16 %v2284
    %v2446 = vunpack.c.l.b16 %v2285
    %v2447 = vunpack.c.h.b16 %v2285
    %v2448 = vunpack.c.l.b16 %v2286
    %v2449 = vunpack.c.h.b16 %v2286
    %v2450 = vunpack.c.l.b16 %v2287
    %v2451 = vunpack.c.h.b16 %v2287
    %v2452 = vunpack.c.l.b16 %v2288
    %v2453 = vunpack.c.h.b16 %v2288
    %v2454 = vunpack.c.l.b16 %v2289
    %v2455 = vunpack.c.h.b16 %v2289
    %v2456 = vunpack.c.l.b16 %v2290
    %v2457 = vunpack.c.h.b16 %v2290
    %v2458 = vunpack.c.l.b16 %v2291
    %v2459 = vunpack.c.h.b16 %v2291
    %v2460 = vunpack.c.l.b16 %v2292
    %v2461 = vunpack.c.h.b16 %v2292
    %v2462 = vunpack.c.l.b16 %v2293
    %v2463 = vunpack.c.h.b16 %v2293
    %v2464 = vunpack.c.l.b16 %v2294
    %v2465 = vunpack.c.h.b16 %v2294
    %v2466 = vunpack.c.l.b16 %v2295
    %v2467 = vunpack.c.h.b16 %v2295
    %v2468 = vunpack.c.l.b16 %v2296
    %v2469 = vunpack.c.h.b16 %v2296
    %v2470 = vunpack.c.l.b16 %v2297
    %v2471 = vunpack.c.h.b16 %v2297
    %v2472 = vunpack.c.l.b16 %v2298
    %v2473 = vunpack.c.h.b16 %v2298
    %v2474 = vunpack.c.l.b16 %v2299
    %v2475 = vunpack.c.h.b16 %v2299
    %v2476 = vunpack.c.l.b16 %v2300
    %v2477 = vunpack.c.h.b16 %v2300
    %v2478 = vunpack.c.l.b16 %v2301
    %v2479 = vunpack.c.h.b16 %v2301
    %v2480 = vunpack.c.l.b16 %v2302
    %v2481 = vunpack.c.h.b16 %v2302
    %v2482 = vunpack.c.l.b16 %v2303
    %v2483 = vunpack.c.h.b16 %v2303
    %v2484 = vunpack.c.l.b16 %v2304
    %v2485 = vunpack.c.h.b16 %v2304
    %v2486 = vunpack.c.l.b16 %v2305
    %v2487 = vunpack.c.h.b16 %v2305
    %v2488 = vunpack.c.l.b16 %v2306
    %v2489 = vunpack.c.h.b16 %v2306
    %v2490 = vunpack.c.l.b16 %v2307
    %v2491 = vunpack.c.h.b16 %v2307
    %v2492 = vunpack.c.l.b16 %v2308
    %v2493 = vunpack.c.h.b16 %v2308
    %v2494 = vunpack.c.l.b16 %v2309
    %v2495 = vunpack.c.h.b16 %v2309
    %v2496 = vunpack.c.l.b16 %v2310
    %v2497 = vunpack.c.h.b16 %v2310
    %v2498 = vunpack.c.l.b16 %v2311
    %v2499 = vunpack.c.h.b16 %v2311
    %v2500 = vunpack.c.l.b16 %v2312
    %v2501 = vunpack.c.h.b16 %v2312
    %v2502 = vunpack.c.l.b16 %v2313
    %v2503 = vunpack.c.h.b16 %v2313
    %v2504 = vunpack.c.l.b16 %v2314
    %v2505 = vunpack.c.h.b16 %v2314
    %v2506 = vunpack.c.l.b16 %v2315
    %v2507 = vunpack.c.h.b16 %v2315
    %v2508 = vunpack.c.l.b16 %v2316
    %v2509 = vunpack.c.h.b16 %v2316
    %v2510 = vunpack.c.l.b16 %v2317
    %v2511 = vunpack.c.h.b16 %v2317
    %v2512 = vunpack.c.l.b16 %v2318
    %v2513 = vunpack.c.h.b16 %v2318
    %v2514 = vunpack.c.l.b16 %v2319
    %v2515 = vunpack.c.h.b16 %v2319
    %v2516 = vunpack.c.l.b16 %v2320
    %v2517 = vunpack.c.h.b16 %v2320
    %v2518 = vunpack.c.l.b16 %v2321
    %v2519 = vunpack.c.h.b16 %v2321
    %v2520 = vunpack.c.l.b16 %v2322
    %v2521 = vunpack.c.h.b16 %v2322
    %v2522 = vunpack.c.l.b16 %v2323
    %v2523 = vunpack.c.h.b16 %v2323
    %v2524 = vunpack.c.l.b16 %v2324
    %v2525 = vunpack.c.h.b16 %v2324
    %v2526 = vunpack.c.l.b16 %v2325
    %v2527 = vunpack.c.h.b16 %v2325
    %v2528 = vunpack.c.l.b16 %v2326
    %v2529 = vunpack.c.h.b16 %v2326
    %v2530 = vunpack.c.l.b16 %v2327
    %v2531 = vunpack.c.h.b16 %v2327
    %v2532 = vpack.c.b16 %v2406, %v2404
    %v2533 = vpack.c.b16 %v2407, %v2405
    %v2534 = vpack.c.b16 %v2410, %v2408
    %v2535 = vpack.c.b16 %v2411, %v2409
    %v2536 = vpack.c.b16 %v2414, %v2412
    %v2537 = vpack.c.b16 %v2415, %v2413
    %v2538 = vpack.c.b16 %v2418, %v2416
    %v2539 = vpack.c.b16 %v2419, %v2417
    %v2540 = vpack.c.b16 %v2422, %v2420
    %v2541 = vpack.c.b16 %v2423, %v2421
    %v2542 = vpack.c.b16 %v2426, %v2424
    %v2543 = vpack.c.b16 %v2427, %v2425
    %v2544 = vpack.c.b16 %v2430, %v2428
    %v2545 = vpack.c.b16 %v2431, %v2429
    %v2546 = vpack.c.b16 %v2434, %v2432
    %v2547 = vpack.c.b16 %v2435, %v2433
    %v2548 = vpack.c.b16 %v2438, %v2436
    %v2549 = vpack.c.b16 %v2439, %v2437
    %v2550 = vpack.c.b16 %v2442, %v2440
    %v2551 = vpack.c.b16 %v2443, %v2441
    %v2552 = vpack.c.b16 %v2446, %v2444
    %v2553 = vpack.c.b16 %v2447, %v2445
    %v2554 = vpack.c.b16 %v2450, %v2448
    %v2555 = vpack.c.b16 %v2451, %v2449
    %v2556 = vpack.c.b16 %v2454, %v2452
    %v2557 = vpack.c.b16 %v2455, %v2453
    %v2558 = vpack.c.b16 %v2458, %v2456
    %v2559 = vpack.c.b16 %v2459, %v2457
    %v2560 = vpack.c.b16 %v2462, %v2460
    %v2561 = vpack.c.b16 %v2463, %v2461
    %v2562 = vpack.c.b16 %v2466, %v2464
    %v2563 = vpack.c.b16 %v2467, %v2465
    %v2564 = vpack.c.b16 %v2470, %v2468
    %v2565 = vpack.c.b16 %v2471, %v2469
    %v2566 = vpack.c.b16 %v2474, %v2472
    %v2567 = vpack.c.b16 %v2475, %v2473
    %v2568 = vpack.c.b16 %v2478, %v2476
    %v2569 = vpack.c.b16 %v2479, %v2477
    %v2570 = vpack.c.b16 %v2482, %v2480
    %v2571 = vpack.c.b16 %v2483, %v2481
    %v2572 = vpack.c.b16 %v2486, %v2484
    %v2573 = vpack.c.b16 %v2487, %v2485
    %v2574 = vpack.c.b16 %v2490, %v2488
    %v2575 = vpack.c.b16 %v2491, %v2489
    %v2576 = vpack.c.b16 %v2494, %v2492
    %v2577 = vpack.c.b16 %v2495, %v2493
    %v2578 = vpack.c.b16 %v2498, %v2496
    %v2579 = vpack.c.b16 %v2499, %v2497
    %v2580 = vpack.c.b16 %v2502, %v2500
    %v2581 = vpack.c.b16 %v2503, %v2501
    %v2582 = vpack.c.b16 %v2506, %v2504
    %v2583 = vpack.c.b16 %v2507, %v2505
    %v2584 = vpack.c.b16 %v2510, %v2508
    %v2585 = vpack.c.b16 %v2511, %v2509
    %v2586 = vpack.c.b16 %v2514, %v2512
    %v2587 = vpack.c.b16 %v2515, %v2513
    %v2588 = vpack.c.b16 %v2518, %v2516
    %v2589 = vpack.c.b16 %v2519, %v2517
    %v2590 = vpack.c.b16 %v2522, %v2520
    %v2591 = vpack.c.b16 %v2523, %v2521
    %v2592 = vpack.c.b16 %v2526, %v2524
    %v2593 = vpack.c.b16 %v2527, %v2525
    %v2594 = vpack.c.b16 %v2530, %v2528
    %v2595 = vpack.c.b16 %v2531, %v2529
    %2660 = vmatprep.subr.bf16.mxu0 %v2533
    %2661 = vmatpush1.bf16.msra.mxu0 %v2532
    %2662 = vmatprep.subr.bf16.mxu0 %v2535
    %2663 = vmatpush1.bf16.msra.mxu0 %v2534
    %2664 = vmatprep.subr.bf16.mxu0 %v2537
    %2665 = vmatpush1.bf16.msra.mxu0 %v2536
    %2666 = vmatprep.subr.bf16.mxu0 %v2539
    %2667 = vmatpush1.bf16.msra.mxu0 %v2538
    %2668 = vmatprep.subr.bf16.mxu0 %v2541
    %2669 = vmatpush1.bf16.msra.mxu0 %v2540
    %2670 = vmatprep.subr.bf16.mxu0 %v2543
    %2671 = vmatpush1.bf16.msra.mxu0 %v2542
    %2672 = vmatprep.subr.bf16.mxu0 %v2545
    %2673 = vmatpush1.bf16.msra.mxu0 %v2544
    %2674 = vmatprep.subr.bf16.mxu0 %v2547
    %2675 = vmatpush1.bf16.msra.mxu0 %v2546
    %2676 = vmatprep.subr.bf16.mxu0 %v2549
    %2677 = vmatpush1.bf16.msra.mxu0 %v2548
    %2678 = vmatprep.subr.bf16.mxu0 %v2551
    %2679 = vmatpush1.bf16.msra.mxu0 %v2550
    %2680 = vmatprep.subr.bf16.mxu0 %v2553
    %2681 = vmatpush1.bf16.msra.mxu0 %v2552
    %2682 = vmatprep.subr.bf16.mxu0 %v2555
    %2683 = vmatpush1.bf16.msra.mxu0 %v2554
    %2684 = vmatprep.subr.bf16.mxu0 %v2557
    %2685 = vmatpush1.bf16.msra.mxu0 %v2556
    %2686 = vmatprep.subr.bf16.mxu0 %v2559
    %2687 = vmatpush1.bf16.msra.mxu0 %v2558
    %2688 = vmatprep.subr.bf16.mxu0 %v2561
    %2689 = vmatpush1.bf16.msra.mxu0 %v2560
    %2690 = vmatprep.subr.bf16.mxu0 %v2563
    %2691 = vmatpush1.bf16.msra.mxu0 %v2562
    %2692 = vmatprep.mubr.bf16.mxu0 %v2233
    %2693 = vmatmul.mubr.bf16.gmra.mrb[0].mxu0 %v2232
    %v2694 = vpop.f32.mrb[0].mxu0
    %v2695 = vadd.f32 %v2333, %v2694
    %v2696 = vpop.f32.mrb[0].mxu0
    %v2697 = vadd.f32 %v2337, %v2696
    %v2698 = vpop.f32.mrb[0].mxu0
    %v2699 = vadd.f32 %v2333, %v2698
    %v2700 = vpop.f32.mrb[0].mxu0
    %v2701 = vadd.f32 %v2337, %v2700
    %2702 = vmatprep.mubr.bf16.mxu0 %v2237
    %2703 = vmatmul.mubr.bf16.gmra.mrb[0].mxu0 %v2236
    %v2704 = vpop.f32.mrb[0].mxu0
    %v2705 = vadd.f32 %v2333, %v2704
    %v2706 = vpop.f32.mrb[0].mxu0
    %v2707 = vadd.f32 %v2337, %v2706
    %v2708 = vpop.f32.mrb[0].mxu0
    %v2709 = vadd.f32 %v2333, %v2708
    %v2710 = vpop.f32.mrb[0].mxu0
    %v2711 = vadd.f32 %v2337, %v2710
    %2712 = vmatprep.mubr.bf16.mxu0 %v2241
    %2713 = vmatmul.mubr.bf16.gmra.mrb[0].mxu0 %v2240
    %v2714 = vpop.f32.mrb[0].mxu0
    %v2715 = vadd.f32 %v2333, %v2714
    %v2716 = vpop.f32.mrb[0].mxu0
    %v2717 = vadd.f32 %v2337, %v2716
    %v2718 = vpop.f32.mrb[0].mxu0
    %v2719 = vadd.f32 %v2333, %v2718
    %v2720 = vpop.f32.mrb[0].mxu0
    %v2721 = vadd.f32 %v2337, %v2720
    %2722 = vmatprep.mubr.bf16.mxu0 %v2245
    %2723 = vmatmul.mubr.bf16.gmra.mrb[0].mxu0 %v2244
    %v2724 = vpop.f32.mrb[0].mxu0
    %v2725 = vadd.f32 %v2333, %v2724
    %v2726 = vpop.f32.mrb[0].mxu0
    %v2727 = vadd.f32 %v2337, %v2726
    %v2728 = vpop.f32.mrb[0].mxu0
    %v2729 = vadd.f32 %v2333, %v2728
    %v2730 = vpop.f32.mrb[0].mxu0
    %v2731 = vadd.f32 %v2337, %v2730
    %2732 = vmatprep.mubr.bf16.mxu0 %v2249
    %2733 = vmatmul.mubr.bf16.gmra.mrb[0].mxu0 %v2248
    %v2734 = vpop.f32.mrb[0].mxu0
    %v2735 = vadd.f32 %v2333, %v2734
    %v2736 = vpop.f32.mrb[0].mxu0
    %v2737 = vadd.f32 %v2337, %v2736
    %v2738 = vpop.f32.mrb[0].mxu0
    %v2739 = vadd.f32 %v2333, %v2738
    %v2740 = vpop.f32.mrb[0].mxu0
    %v2741 = vadd.f32 %v2337, %v2740
    %2742 = vmatprep.mubr.bf16.mxu0 %v2253
    %2743 = vmatmul.mubr.bf16.gmra.mrb[0].mxu0 %v2252
    %v2744 = vpop.f32.mrb[0].mxu0
    %v2745 = vadd.f32 %v2333, %v2744
    %v2746 = vpop.f32.mrb[0].mxu0
    %v2747 = vadd.f32 %v2337, %v2746
    %v2748 = vpop.f32.mrb[0].mxu0
    %v2749 = vadd.f32 %v2333, %v2748
    %v2750 = vpop.f32.mrb[0].mxu0
    %v2751 = vadd.f32 %v2337, %v2750
    %2752 = vmatprep.mubr.bf16.mxu0 %v2257
    %2753 = vmatmul.mubr.bf16.gmra.mrb[0].mxu0 %v2256
    %v2754 = vpop.f32.mrb[0].mxu0
    %v2755 = vadd.f32 %v2333, %v2754
    %v2756 = vpop.f32.mrb[0].mxu0
    %v2757 = vadd.f32 %v2337, %v2756
    %v2758 = vpop.f32.mrb[0].mxu0
    %v2759 = vadd.f32 %v2333, %v2758
    %v2760 = vpop.f32.mrb[0].mxu0
    %v2761 = vadd.f32 %v2337, %v2760
    %2762 = vmatprep.mubr.bf16.mxu0 %v2261
    %2763 = vmatmul.mubr.bf16.gmra.mrb[0].mxu0 %v2260
    %v2764 = vpop.f32.mrb[0].mxu0
    %v2765 = vadd.f32 %v2333, %v2764
    %v2766 = vpop.f32.mrb[0].mxu0
    %v2767 = vadd.f32 %v2337, %v2766
    %v2768 = vpop.f32.mrb[0].mxu0
    %v2769 = vadd.f32 %v2333, %v2768
    %v2770 = vpop.f32.mrb[0].mxu0
    %v2771 = vadd.f32 %v2337, %v2770
    %2772 = vdwg.mxu0
    %2773 = vmatprep.subr.bf16.mxu0 %v2565
    %2774 = vmatpush1.bf16.msra.mxu0 %v2564
    %2775 = vmatprep.subr.bf16.mxu0 %v2567
    %2776 = vmatpush1.bf16.msra.mxu0 %v2566
    %2777 = vmatprep.subr.bf16.mxu0 %v2569
    %2778 = vmatpush1.bf16.msra.mxu0 %v2568
    %2779 = vmatprep.subr.bf16.mxu0 %v2571
    %2780 = vmatpush1.bf16.msra.mxu0 %v2570
    %2781 = vmatprep.subr.bf16.mxu0 %v2573
    %2782 = vmatpush1.bf16.msra.mxu0 %v2572
    %2783 = vmatprep.subr.bf16.mxu0 %v2575
    %2784 = vmatpush1.bf16.msra.mxu0 %v2574
    %2785 = vmatprep.subr.bf16.mxu0 %v2577
    %2786 = vmatpush1.bf16.msra.mxu0 %v2576
    %2787 = vmatprep.subr.bf16.mxu0 %v2579
    %2788 = vmatpush1.bf16.msra.mxu0 %v2578
    %2789 = vmatprep.subr.bf16.mxu0 %v2581
    %2790 = vmatpush1.bf16.msra.mxu0 %v2580
    %2791 = vmatprep.subr.bf16.mxu0 %v2583
    %2792 = vmatpush1.bf16.msra.mxu0 %v2582
    %2793 = vmatprep.subr.bf16.mxu0 %v2585
    %2794 = vmatpush1.bf16.msra.mxu0 %v2584
    %2795 = vmatprep.subr.bf16.mxu0 %v2587
    %2796 = vmatpush1.bf16.msra.mxu0 %v2586
    %2797 = vmatprep.subr.bf16.mxu0 %v2589
    %2798 = vmatpush1.bf16.msra.mxu0 %v2588
    %2799 = vmatprep.subr.bf16.mxu0 %v2591
    %2800 = vmatpush1.bf16.msra.mxu0 %v2590
    %2801 = vmatprep.subr.bf16.mxu0 %v2593
    %2802 = vmatpush1.bf16.msra.mxu0 %v2592
    %2803 = vmatprep.subr.bf16.mxu0 %v2595
    %2804 = vmatpush1.bf16.msra.mxu0 %v2594
    %2805 = vmatprep.mubr.bf16.mxu0 %v2235
    %2806 = vmatmul.mubr.bf16.gmra.mrb[0].mxu0 %v2234
    %v2807 = vpop.f32.mrb[0].mxu0
    %v2808 = vadd.f32 %v2695, %v2807
    %v2809 = vpop.f32.mrb[0].mxu0
    %v2810 = vadd.f32 %v2697, %v2809
    %v2811 = vpop.f32.mrb[0].mxu0
    %v2812 = vadd.f32 %v2699, %v2811
    %v2813 = vpop.f32.mrb[0].mxu0
    %v2814 = vadd.f32 %v2701, %v2813
    %2815 = vmatprep.mubr.bf16.mxu0 %v2239
    %2816 = vmatmul.mubr.bf16.gmra.mrb[0].mxu0 %v2238
    %v2817 = vpop.f32.mrb[0].mxu0
    %v2818 = vadd.f32 %v2705, %v2817
    %v2819 = vpop.f32.mrb[0].mxu0
    %v2820 = vadd.f32 %v2707, %v2819
    %v2821 = vpop.f32.mrb[0].mxu0
    %v2822 = vadd.f32 %v2709, %v2821
    %v2823 = vpop.f32.mrb[0].mxu0
    %v2824 = vadd.f32 %v2711, %v2823
    %2825 = vmatprep.mubr.bf16.mxu0 %v2243
    %2826 = vmatmul.mubr.bf16.gmra.mrb[0].mxu0 %v2242
    %v2827 = vpop.f32.mrb[0].mxu0
    %v2828 = vadd.f32 %v2715, %v2827
    %v2829 = vpop.f32.mrb[0].mxu0
    %v2830 = vadd.f32 %v2717, %v2829
    %v2831 = vpop.f32.mrb[0].mxu0
    %v2832 = vadd.f32 %v2719, %v2831
    %v2833 = vpop.f32.mrb[0].mxu0
    %v2834 = vadd.f32 %v2721, %v2833
    %2835 = vmatprep.mubr.bf16.mxu0 %v2247
    %2836 = vmatmul.mubr.bf16.gmra.mrb[0].mxu0 %v2246
    %v2837 = vpop.f32.mrb[0].mxu0
    %v2838 = vadd.f32 %v2725, %v2837
    %v2839 = vpop.f32.mrb[0].mxu0
    %v2840 = vadd.f32 %v2727, %v2839
    %v2841 = vpop.f32.mrb[0].mxu0
    %v2842 = vadd.f32 %v2729, %v2841
    %v2843 = vpop.f32.mrb[0].mxu0
    %v2844 = vadd.f32 %v2731, %v2843
    %2845 = vmatprep.mubr.bf16.mxu0 %v2251
    %2846 = vmatmul.mubr.bf16.gmra.mrb[0].mxu0 %v2250
    %v2847 = vpop.f32.mrb[0].mxu0
    %v2848 = vadd.f32 %v2735, %v2847
    %v2849 = vpop.f32.mrb[0].mxu0
    %v2850 = vadd.f32 %v2737, %v2849
    %v2851 = vpop.f32.mrb[0].mxu0
    %v2852 = vadd.f32 %v2739, %v2851
    %v2853 = vpop.f32.mrb[0].mxu0
    %v2854 = vadd.f32 %v2741, %v2853
    %2855 = vmatprep.mubr.bf16.mxu0 %v2255
    %2856 = vmatmul.mubr.bf16.gmra.mrb[0].mxu0 %v2254
    %v2857 = vpop.f32.mrb[0].mxu0
    %v2858 = vadd.f32 %v2745, %v2857
    %v2859 = vpop.f32.mrb[0].mxu0
    %v2860 = vadd.f32 %v2747, %v2859
    %v2861 = vpop.f32.mrb[0].mxu0
    %v2862 = vadd.f32 %v2749, %v2861
    %v2863 = vpop.f32.mrb[0].mxu0
    %v2864 = vadd.f32 %v2751, %v2863
    %2865 = vmatprep.mubr.bf16.mxu0 %v2259
    %2866 = vmatmul.mubr.bf16.gmra.mrb[0].mxu0 %v2258
    %v2867 = vpop.f32.mrb[0].mxu0
    %v2868 = vadd.f32 %v2755, %v2867
    %v2869 = vpop.f32.mrb[0].mxu0
    %v2870 = vadd.f32 %v2757, %v2869
    %v2871 = vpop.f32.mrb[0].mxu0
    %v2872 = vadd.f32 %v2759, %v2871
    %v2873 = vpop.f32.mrb[0].mxu0
    %v2874 = vadd.f32 %v2761, %v2873
    %2875 = vmatprep.mubr.bf16.mxu0 %v2263
    %2876 = vmatmul.mubr.bf16.gmra.mrb[0].mxu0 %v2262
    %v2877 = vpop.f32.mrb[0].mxu0
    %v2878 = vadd.f32 %v2765, %v2877
    %v2879 = vpop.f32.mrb[0].mxu0
    %v2880 = vadd.f32 %v2767, %v2879
    %v2881 = vpop.f32.mrb[0].mxu0
    %v2882 = vadd.f32 %v2769, %v2881
    %v2883 = vpop.f32.mrb[0].mxu0
    %v2884 = vadd.f32 %v2771, %v2883
    %2885 = vdwg.mxu0
    %v2886 = vmax.f32 %v2808, %v2812
    %v2887 = vrot.slane %v2886, 4
    %v2888 = vmax.f32 %v2886, %v2887
    %v2889 = vrot.slane %v2888, 2
    %v2890 = vmax.f32 %v2888, %v2889
    %v2891 = vrot.slane %v2890, 1
    %v2892 = vmax.f32 %v2890, %v2891
    %v2893 = vmax.f32 %v2810, %v2814
    %v2894 = vrot.slane %v2893, 4
    %v2895 = vmax.f32 %v2893, %v2894
    %v2896 = vrot.slane %v2895, 2
    %v2897 = vmax.f32 %v2895, %v2896
    %v2898 = vrot.slane %v2897, 1
    %v2899 = vmax.f32 %v2897, %v2898
    %v2900 = vmax.f32 %v2818, %v2822
    %v2901 = vrot.slane %v2900, 4
    %v2902 = vmax.f32 %v2900, %v2901
    %v2903 = vrot.slane %v2902, 2
    %v2904 = vmax.f32 %v2902, %v2903
    %v2905 = vrot.slane %v2904, 1
    %v2906 = vmax.f32 %v2904, %v2905
    %v2907 = vmax.f32 %v2820, %v2824
    %v2908 = vrot.slane %v2907, 4
    %v2909 = vmax.f32 %v2907, %v2908
    %v2910 = vrot.slane %v2909, 2
    %v2911 = vmax.f32 %v2909, %v2910
    %v2912 = vrot.slane %v2911, 1
    %v2913 = vmax.f32 %v2911, %v2912
    %v2914 = vmax.f32 %v2828, %v2832
    %v2915 = vrot.slane %v2914, 4
    %v2916 = vmax.f32 %v2914, %v2915
    %v2917 = vrot.slane %v2916, 2
    %v2918 = vmax.f32 %v2916, %v2917
    %v2919 = vrot.slane %v2918, 1
    %v2920 = vmax.f32 %v2918, %v2919
    %v2921 = vmax.f32 %v2830, %v2834
    %v2922 = vrot.slane %v2921, 4
    %v2923 = vmax.f32 %v2921, %v2922
    %v2924 = vrot.slane %v2923, 2
    %v2925 = vmax.f32 %v2923, %v2924
    %v2926 = vrot.slane %v2925, 1
    %v2927 = vmax.f32 %v2925, %v2926
    %v2928 = vmax.f32 %v2838, %v2842
    %v2929 = vrot.slane %v2928, 4
    %v2930 = vmax.f32 %v2928, %v2929
    %v2931 = vrot.slane %v2930, 2
    %v2932 = vmax.f32 %v2930, %v2931
    %v2933 = vrot.slane %v2932, 1
    %v2934 = vmax.f32 %v2932, %v2933
    %v2935 = vmax.f32 %v2840, %v2844
    %v2936 = vrot.slane %v2935, 4
    %v2937 = vmax.f32 %v2935, %v2936
    %v2938 = vrot.slane %v2937, 2
    %v2939 = vmax.f32 %v2937, %v2938
    %v2940 = vrot.slane %v2939, 1
    %v2941 = vmax.f32 %v2939, %v2940
    %v2942 = vmax.f32 %v2848, %v2852
    %v2943 = vrot.slane %v2942, 4
    %v2944 = vmax.f32 %v2942, %v2943
    %v2945 = vrot.slane %v2944, 2
    %v2946 = vmax.f32 %v2944, %v2945
    %v2947 = vrot.slane %v2946, 1
    %v2948 = vmax.f32 %v2946, %v2947
    %v2949 = vmax.f32 %v2850, %v2854
    %v2950 = vrot.slane %v2949, 4
    %v2951 = vmax.f32 %v2949, %v2950
    %v2952 = vrot.slane %v2951, 2
    %v2953 = vmax.f32 %v2951, %v2952
    %v2954 = vrot.slane %v2953, 1
    %v2955 = vmax.f32 %v2953, %v2954
    %v2956 = vmax.f32 %v2858, %v2862
    %v2957 = vrot.slane %v2956, 4
    %v2958 = vmax.f32 %v2956, %v2957
    %v2959 = vrot.slane %v2958, 2
    %v2960 = vmax.f32 %v2958, %v2959
    %v2961 = vrot.slane %v2960, 1
    %v2962 = vmax.f32 %v2960, %v2961
    %v2963 = vmax.f32 %v2860, %v2864
    %v2964 = vrot.slane %v2963, 4
    %v2965 = vmax.f32 %v2963, %v2964
    %v2966 = vrot.slane %v2965, 2
    %v2967 = vmax.f32 %v2965, %v2966
    %v2968 = vrot.slane %v2967, 1
    %v2969 = vmax.f32 %v2967, %v2968
    %v2970 = vmax.f32 %v2868, %v2872
    %v2971 = vrot.slane %v2970, 4
    %v2972 = vmax.f32 %v2970, %v2971
    %v2973 = vrot.slane %v2972, 2
    %v2974 = vmax.f32 %v2972, %v2973
    %v2975 = vrot.slane %v2974, 1
    %v2976 = vmax.f32 %v2974, %v2975
    %v2977 = vmax.f32 %v2870, %v2874
    %v2978 = vrot.slane %v2977, 4
    %v2979 = vmax.f32 %v2977, %v2978
    %v2980 = vrot.slane %v2979, 2
    %v2981 = vmax.f32 %v2979, %v2980
    %v2982 = vrot.slane %v2981, 1
    %v2983 = vmax.f32 %v2981, %v2982
    %v2984 = vmax.f32 %v2878, %v2882
    %v2985 = vrot.slane %v2984, 4
    %v2986 = vmax.f32 %v2984, %v2985
    %v2987 = vrot.slane %v2986, 2
    %v2988 = vmax.f32 %v2986, %v2987
    %v2989 = vrot.slane %v2988, 1
    %v2990 = vmax.f32 %v2988, %v2989
    %v2991 = vmax.f32 %v2880, %v2884
    %v2992 = vrot.slane %v2991, 4
    %v2993 = vmax.f32 %v2991, %v2992
    %v2994 = vrot.slane %v2993, 2
    %v2995 = vmax.f32 %v2993, %v2994
    %v2996 = vrot.slane %v2995, 1
    %v2997 = vmax.f32 %v2995, %v2996
    %v3014 = vsel %vm941, %v2906, %v2892
    %v3015 = vsel %vm943, %v2920, %v3014
    %v3016 = vsel %vm945, %v2934, %v3015
    %v3017 = vsel %vm947, %v2948, %v3016
    %v3018 = vsel %vm949, %v2962, %v3017
    %v3019 = vsel %vm951, %v2976, %v3018
    %v3020 = vsel %vm953, %v2990, %v3019
    %v3021 = vsel %vm941, %v2913, %v2899
    %v3022 = vsel %vm943, %v2927, %v3021
    %v3023 = vsel %vm945, %v2941, %v3022
    %v3024 = vsel %vm947, %v2955, %v3023
    %v3025 = vsel %vm949, %v2969, %v3024
    %v3026 = vsel %vm951, %v2983, %v3025
    %v3027 = vsel %vm953, %v2997, %v3026
    %3030 = vst [vmem:[#allocation13] sm:$0xff] %v3020
    %3031 = vst [vmem:[#allocation13 + $0x8] sm:$0xff] %v3027
    // Predicated region
    $region66: #{tpu_custom_call.1} parent=1 // pred_check
      _
    $region67: #{tpu_custom_call.1} parent=1 // pred_check_branch
      %3033 = sbr.rel (0) target = $region69
    $region68: #{tpu_custom_call.1} parent=1 // pred_region
      %s3035 = ssub.s32 256, 256
      %3036 = vsyncadd [#allocation4], %s3035
      %s3038 = sshll.u32 [#allocation13], 4
      %s3039 = int_to_ptr.vmem [resolvable:$true] %s3038
      %3041 = dma.vmem_to_hbm [thread:$0]  %s3039, 256, %s10, [#allocation4]
    $region69: #{tpu_custom_call.1} parent=1 // pred_fallthru
      _
    // Predicated region
    $region70: #{tpu_custom_call.1} parent=1 // pred_check
      _
    $region71: #{tpu_custom_call.1} parent=1 // pred_check_branch
      %3043 = sbr.rel (0) target = $region73
    $region72: #{tpu_custom_call.1} parent=1 // pred_region
      %3044 = dma.done [#allocation4], 256
    $region73: #{tpu_custom_call.1} parent=1 // pred_fallthru
      _
    %3045 = vsyncpa [#allocation3], 1
    %3046 = vsyncpa [#allocation6], 1
    %3047 = vsyncpa [#allocation9], 1
    %3048 = vsyncpa [#allocation12], 1
    %3049 = vsyncpa [#allocation4], 1

</llo_original>
